<compile_context>
chip_gen: v5e
topology: v5e:2x2
jax: 0.10.0
libtpu: 0.0.40
codegen_flags: <defaults>
</compile_context>

<pallas_src>
import numpy as np
import jax
import jax.numpy as jnp
from jax.experimental import pallas as pl
from jax.experimental.pallas import tpu as pltpu

EPS = 1e-5          # BatchNorm1d default eps
NEG_SLOPE = 0.01    # LeakyReLU default negative_slope


def _leaky(x):
    return jnp.where(x >= 0, x, NEG_SLOPE * x)


def _round_up(x, m):
    return ((x + m - 1) // m) * m


def _pad_rows(a, rows):
    pad = rows - a.shape[0]
    if pad == 0:
        return a
    return jnp.concatenate([a, jnp.zeros((pad,) + a.shape[1:], a.dtype)], axis=0)


def _tpu_vmem_bytes():
    """Physical per-core VMEM (conservative default if the query is unavailable)."""
    try:
        info = pltpu.get_tpu_info()
        for attr in ("vmem_capacity_bytes", "vmem_bytes", "vmem_size_bytes"):
            v = getattr(info, attr, None)
            if v:
                return int(v)
    except Exception:
        pass
    return 64 * 1024 * 1024


def _finalize_bn(st, shards, count, gamma, beta):
    """st: [shards*8, C]; rows p*8 / p*8+1 hold shard p's sum / sumsq.
    Returns training-mode BN (scale, shift), each (1, C) f32."""
    tot = st.reshape(shards, 8, st.shape[-1]).sum(axis=0)
    s, sq = tot[0:1], tot[1:2]
    mu = s / count
    var = sq / count - mu * mu
    scale = gamma * jax.lax.rsqrt(var + EPS)
    return scale, beta - mu * scale


def mdd_slimnet_ap(x0, edge_index, edge_attr, params, *,
                   tile_e=256, tile_n=None, shards=2,
                   matmul_dtype=jnp.bfloat16):
    """x0: [N, 384] f32, edge_index: [2, E] int32 (row0=src, row1=dst),
    edge_attr: [E, 384] f32. Returns [N, 384] f32."""
    (w1, b1, g1, be1, w2ax, w2aa, b2a, g2a, be2a, w2b, b2b, g2b, be2b) = params
    f32 = jnp.float32
    N, C1 = x0.shape
    E = edge_attr.shape[0]
    C2 = w1.shape[1]        # 512
    C3 = w2ax.shape[1]      # 2048
    P, TE = shards, tile_e

    # Generation-aware tiling / VMEM budget (v5e/v6e: 128 MiB, v7x: 64 MiB).
    vmem_cap = _tpu_vmem_bytes()
    if tile_n is None:
        tile_n = 512 if vmem_cap >= (100 << 20) else 256
    TN = tile_n
    vmem_limit = int(max(32 << 20, min(vmem_cap * 3 // 4, 96 << 20)))

    def cparams(sem):
        return pltpu.CompilerParams(dimension_semantics=sem,
                                    vmem_limit_bytes=vmem_limit)

    cast = lambda a: a.astype(matmul_dtype)
    act_dt = matmul_dtype          # inter-kernel activation storage dtype

    e_pad = _round_up(max(E, 1), P * TE)
    n_pad = _round_up(max(N, 1), P * TN)
    ge_s, ge = e_pad // (P * TE), e_pad // TE
    gn_s, gn = n_pad // (P * TN), n_pad // TN
    e_count, n_count = float(E), float(N)

    # ---------------- wrapper-side graph prep (cheap XLA) ----------------
    src = edge_index[0].astype(jnp.int32)
    dst = edge_index[1].astype(jnp.int32)
    src_p = jnp.concatenate([src, jnp.zeros((e_pad - E,), jnp.int32)])
    dst_p = jnp.concatenate([dst, jnp.full((e_pad - E,), n_pad, jnp.int32)])
    # Sort edges by destination: 'add' aggregation and batch statistics are
    # permutation invariant, and sorting makes the per-tile scatter skip effective.
    # Padded edges (dst == n_pad) sort to the end, so the "row < E" mask still holds.
    order = jnp.argsort(dst_p)
    src_s = jnp.take(src_p, order)
    dst_s = jnp.take(dst_p, order)
    ea_s = jnp.take(_pad_rows(edge_attr.astype(f32), e_pad), order, axis=0)
    # Direct gather (replaces the one-hot gather matmul).
    x_j = jnp.take(x0.astype(f32), src_s, axis=0)

    x_j_mm, ea_mm = cast(x_j), cast(ea_s)
    x0_p = _pad_rows(x0.astype(f32), n_pad)
    x0_mm = cast(x0_p)
    w1_mm, w2ax_mm, w2aa_mm, w2b_mm = cast(w1), cast(w2ax), cast(w2aa), cast(w2b)
    dst_row = dst_s.reshape(1, e_pad)

    emap = lambda p, i: (p * ge_s + i, 0)      # edge-tile blocks
    nmap = lambda p, i: (p * gn_s + i, 0)      # node-tile blocks
    res = lambda p, i: (0, 0)                  # VMEM-resident operand
    smap = lambda p, i: (p, 0)                 # per-shard stats block

    def _stats_update(st_ref, pre, valid):
        pm = pre * valid
        s = jnp.sum(pm, axis=0, keepdims=True)
        sq = jnp.sum(pm * pre, axis=0, keepdims=True)
        st_ref[...] += jnp.concatenate(
            [s, sq, jnp.zeros((6, s.shape[1]), f32)], axis=0)

    # ---------------- Kernel A: message pre-activation + BN1 stats ----------------
    def kernel_a(xj_ref, ea_ref, w1_ref, b1_ref, pre1_ref, st1_ref):
        p, i = pl.program_id(0), pl.program_id(1)

        @pl.when(i == 0)
        def _():
            st1_ref[...] = jnp.zeros_like(st1_ref)

        tmp = xj_ref[...].astype(f32) * ea_ref[...].astype(f32)
        pre1 = jnp.dot(tmp.astype(matmul_dtype), w1_ref[...],
                       preferred_element_type=f32) + b1_ref[...]
        pre1_ref[...] = pre1.astype(pre1_ref.dtype)
        base = (p * ge_s + i) * TE
        row = jax.lax.broadcasted_iota(jnp.int32, (TE, 1), 0)
        valid = jnp.where((base + row) < E, 1.0, 0.0)         # mask padded edges
        _stats_update(st1_ref, pre1, valid)

    pre1, st1 = pl.pallas_call(
        kernel_a,
        grid=(P, ge_s),
        in_specs=[
            pl.BlockSpec((TE, C1), emap),       # x_j tile
            pl.BlockSpec((TE, C1), emap),       # edge_attr tile
            pl.BlockSpec((C1, C2), res),        # w1 (resident)
            pl.BlockSpec((1, C2), res),         # b1
        ],
        out_specs=(
            pl.BlockSpec((TE, C2), emap),       # pre-activation per edge tile
            pl.BlockSpec((8, C2), smap),        # per-shard sum/sumsq
        ),
        out_shape=(
            jax.ShapeDtypeStruct((e_pad, C2), act_dt),
            jax.ShapeDtypeStruct((P * 8, C2), f32),
        ),
        compiler_params=cparams(("parallel", "arbitrary")),
    )(x_j_mm, ea_mm, w1_mm, b1)

    scale1, shift1 = _finalize_bn(st1, P, e_count, g1, be1)   # tiny plain-JAX op

    # -------- Kernel B: BN1-apply + LeakyReLU + node-tiled scatter-add --------
    def kernel_b(dst_ref, pre1_ref, sc_ref, sh_ref, aggr_ref, acc_ref):
        i = pl.program_id(1)

        @pl.when(i == 0)
        def _():
            acc_ref[...] = jnp.zeros_like(acc_ref)

        base = pl.program_id(0) * TN
        d_i = dst_ref[...]                                     # (1, TE) int32
        d_f = d_i.astype(f32)
        lo_f = base.astype(f32)
        hi_f = (base + TN).astype(f32)
        hit = jnp.logical_and(jnp.min(d_f) < hi_f, jnp.max(d_f) >= lo_f)

        @pl.when(hit)   # sorted dst => most (node-tile, edge-tile) pairs skip the MXU
        def _():
            msg = _leaky(pre1_ref[...].astype(f32) * sc_ref[...] + sh_ref[...])
            rows = base + jax.lax.broadcasted_iota(jnp.int32, (TN, TE), 0)
            onehot = jnp.where(rows == d_i, 1.0, 0.0).astype(matmul_dtype)
            acc_ref[...] += jnp.dot(onehot, msg.astype(matmul_dtype),
                                    preferred_element_type=f32)

        @pl.when(i == pl.num_programs(1) - 1)
        def _():
            aggr_ref[...] = acc_ref[...].astype(aggr_ref.dtype)

    aggr = pl.pallas_call(
        kernel_b,
        grid=(gn, ge),
        in_specs=[
            pl.BlockSpec((1, TE), lambda j, i: (0, i)),        # dst indices
            pl.BlockSpec((TE, C2), lambda j, i: (i, 0)),       # pre1 tile
            pl.BlockSpec((1, C2), lambda j, i: (0, 0)),        # BN1 scale (resident)
            pl.BlockSpec((1, C2), lambda j, i: (0, 0)),        # BN1 shift (resident)
        ],
        out_specs=pl.BlockSpec((TN, C2), lambda j, i: (j, 0)),
        out_shape=jax.ShapeDtypeStruct((n_pad, C2), act_dt),
        scratch_shapes=[pltpu.VMEM((TN, C2), f32)],            # f32 accumulator
        compiler_params=cparams(("parallel", "arbitrary")),
    )(dst_row, pre1, scale1, shift1)

    # ------------- Kernel C: update layer 1 pre-activation + BN2a stats -------------
    def kernel_c(x0_ref, ag_ref, wax_ref, waa_ref, b2a_ref, pre2_ref, st2_ref):
        p, i = pl.program_id(0), pl.program_id(1)

        @pl.when(i == 0)
        def _():
            st2_ref[...] = jnp.zeros_like(st2_ref)

        pre2 = (jnp.dot(x0_ref[...], wax_ref[...], preferred_element_type=f32)
                + jnp.dot(ag_ref[...].astype(matmul_dtype), waa_ref[...],
                          preferred_element_type=f32)
                + b2a_ref[...])                                 # cat() as split weights
        pre2_ref[...] = pre2.astype(pre2_ref.dtype)
        base = (p * gn_s + i) * TN
        row = jax.lax.broadcasted_iota(jnp.int32, (TN, 1), 0)
        valid = jnp.where((base + row) < N, 1.0, 0.0)           # mask padded nodes
        _stats_update(st2_ref, pre2, valid)

    pre2, st2 = pl.pallas_call(
        kernel_c,
        grid=(P, gn_s),
        in_specs=[
            pl.BlockSpec((TN, C1), nmap),       # x0 tile
            pl.BlockSpec((TN, C2), nmap),       # aggr tile
            pl.BlockSpec((C1, C3), res),        # w2a[:384]  (resident)
            pl.BlockSpec((C2, C3), res),        # w2a[384:]  (resident)
            pl.BlockSpec((1, C3), res),         # b2a
        ],
        out_specs=(
            pl.BlockSpec((TN, C3), nmap),
            pl.BlockSpec((8, C3), smap),
        ),
        out_shape=(
            jax.ShapeDtypeStruct((n_pad, C3), act_dt),
            jax.ShapeDtypeStruct((P * 8, C3), f32),
        ),
        compiler_params=cparams(("parallel", "arbitrary")),
    )(x0_mm, aggr, w2ax_mm, w2aa_mm, b2a)

    scale2a, shift2a = _finalize_bn(st2, P, n_count, g2a, be2a)

    # ------ Kernel D: BN2a-apply + LeakyReLU, layer 2 pre-activation + BN2b stats ------
    def kernel_d(pre2_ref, sc_ref, sh_ref, w2b_ref, b2b_ref, pre3_ref, st3_ref):
        p, i = pl.program_id(0), pl.program_id(1)

        @pl.when(i == 0)
        def _():
            st3_ref[...] = jnp.zeros_like(st3_ref)

        h2 = _leaky(pre2_ref[...].astype(f32) * sc_ref[...] + sh_ref[...])
        pre3 = jnp.dot(h2.astype(matmul_dtype), w2b_ref[...],
                       preferred_element_type=f32) + b2b_ref[...]
        pre3_ref[...] = pre3.astype(pre3_ref.dtype)
        base = (p * gn_s + i) * TN
        row = jax.lax.broadcasted_iota(jnp.int32, (TN, 1), 0)
        valid = jnp.where((base + row) < N, 1.0, 0.0)
        _stats_update(st3_ref, pre3, valid)

    pre3, st3 = pl.pallas_call(
        kernel_d,
        grid=(P, gn_s),
        in_specs=[
            pl.BlockSpec((TN, C3), nmap),       # pre2 tile
            pl.BlockSpec((1, C3), res),         # BN2a scale
            pl.BlockSpec((1, C3), res),         # BN2a shift
            pl.BlockSpec((C3, C1), res),        # w2b (resident)
            pl.BlockSpec((1, C1), res),         # b2b
        ],
        out_specs=(
            pl.BlockSpec((TN, C1), nmap),
            pl.BlockSpec((8, C1), smap),
        ),
        out_shape=(
            jax.ShapeDtypeStruct((n_pad, C1), act_dt),
            jax.ShapeDtypeStruct((P * 8, C1), f32),
        ),
        compiler_params=cparams(("parallel", "arbitrary")),
    )(pre2, scale2a, shift2a, w2b_mm, b2b)

    scale2b, shift2b = _finalize_bn(st3, P, n_count, g2b, be2b)

    # ---------------- Kernel E: BN2b-apply + LeakyReLU + residual ----------------
    def kernel_e(pre3_ref, sc_ref, sh_ref, x0_ref, out_ref):
        h3 = _leaky(pre3_ref[...].astype(f32) * sc_ref[...] + sh_ref[...])
        out_ref[...] = (h3 + x0_ref[...]) * 0.5

    nmap1 = lambda i: (i, 0)
    res1 = lambda i: (0, 0)
    out_p = pl.pallas_call(
        kernel_e,
        grid=(gn,),
        in_specs=[
            pl.BlockSpec((TN, C1), nmap1),      # pre3 tile
            pl.BlockSpec((1, C1), res1),        # BN2b scale
            pl.BlockSpec((1, C1), res1),        # BN2b shift
            pl.BlockSpec((TN, C1), nmap1),      # x0 (f32) tile for the residual
        ],
        out_specs=pl.BlockSpec((TN, C1), nmap1),
        out_shape=jax.ShapeDtypeStruct((n_pad, C1), f32),
        compiler_params=cparams(("parallel",)),
    )(pre3, scale2b, shift2b, x0_p)

    return out_p[:N]


# ----------------------------- parameters & reference -----------------------------

def _linear_params(key, fan_in, fan_out):
    # PyTorch nn.Linear default init: U(-1/sqrt(fan_in), 1/sqrt(fan_in)).
    k_w, k_b = jax.random.split(key)
    bound = 1.0 / np.sqrt(fan_in)
    w = jax.random.uniform(k_w, (fan_in, fan_out), jnp.float32, -bound, bound)
    b = jax.random.uniform(k_b, (1, fan_out), jnp.float32, -bound, bound)
    return w, b


def make_params(key, n_ch1=384):
    k1, k2, k3 = jax.random.split(key, 3)
    w1, b1 = _linear_params(k1, 384, 512)
    g1, be1 = jnp.ones((1, 512), jnp.float32), jnp.zeros((1, 512), jnp.float32)
    w2a, b2a = _linear_params(k2, n_ch1 + 512, 2048)
    g2a, be2a = jnp.ones((1, 2048), jnp.float32), jnp.zeros((1, 2048), jnp.float32)
    w2b, b2b = _linear_params(k3, 2048, n_ch1)
    g2b, be2b = jnp.ones((1, n_ch1), jnp.float32), jnp.zeros((1, n_ch1), jnp.float32)
    # split mlp2's first weight along the concat dimension: [x0 | aggr]
    w2a_x, w2a_a = w2a[:n_ch1], w2a[n_ch1:]
    return (w1, b1, g1, be1, w2a_x, w2a_a, b2a, g2a, be2a, w2b, b2b, g2b, be2b)


def reference_forward(x0, edge_index, edge_attr, params):
    """Pure-JAX float32 reference of MDDSlimNet_AP.forward (training-mode BN)."""
    (w1, b1, g1, be1, w2ax, w2aa, b2a, g2a, be2a, w2b, b2b, g2b, be2b) = params
    N = x0.shape[0]

    def bn(h, gamma, beta):
        mu = jnp.mean(h, axis=0, keepdims=True)
        var = jnp.mean(h * h, axis=0, keepdims=True) - mu * mu
        return (h - mu) * (gamma * jax.lax.rsqrt(var + EPS)) + beta

    src, dst = edge_index[0], edge_index[1]
    x_j = jnp.take(x0, src, axis=0)
    tmp = x_j * edge_attr
    msg = _leaky(bn(tmp @ w1 + b1, g1, be1))
    aggr = jax.ops.segment_sum(msg, dst, num_segments=N)
    h2 = _leaky(bn(x0 @ w2ax + aggr @ w2aa + b2a, g2a, be2a))
    h3 = _leaky(bn(h2 @ w2b + b2b, g2b, be2b))
    return (h3 + x0) * 0.5


if __name__ == "__main__":
    n_ch1 = 384   # forced by mlp1 input dim (x_j * edge_attr must be 384-wide)
    N, E = 8, 16  # small graph: 8 nodes, 16 edges

    key = jax.random.PRNGKey(0)
    k_x, k_e, k_src, k_dst, k_p = jax.random.split(key, 5)
    x0 = jax.random.normal(k_x, (N, n_ch1), jnp.float32)
    edge_attr = jax.random.normal(k_e, (E, n_ch1), jnp.float32)
    src = jax.random.randint(k_src, (E,), 0, N, jnp.int32)
    dst = jax.random.randint(k_dst, (E,), 0, N, jnp.int32)
    edge_index = jnp.stack([src, dst], axis=0)
    params = make_params(k_p, n_ch1)

    # Default / performance path: bf16 MXU operands + bf16 inter-kernel activations.
    out_bf16 = jax.block_until_ready(
        mdd_slimnet_ap(x0, edge_index, edge_attr, params))
    # Exactness path: identical kernels with f32 operands and f32 intermediates.
    out_f32 = jax.block_until_ready(
        mdd_slimnet_ap(x0, edge_index, edge_attr, params, matmul_dtype=jnp.float32))

    ref = jax.block_until_ready(reference_forward(x0, edge_index, edge_attr, params))

    # f32 kernel path must match the f32 reference tightly.
    np.testing.assert_allclose(np.asarray(out_f32), np.asarray(ref), rtol=1e-3, atol=2e-3)
    # bf16-operand path: allow bf16 rounding of a 3-matmul chain + bf16 activations.
    np.testing.assert_allclose(np.asarray(out_bf16), np.asarray(ref), rtol=5e-2, atol=5e-2)

    print("KERNEL_OK")
</pallas_src>

<mosaic_0001>
module attributes {stable_mosaic.version = 11 : i64} {
  func.func @kernel_a(%arg0: i32, %arg1: i32, %arg2: memref<256x384xbf16, #tpu.memory_space<vmem>>, %arg3: memref<256x384xbf16, #tpu.memory_space<vmem>>, %arg4: memref<384x512xbf16, #tpu.memory_space<vmem>>, %arg5: memref<1x512xf32, #tpu.memory_space<vmem>>, %arg6: memref<256x512xbf16, #tpu.memory_space<vmem>>, %arg7: memref<8x512xf32, #tpu.memory_space<vmem>>) attributes {dimension_semantics = [#tpu.dimension_semantics<parallel>, #tpu.dimension_semantics<arbitrary>], iteration_bounds = array<i64: 2, 1>, scalar_prefetch = 0 : i64, scratch_operands = 0 : i64, tpu.core_type = #tpu.core_type<tc>, window_params = [{transform_indices = @transform_0, window_bounds = array<i64: 256, 384>}, {transform_indices = @transform_1, window_bounds = array<i64: 256, 384>}, {pipeline_mode = #tpu.pipeline_mode<synchronous>, transform_indices = @transform_2, window_bounds = array<i64: 384, 512>}, {pipeline_mode = #tpu.pipeline_mode<synchronous>, transform_indices = @transform_3, window_bounds = array<i64: 1, 512>}, {transform_indices = @transform_4, window_bounds = array<i64: 256, 512>}, {transform_indices = @transform_5, window_bounds = array<i64: 8, 512>}]} {
    %c0_i32 = arith.constant 0 : i32
    %0 = arith.cmpi eq, %arg1, %c0_i32 : i32
    %1 = arith.extui %0 : i1 to i32
    %c0_i32_0 = arith.constant 0 : i32
    %2 = arith.cmpi ne, %1, %c0_i32_0 : i32
    scf.if %2 {
      %cst_19 = arith.constant 0.000000e+00 : f32
      %39 = vector.broadcast %cst_19 : f32 to vector<8x512xf32>
      %c0_20 = arith.constant 0 : index
      %c0_21 = arith.constant 0 : index
      %40 = vector.load %arg7[%c0_20, %c0_21] : memref<8x512xf32, #tpu.memory_space<vmem>>, vector<8x512xf32>
      tpu.vector_store %arg7[%c0_20, %c0_21], %39 {strides = array<i32>} : memref<8x512xf32, #tpu.memory_space<vmem>>, vector<8x512xf32>,
    } else {
    }
    %c0 = arith.constant 0 : index
    %c0_1 = arith.constant 0 : index
    %3 = vector.load %arg2[%c0, %c0_1] : memref<256x384xbf16, #tpu.memory_space<vmem>>, vector<256x384xbf16>
    %4 = arith.extf %3 : vector<256x384xbf16> to vector<256x384xf32>
    %c0_2 = arith.constant 0 : index
    %c0_3 = arith.constant 0 : index
    %5 = vector.load %arg3[%c0_2, %c0_3] : memref<256x384xbf16, #tpu.memory_space<vmem>>, vector<256x384xbf16>
    %6 = arith.extf %5 : vector<256x384xbf16> to vector<256x384xf32>
    %7 = arith.mulf %4, %6 : vector<256x384xf32>
    %8 = arith.truncf %7 : vector<256x384xf32> to vector<256x384xbf16>
    %c0_4 = arith.constant 0 : index
    %c0_5 = arith.constant 0 : index
    %9 = vector.load %arg4[%c0_4, %c0_5] : memref<384x512xbf16, #tpu.memory_space<vmem>>, vector<384x512xbf16>
    %cst = arith.constant dense<0.000000e+00> : vector<256x512xf32>
    %10 = tpu.matmul %8, %9, %cst {dimension_numbers = #tpu.dot_dimension_numbers<[1], [0], [0], [1], [0, 0, 1, 1], [], []>} : vector<256x384xbf16>, vector<384x512xbf16>, vector<256x512xf32> -> vector<256x512xf32>
    %c0_6 = arith.constant 0 : index
    %c0_7 = arith.constant 0 : index
    %11 = vector.load %arg5[%c0_6, %c0_7] : memref<1x512xf32, #tpu.memory_space<vmem>>, vector<1x512xf32>
    %12 = vector.broadcast %11 : vector<1x512xf32> to vector<256x512xf32>
    %13 = arith.addf %10, %12 : vector<256x512xf32>
    %14 = arith.truncf %13 : vector<256x512xf32> to vector<256x512xbf16>
    %c0_8 = arith.constant 0 : index
    %c0_9 = arith.constant 0 : index
    %15 = vector.load %arg6[%c0_8, %c0_9] : memref<256x512xbf16, #tpu.memory_space<vmem>>, vector<256x512xbf16>
    tpu.vector_store %arg6[%c0_8, %c0_9], %14 {strides = array<i32>} : memref<256x512xbf16, #tpu.memory_space<vmem>>, vector<256x512xbf16>,
    %c1_i32 = arith.constant 1 : i32
    %16 = arith.muli %arg0, %c1_i32 : i32
    %17 = arith.addi %16, %arg1 : i32
    %c256_i32 = arith.constant 256 : i32
    %18 = arith.muli %17, %c256_i32 : i32
    %19 = tpu.iota {dimensions = array<i32: 0>} : vector<256x1xi32>
    %20 = vector.broadcast %18 : i32 to vector<256x1xi32>
    %21 = arith.addi %20, %19 : vector<256x1xi32>
    %c16_i32 = arith.constant 16 : i32
    %22 = vector.broadcast %c16_i32 : i32 to vector<256x1xi32>
    %23 = arith.cmpi slt, %21, %22 : vector<256x1xi32>
    %cst_10 = arith.constant 1.000000e+00 : f32
    %cst_11 = arith.constant 0.000000e+00 : f32
    %24 = vector.broadcast %cst_10 : f32 to vector<256x1xf32>
    %25 = vector.broadcast %cst_11 : f32 to vector<256x1xf32>
    %26 = arith.select %23, %24, %25 : vector<256x1xi1>, vector<256x1xf32>
    %27 = vector.broadcast %26 : vector<256x1xf32> to vector<256x512xf32>
    %28 = arith.mulf %13, %27 : vector<256x512xf32>
    %cst_12 = arith.constant dense<0.000000e+00> : vector<512xf32>
    %29 = vector.multi_reduction <add>, %28, %cst_12 [0] : vector<256x512xf32> to vector<512xf32>
    %30 = vector.shape_cast %29 : vector<512xf32> to vector<1x512xf32>
    %31 = arith.mulf %28, %13 : vector<256x512xf32>
    %cst_13 = arith.constant dense<0.000000e+00> : vector<512xf32>
    %32 = vector.multi_reduction <add>, %31, %cst_13 [0] : vector<256x512xf32> to vector<512xf32>
    %33 = vector.shape_cast %32 : vector<512xf32> to vector<1x512xf32>
    %c0_14 = arith.constant 0 : index
    %c0_15 = arith.constant 0 : index
    %34 = vector.load %arg7[%c0_14, %c0_15] : memref<8x512xf32, #tpu.memory_space<vmem>>, vector<8x512xf32>
    %cst_16 = arith.constant 0.000000e+00 : f32
    %35 = vector.broadcast %cst_16 : f32 to vector<6x512xf32>
    %36 = tpu.concatenate %30, %33, %35 in 0 : vector<1x512xf32>, vector<1x512xf32>, vector<6x512xf32> -> vector<8x512xf32>
    %37 = arith.addf %34, %36 : vector<8x512xf32>
    %c0_17 = arith.constant 0 : index
    %c0_18 = arith.constant 0 : index
    %38 = vector.load %arg7[%c0_17, %c0_18] : memref<8x512xf32, #tpu.memory_space<vmem>>, vector<8x512xf32>
    tpu.vector_store %arg7[%c0_17, %c0_18], %37 {strides = array<i32>} : memref<8x512xf32, #tpu.memory_space<vmem>>, vector<8x512xf32>,
    return
  }
  func.func @transform_0(%arg0: i32, %arg1: i32) -> (i32, i32) {
    %c1_i32 = arith.constant 1 : i32
    %0 = arith.muli %arg0, %c1_i32 : i32
    %1 = arith.addi %0, %arg1 : i32
    %c0_i32 = arith.constant 0 : i32
    %c0_i32_0 = arith.constant 0 : i32
    return %1, %c0_i32 : i32, i32
  }
  func.func @transform_1(%arg0: i32, %arg1: i32) -> (i32, i32) {
    %c1_i32 = arith.constant 1 : i32
    %0 = arith.muli %arg0, %c1_i32 : i32
    %1 = arith.addi %0, %arg1 : i32
    %c0_i32 = arith.constant 0 : i32
    %c0_i32_0 = arith.constant 0 : i32
    return %1, %c0_i32 : i32, i32
  }
  func.func @transform_2(%arg0: i32, %arg1: i32) -> (i32, i32) {
    %c0_i32 = arith.constant 0 : i32
    %c0_i32_0 = arith.constant 0 : i32
    %c0_i32_1 = arith.constant 0 : i32
    return %c0_i32, %c0_i32_0 : i32, i32
  }
  func.func @transform_3(%arg0: i32, %arg1: i32) -> (i32, i32) {
    %c0_i32 = arith.constant 0 : i32
    %c0_i32_0 = arith.constant 0 : i32
    %c0_i32_1 = arith.constant 0 : i32
    return %c0_i32, %c0_i32_0 : i32, i32
  }
  func.func @transform_4(%arg0: i32, %arg1: i32) -> (i32, i32) {
    %c1_i32 = arith.constant 1 : i32
    %0 = arith.muli %arg0, %c1_i32 : i32
    %1 = arith.addi %0, %arg1 : i32
    %c0_i32 = arith.constant 0 : i32
    %c0_i32_0 = arith.constant 0 : i32
    return %1, %c0_i32 : i32, i32
  }
  func.func @transform_5(%arg0: i32, %arg1: i32) -> (i32, i32) {
    %c0_i32 = arith.constant 0 : i32
    %c0_i32_0 = arith.constant 0 : i32
    return %arg0, %c0_i32 : i32, i32
  }
}

</mosaic_0001>

<llo_original>
// kernel: tpu_custom_call.1
$region0: #{tpu_custom_call.1}
  #allocation0 [shape = 'u32[]', space=smem, size = 0x4, offset = 0x4, fixed_abs, tag = 'smem constant byte address 0x4 - core index']
  #allocation1 [shape = 'u32[72,128]{1,0:T(1,128)}', space=vmem, size = 0x9000, scoped, tag = 'internal scratch']
  %s0 = inlined_call_operand.hbm [shape: bf16[512,384], index: 0, kind: input, shape index: {}]
  %s1 = inlined_call_operand.hbm [shape: bf16[512,384], index: 1, kind: input, shape index: {}]
  %s2 = inlined_call_operand.hbm [shape: bf16[384,512], index: 2, kind: input, shape index: {}]
  %s3 = inlined_call_operand.hbm [shape: f32[1,512], index: 3, kind: input, shape index: {}]
  %s4 = inlined_call_operand.hbm [shape: bf16[512,512], index: 4, kind: output, shape index: {0}]
  %s5 = inlined_call_operand.hbm [shape: f32[16,512], index: 5, kind: output, shape index: {1}]
  %6 = xla_tuple %s4, %s5
  %s7 = sld [smem:[#allocation0]]
  $region77: #{tpu_custom_call.1} parent=0
    _
  %s9 = ssub.s32 1, %s7
  %s10 = scalar_select 0, %s9, %s7
  $region1: #{tpu_custom_call.1} parent=0
    #allocation2 [shape = 'u8[393216]{0}', space=vmem, size = 0x60000, scoped, tag = 'input window, operand 0']
    #allocation3 [shape = 's32[2]{0}', space=sflag, size = 0x8, scoped, tag = 'scoped memory for tpu_custom_call.1']
    #allocation4 [shape = 's32[2]{0}', space=sflag, size = 0x8, scoped, tag = 'scoped memory for tpu_custom_call.1']
    #allocation5 [shape = 'u8[393216]{0}', space=vmem, size = 0x60000, scoped, tag = 'input window, operand 1']
    #allocation6 [shape = 's32[2]{0}', space=sflag, size = 0x8, scoped, tag = 'scoped memory for tpu_custom_call.1']
    #allocation7 [shape = 'u8[393216]{0}', space=vmem, size = 0x60000, scoped, tag = 'input window, operand 2, single buffered']
    #allocation8 [shape = 'u8[2048]{0}', space=vmem, size = 0x800, scoped, tag = 'input window, operand 3, single buffered']
    #allocation9 [shape = 's32[1]{0}', space=sflag, size = 0x4, scoped, tag = 'scoped memory for tpu_custom_call.1']
    #allocation10 [shape = 'u8[524288]{0}', space=vmem, size = 0x80000, scoped, tag = 'output window, operand 0']
    #allocation11 [shape = 'u8[32768]{0}', space=vmem, size = 0x8000, scoped, tag = 'output window, operand 1']
    #allocation12 [shape = 's32[2]{0}', space=sflag, size = 0x8, scoped, tag = 'scoped memory for tpu_custom_call.1']
    %11 = vsyncpa [#allocation3], 0
    %s12 = scalar_lea.sflag [#allocation3], 1
    %13 = vsyncpa %s12, 0
    %14 = vsyncpa [#allocation6], 0
    %s15 = scalar_lea.sflag [#allocation6], 1
    %16 = vsyncpa %s15, 0
    %17 = vsyncpa [#allocation9], 0
    %18 = vsyncpa [#allocation4], 0
    %s19 = scalar_lea.sflag [#allocation4], 1
    %20 = vsyncpa %s19, 0
    %21 = vsyncpa [#allocation12], 0
    %s22 = scalar_lea.sflag [#allocation12], 1
    %23 = vsyncpa %s22, 0
    loop: start=0, step=1, limit=4
    $region2: #{tpu_custom_call.1} parent=1 // loop_pre_header
      _
    $region3: #{tpu_custom_call.1} parent=1 // loop_header
      %s25 = sphi 0, %s29
      %p26 = scmp.ge.s32.totalorder %s25, 4
      %s32 = sphi 0, %s44
      %s33 = sphi 0, %s40
      %s34 = sphi 0, %s32
      %s35 = sphi 0, %s33
      %s36 = sphi 0, %s34
      %s37 = sphi 0, %s35
      %s49 = sphi 0, %s51
      %s52 = sphi 0, %s49
      %s53 = sphi 0, %s52
      %s69 = sphi 0, %s53
      %s77 = sphi 0, %s79
      %s80 = sphi 0, %s77
      %s81 = sphi 0, %s80
      %s97 = sphi 0, %s81
      %s101 = sphi 0, %s101
      %s103 = sphi 0, %s101
      %s104 = sphi 0, %s103
      %s118 = sphi 0, %s104
      %s122 = sphi 0, %s122
      %s124 = sphi 0, %s122
      %s125 = sphi 0, %s124
      %s139 = sphi 0, %s125
      %s147 = sphi 0, %s149
      %s150 = sphi 0, %s147
      %s151 = sphi 0, %s150
      %s167 = sphi 0, %s151
      %s173 = sphi 0, %s175
      %s176 = sphi 0, %s173
      %s177 = sphi 0, %s176
      %s193 = sphi 0, %s177
    $region4: #{tpu_custom_call.1} parent=1 // loop_header_branch
      %28 = sbr.rel (%p26) target = $region8
    $region5: #{tpu_custom_call.1} parent=1 // loop_body
      %s30 = ssub.s32 %s25, 1
      %s31 = ssub.s32 %s25, 2
      %s38 = sadd.s32 1, %s33
      %p39 = scmp.ge.s32.totalorder %s38, 1
      %s40 = scalar_select %p39, 0, %s38
      %s41 = sadd.s32 1, %s32
      %s42 = scalar_select %p39, %s41, %s32
      %p43 = scmp.ge.s32.totalorder %s42, 2
      %s44 = scalar_select %p43, 0, %s42
      %s45 = sadd.s32 %s32, %s33
      %s46 = sadd.s32 %s44, %s40
      %s47 = ssub.s32 %s45, %s46
      %p48 = scmp.eq.s32.totalorder %s47, 0
      %s50 = sadd.s32 %s49, 1
      %s51 = scalar_select %p48, %s49, %s50
      %p54 = pneg %p48
      %p55 = scmp.eq.s32.totalorder %s25, 1
      %p56 = por %p54, %p55
      %p57 = scmp.ne.s32.totalorder %s49, %s52
      %p58 = scmp.eq.s32.totalorder %s25, 0
      %p59 = por %p57, %p58
      %p60 = scmp.ne.s32.totalorder %s49, %s52
      %p61 = scmp.eq.s32.totalorder %s30, 1
      %p62 = por %p60, %p61
      %p63 = scmp.ne.s32.totalorder %s52, %s53
      %p64 = scmp.eq.s32.totalorder %s30, 0
      %p65 = por %p63, %p64
      %p66 = scmp.ne.s32.totalorder %s52, %s53
      %p67 = scmp.eq.s32.totalorder %s31, 1
      %p68 = por %p66, %p67
      %p70 = scmp.ne.s32.totalorder %s53, %s69
      %p71 = scmp.eq.s32.totalorder %s31, 0
      %p72 = por %p70, %p71
      %s73 = sadd.s32 %s32, %s33
      %s74 = sadd.s32 %s44, %s40
      %s75 = ssub.s32 %s73, %s74
      %p76 = scmp.eq.s32.totalorder %s75, 0
      %s78 = sadd.s32 %s77, 1
      %s79 = scalar_select %p76, %s77, %s78
      %p82 = pneg %p76
      %p83 = scmp.eq.s32.totalorder %s25, 1
      %p84 = por %p82, %p83
      %p85 = scmp.ne.s32.totalorder %s77, %s80
      %p86 = scmp.eq.s32.totalorder %s25, 0
      %p87 = por %p85, %p86
      %p88 = scmp.ne.s32.totalorder %s77, %s80
      %p89 = scmp.eq.s32.totalorder %s30, 1
      %p90 = por %p88, %p89
      %p91 = scmp.ne.s32.totalorder %s80, %s81
      %p92 = scmp.eq.s32.totalorder %s30, 0
      %p93 = por %p91, %p92
      %p94 = scmp.ne.s32.totalorder %s80, %s81
      %p95 = scmp.eq.s32.totalorder %s31, 1
      %p96 = por %p94, %p95
      %p98 = scmp.ne.s32.totalorder %s81, %s97
      %p99 = scmp.eq.s32.totalorder %s31, 0
      %p100 = por %p98, %p99
      %s102 = sadd.s32 %s101, 1
      %p105 = scmp.eq.s32.totalorder %s25, 1
      %p106 = scmp.ne.s32.totalorder %s101, %s103
      %p107 = scmp.eq.s32.totalorder %s25, 0
      %p108 = por %p106, %p107
      %p109 = scmp.ne.s32.totalorder %s101, %s103
      %p110 = scmp.eq.s32.totalorder %s30, 1
      %p111 = por %p109, %p110
      %p112 = scmp.ne.s32.totalorder %s103, %s104
      %p113 = scmp.eq.s32.totalorder %s30, 0
      %p114 = por %p112, %p113
      %p115 = scmp.ne.s32.totalorder %s103, %s104
      %p116 = scmp.eq.s32.totalorder %s31, 1
      %p117 = por %p115, %p116
      %p119 = scmp.ne.s32.totalorder %s104, %s118
      %p120 = scmp.eq.s32.totalorder %s31, 0
      %p121 = por %p119, %p120
      %s123 = sadd.s32 %s122, 1
      %p126 = scmp.eq.s32.totalorder %s25, 1
      %p127 = scmp.ne.s32.totalorder %s122, %s124
      %p128 = scmp.eq.s32.totalorder %s25, 0
      %p129 = por %p127, %p128
      %p130 = scmp.ne.s32.totalorder %s122, %s124
      %p131 = scmp.eq.s32.totalorder %s30, 1
      %p132 = por %p130, %p131
      %p133 = scmp.ne.s32.totalorder %s124, %s125
      %p134 = scmp.eq.s32.totalorder %s30, 0
      %p135 = por %p133, %p134
      %p136 = scmp.ne.s32.totalorder %s124, %s125
      %p137 = scmp.eq.s32.totalorder %s31, 1
      %p138 = por %p136, %p137
      %p140 = scmp.ne.s32.totalorder %s125, %s139
      %p141 = scmp.eq.s32.totalorder %s31, 0
      %p142 = por %p140, %p141
      %s143 = sadd.s32 %s32, %s33
      %s144 = sadd.s32 %s44, %s40
      %s145 = ssub.s32 %s143, %s144
      %p146 = scmp.eq.s32.totalorder %s145, 0
      %s148 = sadd.s32 %s147, 1
      %s149 = scalar_select %p146, %s147, %s148
      %p152 = pneg %p146
      %p153 = scmp.eq.s32.totalorder %s25, 1
      %p154 = por %p152, %p153
      %p155 = scmp.ne.s32.totalorder %s147, %s150
      %p156 = scmp.eq.s32.totalorder %s25, 0
      %p157 = por %p155, %p156
      %p158 = scmp.ne.s32.totalorder %s147, %s150
      %p159 = scmp.eq.s32.totalorder %s30, 1
      %p160 = por %p158, %p159
      %p161 = scmp.ne.s32.totalorder %s150, %s151
      %p162 = scmp.eq.s32.totalorder %s30, 0
      %p163 = por %p161, %p162
      %p164 = scmp.ne.s32.totalorder %s150, %s151
      %p165 = scmp.eq.s32.totalorder %s31, 1
      %p166 = por %p164, %p165
      %p168 = scmp.ne.s32.totalorder %s151, %s167
      %p169 = scmp.eq.s32.totalorder %s31, 0
      %p170 = por %p168, %p169
      %s171 = ssub.s32 %s32, %s44
      %p172 = scmp.eq.s32.totalorder %s171, 0
      %s174 = sadd.s32 %s173, 1
      %s175 = scalar_select %p172, %s173, %s174
      %p178 = pneg %p172
      %p179 = scmp.eq.s32.totalorder %s25, 1
      %p180 = por %p178, %p179
      %p181 = scmp.ne.s32.totalorder %s173, %s176
      %p182 = scmp.eq.s32.totalorder %s25, 0
      %p183 = por %p181, %p182
      %p184 = scmp.ne.s32.totalorder %s173, %s176
      %p185 = scmp.eq.s32.totalorder %s30, 1
      %p186 = por %p184, %p185
      %p187 = scmp.ne.s32.totalorder %s176, %s177
      %p188 = scmp.eq.s32.totalorder %s30, 0
      %p189 = por %p187, %p188
      %p190 = scmp.ne.s32.totalorder %s176, %s177
      %p191 = scmp.eq.s32.totalorder %s31, 1
      %p192 = por %p190, %p191
      %p194 = scmp.ne.s32.totalorder %s177, %s193
      %p195 = scmp.eq.s32.totalorder %s31, 0
      %p196 = por %p194, %p195
      %p197 = scmp.le.s32.totalorder 1, %s25
      %p198 = scmp.lt.s32.totalorder %s25, 3
      %p199 = pnand %p197, %p198
      %p200 = pneg %p199
      // Predicated region
      $region9: #{tpu_custom_call.1} parent=5 // pred_check
        _
      $region10: #{tpu_custom_call.1} parent=5 // pred_check_branch
        %202 = sbr.rel (%p199) target = $region12
      $region11: #{tpu_custom_call.1} parent=5 // pred_region
        %s203 = ssub.s32 %s25, 1
        // Predicated region
        $region13: #{tpu_custom_call.1} parent=11 // pred_check
          %p204 = pneg %p114
        $region14: #{tpu_custom_call.1} parent=11 // pred_check_branch
          %206 = sbr.rel (%p204) target = $region16
        $region15: #{tpu_custom_call.1} parent=11 // pred_region
          %208 = vsyncadd [#allocation6], 0
          %s209 = sshll.u32 %s2, 4
          %s210 = int_to_ptr.hbm [resolvable:$true] %s209
          %s211 = sshll.u32 [#allocation7], 4
          %s212 = int_to_ptr.vmem [resolvable:$true] %s211
          %217 = dma.hbm_to_vmem [thread:$0]  %s210, 12288, %s212, [#allocation6], 256, 256, 16
        $region16: #{tpu_custom_call.1} parent=11 // pred_fallthru
          _
        // Predicated region
        $region17: #{tpu_custom_call.1} parent=11 // pred_check
          %p218 = pneg %p135
        $region18: #{tpu_custom_call.1} parent=11 // pred_check_branch
          %220 = sbr.rel (%p218) target = $region20
        $region19: #{tpu_custom_call.1} parent=11 // pred_region
          %222 = vsyncadd [#allocation9], 0
          %s224 = sshll.u32 %s3, 4
          %s225 = int_to_ptr.hbm [resolvable:$true] %s224
          %s226 = sshll.u32 [#allocation8], 4
          %s227 = int_to_ptr.vmem [resolvable:$true] %s226
          %229 = dma.hbm_to_vmem [thread:$0]  %s225, 64, %s227, [#allocation9]
        $region20: #{tpu_custom_call.1} parent=11 // pred_fallthru
          _
      $region12: #{tpu_custom_call.1} parent=5 // pred_fallthru
        _
      %p230 = scmp.lt.s32.totalorder %s25, 2
      // Predicated region
      $region21: #{tpu_custom_call.1} parent=5 // pred_check
        %p231 = pneg %p230
      $region22: #{tpu_custom_call.1} parent=5 // pred_check_branch
        %233 = sbr.rel (%p231) target = $region24
      $region23: #{tpu_custom_call.1} parent=5 // pred_region
        // Predicated region
        $region25: #{tpu_custom_call.1} parent=23 // pred_check
          %p234 = pneg %p59
        $region26: #{tpu_custom_call.1} parent=23 // pred_check_branch
          %236 = sbr.rel (%p234) target = $region28
        $region27: #{tpu_custom_call.1} parent=23 // pred_region
          %s237 = sand.u32 %s49, 1
          %s238 = scalar_lea.sflag [#allocation3], %s237
          %s239 = sand.u32 %s49, 1
          %s240 = smul.addr %s239, 384
          %s241 = scalar_lea.vmem [#allocation2], %s240
          %s242 = sadd.s32 %s32, %s33
          %s243 = smul.u32 32, %s242
          %245 = vsyncadd %s238, 0
          %s246 = smul.addr %s243, 3
          %s247 = smul.addr %s246, 4
          %s248 = scalar_lea.hbm %s0, %s247
          %s249 = sshll.u32 %s248, 4
          %s250 = int_to_ptr.hbm [resolvable:$true] %s249
          %s251 = sshll.u32 %s241, 4
          %s252 = int_to_ptr.vmem [resolvable:$true] %s251
          %257 = dma.hbm_to_vmem [thread:$0]  %s250, 6144, %s252, %s238, 192, 192, 12
        $region28: #{tpu_custom_call.1} parent=23 // pred_fallthru
          _
        // Predicated region
        $region29: #{tpu_custom_call.1} parent=23 // pred_check
          %p258 = pneg %p87
        $region30: #{tpu_custom_call.1} parent=23 // pred_check_branch
          %260 = sbr.rel (%p258) target = $region32
        $region31: #{tpu_custom_call.1} parent=23 // pred_region
          %s261 = sand.u32 %s25, 1
          %s262 = scalar_lea.sflag [#allocation6], %s261
          %s263 = sand.u32 %s77, 1
          %s264 = smul.addr %s263, 384
          %s265 = scalar_lea.vmem [#allocation5], %s264
          %s266 = sadd.s32 %s32, %s33
          %s267 = smul.u32 32, %s266
          %269 = vsyncadd %s262, 0
          %s270 = smul.addr %s267, 3
          %s271 = smul.addr %s270, 4
          %s272 = scalar_lea.hbm %s1, %s271
          %s273 = sshll.u32 %s272, 4
          %s274 = int_to_ptr.hbm [resolvable:$true] %s273
          %s275 = sshll.u32 %s265, 4
          %s276 = int_to_ptr.vmem [resolvable:$true] %s275
          %281 = dma.hbm_to_vmem [thread:$0]  %s274, 6144, %s276, %s262, 192, 192, 12
        $region32: #{tpu_custom_call.1} parent=23 // pred_fallthru
          _
      $region24: #{tpu_custom_call.1} parent=5 // pred_fallthru
        _
      %p282 = scmp.le.s32.totalorder 1, %s25
      %p283 = scmp.lt.s32.totalorder %s25, 3
      %p284 = pnand %p282, %p283
      %p285 = pneg %p284
      // Predicated region
      $region33: #{tpu_custom_call.1} parent=5 // pred_check
        _
      $region34: #{tpu_custom_call.1} parent=5 // pred_check_branch
        %287 = sbr.rel (%p284) target = $region36
      $region35: #{tpu_custom_call.1} parent=5 // pred_region
        %s288 = ssub.s32 %s25, 1
        %s289 = sand.u32 %s52, 1
        %s290 = scalar_lea.sflag [#allocation3], %s289
        %s291 = sand.u32 %s52, 1
        %s292 = smul.addr %s291, 384
        %s293 = scalar_lea.vmem [#allocation2], %s292
        // Predicated region
        $region37: #{tpu_custom_call.1} parent=35 // pred_check
          %p294 = pneg %p65
        $region38: #{tpu_custom_call.1} parent=35 // pred_check_branch
          %296 = sbr.rel (%p294) target = $region40
        $region39: #{tpu_custom_call.1} parent=35 // pred_region
          %298 = dma.done %s290, 6144
        $region40: #{tpu_custom_call.1} parent=35 // pred_fallthru
          _
        %s299 = sand.u32 %s30, 1
        %s300 = scalar_lea.sflag [#allocation6], %s299
        %s301 = sand.u32 %s80, 1
        %s302 = smul.addr %s301, 384
        %s303 = scalar_lea.vmem [#allocation5], %s302
        // Predicated region
        $region41: #{tpu_custom_call.1} parent=35 // pred_check
          %p304 = pneg %p93
        $region42: #{tpu_custom_call.1} parent=35 // pred_check_branch
          %306 = sbr.rel (%p304) target = $region44
        $region43: #{tpu_custom_call.1} parent=35 // pred_region
          %308 = dma.done %s300, 6144
        $region44: #{tpu_custom_call.1} parent=35 // pred_fallthru
          _
        // Predicated region
        $region45: #{tpu_custom_call.1} parent=35 // pred_check
          %p309 = pneg %p114
        $region46: #{tpu_custom_call.1} parent=35 // pred_check_branch
          %311 = sbr.rel (%p309) target = $region48
        $region47: #{tpu_custom_call.1} parent=35 // pred_region
          %313 = dma.done [#allocation6], 12288
        $region48: #{tpu_custom_call.1} parent=35 // pred_fallthru
          _
        // Predicated region
        $region49: #{tpu_custom_call.1} parent=35 // pred_check
          %p314 = pneg %p135
        $region50: #{tpu_custom_call.1} parent=35 // pred_check_branch
          %316 = sbr.rel (%p314) target = $region52
        $region51: #{tpu_custom_call.1} parent=35 // pred_region
          %318 = dma.done [#allocation9], 64
        $region52: #{tpu_custom_call.1} parent=35 // pred_fallthru
          _
        %s319 = sand.u32 %s52, 1
        %s320 = scalar_lea.sflag [#allocation3], %s319
        %s321 = sand.u32 %s52, 1
        %s322 = smul.addr %s321, 384
        %s323 = scalar_lea.vmem [#allocation2], %s322
        %p324 = pneg %p65
        %p325 = pneg %p62
        %s326 = sand.u32 %s30, 1
        %s327 = scalar_lea.sflag [#allocation6], %s326
        %s328 = sand.u32 %s80, 1
        %s329 = smul.addr %s328, 384
        %s330 = scalar_lea.vmem [#allocation5], %s329
        %p331 = pneg %p93
        %p332 = pneg %p90
        %p333 = pneg %p114
        %p334 = pneg %p111
        %p335 = pneg %p135
        %p336 = pneg %p132
        %p337 = pneg %p163
        %p338 = pneg %p160
        %s339 = sand.u32 %s150, 1
        %s340 = scalar_lea.sflag [#allocation4], %s339
        %s341 = sand.u32 %s150, 1
        %s342 = smul.addr %s341, 512
        %s343 = scalar_lea.vmem [#allocation10], %s342
        %p344 = pneg %p189
        %p345 = pneg %p186
        %s346 = sand.u32 %s176, 1
        %s347 = scalar_lea.sflag [#allocation12], %s346
        %s348 = sand.u32 %s176, 1
        %s349 = smul.addr %s348, 32
        %s350 = scalar_lea.vmem [#allocation11], %s349
        %s351 = sadd.s32 %s34, %s35
        %s352 = smul.u32 32, %s351
        %s353 = sadd.s32 %s34, %s35
        %s354 = smul.u32 32, %s353
        %s355 = sadd.s32 %s34, %s35
        %s356 = smul.u32 32, %s355
        %p357 = scmp.eq.s32.totalorder %s35, 0
        // Predicated region
        $region53: #{tpu_custom_call.1} parent=35 // pred_check
          %p358 = pneg %p357
        $region54: #{tpu_custom_call.1} parent=35 // pred_check_branch
          %360 = sbr.rel (%p358) target = $region56
        $region55: #{tpu_custom_call.1} parent=35 // pred_region
          %361 = vst [vmem:[%s350] sm:$0xff] 0.0
          %362 = vst [vmem:[%s350 + $0x8] sm:$0xff] 0.0
          %363 = vst [vmem:[%s350 + $0x10] sm:$0xff] 0.0
          %364 = vst [vmem:[%s350 + $0x18] sm:$0xff] 0.0
        $region56: #{tpu_custom_call.1} parent=35 // pred_fallthru
          _
        %v365 = vld [vmem:[%s293] sm:$0xff]
        %v366 = vld [vmem:[%s293 + $0x8] sm:$0xf]
        %v367 = vld [vmem:[%s293 + $0xc] sm:$0xff]
        %v368 = vld [vmem:[%s293 + $0x14] sm:$0xf]
        %v369 = vld [vmem:[%s293 + $0x18] sm:$0xff]
        %v370 = vld [vmem:[%s293 + $0x20] sm:$0xf]
        %v371 = vld [vmem:[%s293 + $0x24] sm:$0xff]
        %v372 = vld [vmem:[%s293 + $0x2c] sm:$0xf]
        %v373 = vld [vmem:[%s293 + $0x30] sm:$0xff]
        %v374 = vld [vmem:[%s293 + $0x38] sm:$0xf]
        %v375 = vld [vmem:[%s293 + $0x3c] sm:$0xff]
        %v376 = vld [vmem:[%s293 + $0x44] sm:$0xf]
        %v377 = vld [vmem:[%s293 + $0x48] sm:$0xff]
        %v378 = vld [vmem:[%s293 + $0x50] sm:$0xf]
        %v379 = vld [vmem:[%s293 + $0x54] sm:$0xff]
        %v380 = vld [vmem:[%s293 + $0x5c] sm:$0xf]
        %v381 = vld [vmem:[%s293 + $0x60] sm:$0xff]
        %v382 = vld [vmem:[%s293 + $0x68] sm:$0xf]
        %v383 = vld [vmem:[%s293 + $0x6c] sm:$0xff]
        %v384 = vld [vmem:[%s293 + $0x74] sm:$0xf]
        %v385 = vld [vmem:[%s293 + $0x78] sm:$0xff]
        %v386 = vld [vmem:[%s293 + $0x80] sm:$0xf]
        %v387 = vld [vmem:[%s293 + $0x84] sm:$0xff]
        %v388 = vld [vmem:[%s293 + $0x8c] sm:$0xf]
        %v389 = vld [vmem:[%s293 + $0x90] sm:$0xff]
        %v390 = vld [vmem:[%s293 + $0x98] sm:$0xf]
        %v391 = vld [vmem:[%s293 + $0x9c] sm:$0xff]
        %v392 = vld [vmem:[%s293 + $0xa4] sm:$0xf]
        %v393 = vld [vmem:[%s293 + $0xa8] sm:$0xff]
        %v394 = vld [vmem:[%s293 + $0xb0] sm:$0xf]
        %v395 = vld [vmem:[%s293 + $0xb4] sm:$0xff]
        %v396 = vld [vmem:[%s293 + $0xbc] sm:$0xf]
        %v397 = vld [vmem:[%s293 + $0xc0] sm:$0xff]
        %v398 = vld [vmem:[%s293 + $0xc8] sm:$0xf]
        %v399 = vld [vmem:[%s293 + $0xcc] sm:$0xff]
        %v400 = vld [vmem:[%s293 + $0xd4] sm:$0xf]
        %v401 = vld [vmem:[%s293 + $0xd8] sm:$0xff]
        %v402 = vld [vmem:[%s293 + $0xe0] sm:$0xf]
        %v403 = vld [vmem:[%s293 + $0xe4] sm:$0xff]
        %v404 = vld [vmem:[%s293 + $0xec] sm:$0xf]
        %v405 = vld [vmem:[%s293 + $0xf0] sm:$0xff]
        %v406 = vld [vmem:[%s293 + $0xf8] sm:$0xf]
        %v407 = vld [vmem:[%s293 + $0xfc] sm:$0xff]
        %v408 = vld [vmem:[%s293 + $0x104] sm:$0xf]
        %v409 = vld [vmem:[%s293 + $0x108] sm:$0xff]
        %v410 = vld [vmem:[%s293 + $0x110] sm:$0xf]
        %v411 = vld [vmem:[%s293 + $0x114] sm:$0xff]
        %v412 = vld [vmem:[%s293 + $0x11c] sm:$0xf]
        %v413 = vld [vmem:[%s293 + $0x120] sm:$0xff]
        %v414 = vld [vmem:[%s293 + $0x128] sm:$0xf]
        %v415 = vld [vmem:[%s293 + $0x12c] sm:$0xff]
        %v416 = vld [vmem:[%s293 + $0x134] sm:$0xf]
        %v417 = vld [vmem:[%s293 + $0x138] sm:$0xff]
        %v418 = vld [vmem:[%s293 + $0x140] sm:$0xf]
        %v419 = vld [vmem:[%s293 + $0x144] sm:$0xff]
        %v420 = vld [vmem:[%s293 + $0x14c] sm:$0xf]
        %v421 = vld [vmem:[%s293 + $0x150] sm:$0xff]
        %v422 = vld [vmem:[%s293 + $0x158] sm:$0xf]
        %v423 = vld [vmem:[%s293 + $0x15c] sm:$0xff]
        %v424 = vld [vmem:[%s293 + $0x164] sm:$0xf]
        %v425 = vld [vmem:[%s293 + $0x168] sm:$0xff]
        %v426 = vld [vmem:[%s293 + $0x170] sm:$0xf]
        %v427 = vld [vmem:[%s293 + $0x174] sm:$0xff]
        %v428 = vld [vmem:[%s293 + $0x17c] sm:$0xf]
        %v429 = vunpack.c.l.bf16 %v365
        %v430 = vunpack.c.h.bf16 %v365
        %v431 = vunpack.c.l.bf16 %v366
        %v432 = vunpack.c.l.bf16 %v367
        %v433 = vunpack.c.h.bf16 %v367
        %v434 = vunpack.c.l.bf16 %v368
        %v435 = vunpack.c.l.bf16 %v369
        %v436 = vunpack.c.h.bf16 %v369
        %v437 = vunpack.c.l.bf16 %v370
        %v438 = vunpack.c.l.bf16 %v371
        %v439 = vunpack.c.h.bf16 %v371
        %v440 = vunpack.c.l.bf16 %v372
        %v441 = vunpack.c.l.bf16 %v373
        %v442 = vunpack.c.h.bf16 %v373
        %v443 = vunpack.c.l.bf16 %v374
        %v444 = vunpack.c.l.bf16 %v375
        %v445 = vunpack.c.h.bf16 %v375
        %v446 = vunpack.c.l.bf16 %v376
        %v447 = vunpack.c.l.bf16 %v377
        %v448 = vunpack.c.h.bf16 %v377
        %v449 = vunpack.c.l.bf16 %v378
        %v450 = vunpack.c.l.bf16 %v379
        %v451 = vunpack.c.h.bf16 %v379
        %v452 = vunpack.c.l.bf16 %v380
        %v453 = vunpack.c.l.bf16 %v381
        %v454 = vunpack.c.h.bf16 %v381
        %v455 = vunpack.c.l.bf16 %v382
        %v456 = vunpack.c.l.bf16 %v383
        %v457 = vunpack.c.h.bf16 %v383
        %v458 = vunpack.c.l.bf16 %v384
        %v459 = vunpack.c.l.bf16 %v385
        %v460 = vunpack.c.h.bf16 %v385
        %v461 = vunpack.c.l.bf16 %v386
        %v462 = vunpack.c.l.bf16 %v387
        %v463 = vunpack.c.h.bf16 %v387
        %v464 = vunpack.c.l.bf16 %v388
        %v465 = vunpack.c.l.bf16 %v389
        %v466 = vunpack.c.h.bf16 %v389
        %v467 = vunpack.c.l.bf16 %v390
        %v468 = vunpack.c.l.bf16 %v391
        %v469 = vunpack.c.h.bf16 %v391
        %v470 = vunpack.c.l.bf16 %v392
        %v471 = vunpack.c.l.bf16 %v393
        %v472 = vunpack.c.h.bf16 %v393
        %v473 = vunpack.c.l.bf16 %v394
        %v474 = vunpack.c.l.bf16 %v395
        %v475 = vunpack.c.h.bf16 %v395
        %v476 = vunpack.c.l.bf16 %v396
        %v477 = vunpack.c.l.bf16 %v397
        %v478 = vunpack.c.h.bf16 %v397
        %v479 = vunpack.c.l.bf16 %v398
        %v480 = vunpack.c.l.bf16 %v399
        %v481 = vunpack.c.h.bf16 %v399
        %v482 = vunpack.c.l.bf16 %v400
        %v483 = vunpack.c.l.bf16 %v401
        %v484 = vunpack.c.h.bf16 %v401
        %v485 = vunpack.c.l.bf16 %v402
        %v486 = vunpack.c.l.bf16 %v403
        %v487 = vunpack.c.h.bf16 %v403
        %v488 = vunpack.c.l.bf16 %v404
        %v489 = vunpack.c.l.bf16 %v405
        %v490 = vunpack.c.h.bf16 %v405
        %v491 = vunpack.c.l.bf16 %v406
        %v492 = vunpack.c.l.bf16 %v407
        %v493 = vunpack.c.h.bf16 %v407
        %v494 = vunpack.c.l.bf16 %v408
        %v495 = vunpack.c.l.bf16 %v409
        %v496 = vunpack.c.h.bf16 %v409
        %v497 = vunpack.c.l.bf16 %v410
        %v498 = vunpack.c.l.bf16 %v411
        %v499 = vunpack.c.h.bf16 %v411
        %v500 = vunpack.c.l.bf16 %v412
        %v501 = vunpack.c.l.bf16 %v413
        %v502 = vunpack.c.h.bf16 %v413
        %v503 = vunpack.c.l.bf16 %v414
        %v504 = vunpack.c.l.bf16 %v415
        %v505 = vunpack.c.h.bf16 %v415
        %v506 = vunpack.c.l.bf16 %v416
        %v507 = vunpack.c.l.bf16 %v417
        %v508 = vunpack.c.h.bf16 %v417
        %v509 = vunpack.c.l.bf16 %v418
        %v510 = vunpack.c.l.bf16 %v419
        %v511 = vunpack.c.h.bf16 %v419
        %v512 = vunpack.c.l.bf16 %v420
        %v513 = vunpack.c.l.bf16 %v421
        %v514 = vunpack.c.h.bf16 %v421
        %v515 = vunpack.c.l.bf16 %v422
        %v516 = vunpack.c.l.bf16 %v423
        %v517 = vunpack.c.h.bf16 %v423
        %v518 = vunpack.c.l.bf16 %v424
        %v519 = vunpack.c.l.bf16 %v425
        %v520 = vunpack.c.h.bf16 %v425
        %v521 = vunpack.c.l.bf16 %v426
        %v522 = vunpack.c.l.bf16 %v427
        %v523 = vunpack.c.h.bf16 %v427
        %v524 = vunpack.c.l.bf16 %v428
        %v525 = vld [vmem:[%s303] sm:$0xff]
        %v526 = vld [vmem:[%s303 + $0x8] sm:$0xf]
        %v527 = vld [vmem:[%s303 + $0xc] sm:$0xff]
        %v528 = vld [vmem:[%s303 + $0x14] sm:$0xf]
        %v529 = vld [vmem:[%s303 + $0x18] sm:$0xff]
        %v530 = vld [vmem:[%s303 + $0x20] sm:$0xf]
        %v531 = vld [vmem:[%s303 + $0x24] sm:$0xff]
        %v532 = vld [vmem:[%s303 + $0x2c] sm:$0xf]
        %v533 = vld [vmem:[%s303 + $0x30] sm:$0xff]
        %v534 = vld [vmem:[%s303 + $0x38] sm:$0xf]
        %v535 = vld [vmem:[%s303 + $0x3c] sm:$0xff]
        %v536 = vld [vmem:[%s303 + $0x44] sm:$0xf]
        %v537 = vld [vmem:[%s303 + $0x48] sm:$0xff]
        %v538 = vld [vmem:[%s303 + $0x50] sm:$0xf]
        %v539 = vld [vmem:[%s303 + $0x54] sm:$0xff]
        %v540 = vld [vmem:[%s303 + $0x5c] sm:$0xf]
        %v541 = vld [vmem:[%s303 + $0x60] sm:$0xff]
        %v542 = vld [vmem:[%s303 + $0x68] sm:$0xf]
        %v543 = vld [vmem:[%s303 + $0x6c] sm:$0xff]
        %v544 = vld [vmem:[%s303 + $0x74] sm:$0xf]
        %v545 = vld [vmem:[%s303 + $0x78] sm:$0xff]
        %v546 = vld [vmem:[%s303 + $0x80] sm:$0xf]
        %v547 = vld [vmem:[%s303 + $0x84] sm:$0xff]
        %v548 = vld [vmem:[%s303 + $0x8c] sm:$0xf]
        %v549 = vld [vmem:[%s303 + $0x90] sm:$0xff]
        %v550 = vld [vmem:[%s303 + $0x98] sm:$0xf]
        %v551 = vld [vmem:[%s303 + $0x9c] sm:$0xff]
        %v552 = vld [vmem:[%s303 + $0xa4] sm:$0xf]
        %v553 = vld [vmem:[%s303 + $0xa8] sm:$0xff]
        %v554 = vld [vmem:[%s303 + $0xb0] sm:$0xf]
        %v555 = vld [vmem:[%s303 + $0xb4] sm:$0xff]
        %v556 = vld [vmem:[%s303 + $0xbc] sm:$0xf]
        %v557 = vld [vmem:[%s303 + $0xc0] sm:$0xff]
        %v558 = vld [vmem:[%s303 + $0xc8] sm:$0xf]
        %v559 = vld [vmem:[%s303 + $0xcc] sm:$0xff]
        %v560 = vld [vmem:[%s303 + $0xd4] sm:$0xf]
        %v561 = vld [vmem:[%s303 + $0xd8] sm:$0xff]
        %v562 = vld [vmem:[%s303 + $0xe0] sm:$0xf]
        %v563 = vld [vmem:[%s303 + $0xe4] sm:$0xff]
        %v564 = vld [vmem:[%s303 + $0xec] sm:$0xf]
        %v565 = vld [vmem:[%s303 + $0xf0] sm:$0xff]
        %v566 = vld [vmem:[%s303 + $0xf8] sm:$0xf]
        %v567 = vld [vmem:[%s303 + $0xfc] sm:$0xff]
        %v568 = vld [vmem:[%s303 + $0x104] sm:$0xf]
        %v569 = vld [vmem:[%s303 + $0x108] sm:$0xff]
        %v570 = vld [vmem:[%s303 + $0x110] sm:$0xf]
        %v571 = vld [vmem:[%s303 + $0x114] sm:$0xff]
        %v572 = vld [vmem:[%s303 + $0x11c] sm:$0xf]
        %v573 = vld [vmem:[%s303 + $0x120] sm:$0xff]
        %v574 = vld [vmem:[%s303 + $0x128] sm:$0xf]
        %v575 = vld [vmem:[%s303 + $0x12c] sm:$0xff]
        %v576 = vld [vmem:[%s303 + $0x134] sm:$0xf]
        %v577 = vld [vmem:[%s303 + $0x138] sm:$0xff]
        %v578 = vld [vmem:[%s303 + $0x140] sm:$0xf]
        %v579 = vld [vmem:[%s303 + $0x144] sm:$0xff]
        %v580 = vld [vmem:[%s303 + $0x14c] sm:$0xf]
        %v581 = vld [vmem:[%s303 + $0x150] sm:$0xff]
        %v582 = vld [vmem:[%s303 + $0x158] sm:$0xf]
        %v583 = vld [vmem:[%s303 + $0x15c] sm:$0xff]
        %v584 = vld [vmem:[%s303 + $0x164] sm:$0xf]
        %v585 = vld [vmem:[%s303 + $0x168] sm:$0xff]
        %v586 = vld [vmem:[%s303 + $0x170] sm:$0xf]
        %v587 = vld [vmem:[%s303 + $0x174] sm:$0xff]
        %v588 = vld [vmem:[%s303 + $0x17c] sm:$0xf]
        %v589 = vunpack.c.l.bf16 %v525
        %v590 = vunpack.c.h.bf16 %v525
        %v591 = vunpack.c.l.bf16 %v526
        %v592 = vunpack.c.l.bf16 %v527
        %v593 = vunpack.c.h.bf16 %v527
        %v594 = vunpack.c.l.bf16 %v528
        %v595 = vunpack.c.l.bf16 %v529
        %v596 = vunpack.c.h.bf16 %v529
        %v597 = vunpack.c.l.bf16 %v530
        %v598 = vunpack.c.l.bf16 %v531
        %v599 = vunpack.c.h.bf16 %v531
        %v600 = vunpack.c.l.bf16 %v532
        %v601 = vunpack.c.l.bf16 %v533
        %v602 = vunpack.c.h.bf16 %v533
        %v603 = vunpack.c.l.bf16 %v534
        %v604 = vunpack.c.l.bf16 %v535
        %v605 = vunpack.c.h.bf16 %v535
        %v606 = vunpack.c.l.bf16 %v536
        %v607 = vunpack.c.l.bf16 %v537
        %v608 = vunpack.c.h.bf16 %v537
        %v609 = vunpack.c.l.bf16 %v538
        %v610 = vunpack.c.l.bf16 %v539
        %v611 = vunpack.c.h.bf16 %v539
        %v612 = vunpack.c.l.bf16 %v540
        %v613 = vunpack.c.l.bf16 %v541
        %v614 = vunpack.c.h.bf16 %v541
        %v615 = vunpack.c.l.bf16 %v542
        %v616 = vunpack.c.l.bf16 %v543
        %v617 = vunpack.c.h.bf16 %v543
        %v618 = vunpack.c.l.bf16 %v544
        %v619 = vunpack.c.l.bf16 %v545
        %v620 = vunpack.c.h.bf16 %v545
        %v621 = vunpack.c.l.bf16 %v546
        %v622 = vunpack.c.l.bf16 %v547
        %v623 = vunpack.c.h.bf16 %v547
        %v624 = vunpack.c.l.bf16 %v548
        %v625 = vunpack.c.l.bf16 %v549
        %v626 = vunpack.c.h.bf16 %v549
        %v627 = vunpack.c.l.bf16 %v550
        %v628 = vunpack.c.l.bf16 %v551
        %v629 = vunpack.c.h.bf16 %v551
        %v630 = vunpack.c.l.bf16 %v552
        %v631 = vunpack.c.l.bf16 %v553
        %v632 = vunpack.c.h.bf16 %v553
        %v633 = vunpack.c.l.bf16 %v554
        %v634 = vunpack.c.l.bf16 %v555
        %v635 = vunpack.c.h.bf16 %v555
        %v636 = vunpack.c.l.bf16 %v556
        %v637 = vunpack.c.l.bf16 %v557
        %v638 = vunpack.c.h.bf16 %v557
        %v639 = vunpack.c.l.bf16 %v558
        %v640 = vunpack.c.l.bf16 %v559
        %v641 = vunpack.c.h.bf16 %v559
        %v642 = vunpack.c.l.bf16 %v560
        %v643 = vunpack.c.l.bf16 %v561
        %v644 = vunpack.c.h.bf16 %v561
        %v645 = vunpack.c.l.bf16 %v562
        %v646 = vunpack.c.l.bf16 %v563
        %v647 = vunpack.c.h.bf16 %v563
        %v648 = vunpack.c.l.bf16 %v564
        %v649 = vunpack.c.l.bf16 %v565
        %v650 = vunpack.c.h.bf16 %v565
        %v651 = vunpack.c.l.bf16 %v566
        %v652 = vunpack.c.l.bf16 %v567
        %v653 = vunpack.c.h.bf16 %v567
        %v654 = vunpack.c.l.bf16 %v568
        %v655 = vunpack.c.l.bf16 %v569
        %v656 = vunpack.c.h.bf16 %v569
        %v657 = vunpack.c.l.bf16 %v570
        %v658 = vunpack.c.l.bf16 %v571
        %v659 = vunpack.c.h.bf16 %v571
        %v660 = vunpack.c.l.bf16 %v572
        %v661 = vunpack.c.l.bf16 %v573
        %v662 = vunpack.c.h.bf16 %v573
        %v663 = vunpack.c.l.bf16 %v574
        %v664 = vunpack.c.l.bf16 %v575
        %v665 = vunpack.c.h.bf16 %v575
        %v666 = vunpack.c.l.bf16 %v576
        %v667 = vunpack.c.l.bf16 %v577
        %v668 = vunpack.c.h.bf16 %v577
        %v669 = vunpack.c.l.bf16 %v578
        %v670 = vunpack.c.l.bf16 %v579
        %v671 = vunpack.c.h.bf16 %v579
        %v672 = vunpack.c.l.bf16 %v580
        %v673 = vunpack.c.l.bf16 %v581
        %v674 = vunpack.c.h.bf16 %v581
        %v675 = vunpack.c.l.bf16 %v582
        %v676 = vunpack.c.l.bf16 %v583
        %v677 = vunpack.c.h.bf16 %v583
        %v678 = vunpack.c.l.bf16 %v584
        %v679 = vunpack.c.l.bf16 %v585
        %v680 = vunpack.c.h.bf16 %v585
        %v681 = vunpack.c.l.bf16 %v586
        %v682 = vunpack.c.l.bf16 %v587
        %v683 = vunpack.c.h.bf16 %v587
        %v684 = vunpack.c.l.bf16 %v588
        %v685 = vmul.f32 %v429, %v589
        %v686 = vmul.f32 %v430, %v590
        %v687 = vmul.f32 %v431, %v591
        %v688 = vmul.f32 %v432, %v592
        %v689 = vmul.f32 %v433, %v593
        %v690 = vmul.f32 %v434, %v594
        %v691 = vmul.f32 %v435, %v595
        %v692 = vmul.f32 %v436, %v596
        %v693 = vmul.f32 %v437, %v597
        %v694 = vmul.f32 %v438, %v598
        %v695 = vmul.f32 %v439, %v599
        %v696 = vmul.f32 %v440, %v600
        %v697 = vmul.f32 %v441, %v601
        %v698 = vmul.f32 %v442, %v602
        %v699 = vmul.f32 %v443, %v603
        %v700 = vmul.f32 %v444, %v604
        %v701 = vmul.f32 %v445, %v605
        %v702 = vmul.f32 %v446, %v606
        %v703 = vmul.f32 %v447, %v607
        %v704 = vmul.f32 %v448, %v608
        %v705 = vmul.f32 %v449, %v609
        %v706 = vmul.f32 %v450, %v610
        %v707 = vmul.f32 %v451, %v611
        %v708 = vmul.f32 %v452, %v612
        %v709 = vmul.f32 %v453, %v613
        %v710 = vmul.f32 %v454, %v614
        %v711 = vmul.f32 %v455, %v615
        %v712 = vmul.f32 %v456, %v616
        %v713 = vmul.f32 %v457, %v617
        %v714 = vmul.f32 %v458, %v618
        %v715 = vmul.f32 %v459, %v619
        %v716 = vmul.f32 %v460, %v620
        %v717 = vmul.f32 %v461, %v621
        %v718 = vmul.f32 %v462, %v622
        %v719 = vmul.f32 %v463, %v623
        %v720 = vmul.f32 %v464, %v624
        %v721 = vmul.f32 %v465, %v625
        %v722 = vmul.f32 %v466, %v626
        %v723 = vmul.f32 %v467, %v627
        %v724 = vmul.f32 %v468, %v628
        %v725 = vmul.f32 %v469, %v629
        %v726 = vmul.f32 %v470, %v630
        %v727 = vmul.f32 %v471, %v631
        %v728 = vmul.f32 %v472, %v632
        %v729 = vmul.f32 %v473, %v633
        %v730 = vmul.f32 %v474, %v634
        %v731 = vmul.f32 %v475, %v635
        %v732 = vmul.f32 %v476, %v636
        %v733 = vmul.f32 %v477, %v637
        %v734 = vmul.f32 %v478, %v638
        %v735 = vmul.f32 %v479, %v639
        %v736 = vmul.f32 %v480, %v640
        %v737 = vmul.f32 %v481, %v641
        %v738 = vmul.f32 %v482, %v642
        %v739 = vmul.f32 %v483, %v643
        %v740 = vmul.f32 %v484, %v644
        %v741 = vmul.f32 %v485, %v645
        %v742 = vmul.f32 %v486, %v646
        %v743 = vmul.f32 %v487, %v647
        %v744 = vmul.f32 %v488, %v648
        %v745 = vmul.f32 %v489, %v649
        %v746 = vmul.f32 %v490, %v650
        %v747 = vmul.f32 %v491, %v651
        %v748 = vmul.f32 %v492, %v652
        %v749 = vmul.f32 %v493, %v653
        %v750 = vmul.f32 %v494, %v654
        %v751 = vmul.f32 %v495, %v655
        %v752 = vmul.f32 %v496, %v656
        %v753 = vmul.f32 %v497, %v657
        %v754 = vmul.f32 %v498, %v658
        %v755 = vmul.f32 %v499, %v659
        %v756 = vmul.f32 %v500, %v660
        %v757 = vmul.f32 %v501, %v661
        %v758 = vmul.f32 %v502, %v662
        %v759 = vmul.f32 %v503, %v663
        %v760 = vmul.f32 %v504, %v664
        %v761 = vmul.f32 %v505, %v665
        %v762 = vmul.f32 %v506, %v666
        %v763 = vmul.f32 %v507, %v667
        %v764 = vmul.f32 %v508, %v668
        %v765 = vmul.f32 %v509, %v669
        %v766 = vmul.f32 %v510, %v670
        %v767 = vmul.f32 %v511, %v671
        %v768 = vmul.f32 %v512, %v672
        %v769 = vmul.f32 %v513, %v673
        %v770 = vmul.f32 %v514, %v674
        %v771 = vmul.f32 %v515, %v675
        %v772 = vmul.f32 %v516, %v676
        %v773 = vmul.f32 %v517, %v677
        %v774 = vmul.f32 %v518, %v678
        %v775 = vmul.f32 %v519, %v679
        %v776 = vmul.f32 %v520, %v680
        %v777 = vmul.f32 %v521, %v681
        %v778 = vmul.f32 %v522, %v682
        %v779 = vmul.f32 %v523, %v683
        %v780 = vmul.f32 %v524, %v684
        %v781 = vpack.c.bf16 %v688, %v685
        %v782 = vpack.c.bf16 %v689, %v686
        %v783 = vpack.c.bf16 %v690, %v687
        %v784 = vpack.c.bf16 %v694, %v691
        %v785 = vpack.c.bf16 %v695, %v692
        %v786 = vpack.c.bf16 %v696, %v693
        %v787 = vpack.c.bf16 %v700, %v697
        %v788 = vpack.c.bf16 %v701, %v698
        %v789 = vpack.c.bf16 %v702, %v699
        %v790 = vpack.c.bf16 %v706, %v703
        %v791 = vpack.c.bf16 %v707, %v704
        %v792 = vpack.c.bf16 %v708, %v705
        %v793 = vpack.c.bf16 %v712, %v709
        %v794 = vpack.c.bf16 %v713, %v710
        %v795 = vpack.c.bf16 %v714, %v711
        %v796 = vpack.c.bf16 %v718, %v715
        %v797 = vpack.c.bf16 %v719, %v716
        %v798 = vpack.c.bf16 %v720, %v717
        %v799 = vpack.c.bf16 %v724, %v721
        %v800 = vpack.c.bf16 %v725, %v722
        %v801 = vpack.c.bf16 %v726, %v723
        %v802 = vpack.c.bf16 %v730, %v727
        %v803 = vpack.c.bf16 %v731, %v728
        %v804 = vpack.c.bf16 %v732, %v729
        %v805 = vpack.c.bf16 %v736, %v733
        %v806 = vpack.c.bf16 %v737, %v734
        %v807 = vpack.c.bf16 %v738, %v735
        %v808 = vpack.c.bf16 %v742, %v739
        %v809 = vpack.c.bf16 %v743, %v740
        %v810 = vpack.c.bf16 %v744, %v741
        %v811 = vpack.c.bf16 %v748, %v745
        %v812 = vpack.c.bf16 %v749, %v746
        %v813 = vpack.c.bf16 %v750, %v747
        %v814 = vpack.c.bf16 %v754, %v751
        %v815 = vpack.c.bf16 %v755, %v752
        %v816 = vpack.c.bf16 %v756, %v753
        %v817 = vpack.c.bf16 %v760, %v757
        %v818 = vpack.c.bf16 %v761, %v758
        %v819 = vpack.c.bf16 %v762, %v759
        %v820 = vpack.c.bf16 %v766, %v763
        %v821 = vpack.c.bf16 %v767, %v764
        %v822 = vpack.c.bf16 %v768, %v765
        %v823 = vpack.c.bf16 %v772, %v769
        %v824 = vpack.c.bf16 %v773, %v770
        %v825 = vpack.c.bf16 %v774, %v771
        %v826 = vpack.c.bf16 %v778, %v775
        %v827 = vpack.c.bf16 %v779, %v776
        %v828 = vpack.c.bf16 %v780, %v777
        %v829 = vld [vmem:[#allocation7] sm:$0xff]
        %v830 = vld [vmem:[#allocation7 + $0x8] sm:$0xff]
        %v831 = vld [vmem:[#allocation7 + $0x10] sm:$0xff]
        %v832 = vld [vmem:[#allocation7 + $0x18] sm:$0xff]
        %v833 = vld [vmem:[#allocation7 + $0x20] sm:$0xff]
        %v834 = vld [vmem:[#allocation7 + $0x28] sm:$0xff]
        %v835 = vld [vmem:[#allocation7 + $0x30] sm:$0xff]
        %v836 = vld [vmem:[#allocation7 + $0x38] sm:$0xff]
        %v837 = vld [vmem:[#allocation7 + $0x40] sm:$0xff]
        %v838 = vld [vmem:[#allocation7 + $0x48] sm:$0xff]
        %v839 = vld [vmem:[#allocation7 + $0x50] sm:$0xff]
        %v840 = vld [vmem:[#allocation7 + $0x58] sm:$0xff]
        %v841 = vld [vmem:[#allocation7 + $0x60] sm:$0xff]
        %v842 = vld [vmem:[#allocation7 + $0x68] sm:$0xff]
        %v843 = vld [vmem:[#allocation7 + $0x70] sm:$0xff]
        %v844 = vld [vmem:[#allocation7 + $0x78] sm:$0xff]
        %v845 = vld [vmem:[#allocation7 + $0x80] sm:$0xff]
        %v846 = vld [vmem:[#allocation7 + $0x88] sm:$0xff]
        %v847 = vld [vmem:[#allocation7 + $0x90] sm:$0xff]
        %v848 = vld [vmem:[#allocation7 + $0x98] sm:$0xff]
        %v849 = vld [vmem:[#allocation7 + $0xa0] sm:$0xff]
        %v850 = vld [vmem:[#allocation7 + $0xa8] sm:$0xff]
        %v851 = vld [vmem:[#allocation7 + $0xb0] sm:$0xff]
        %v852 = vld [vmem:[#allocation7 + $0xb8] sm:$0xff]
        %v853 = vld [vmem:[#allocation7 + $0xc0] sm:$0xff]
        %v854 = vld [vmem:[#allocation7 + $0xc8] sm:$0xff]
        %v855 = vld [vmem:[#allocation7 + $0xd0] sm:$0xff]
        %v856 = vld [vmem:[#allocation7 + $0xd8] sm:$0xff]
        %v857 = vld [vmem:[#allocation7 + $0xe0] sm:$0xff]
        %v858 = vld [vmem:[#allocation7 + $0xe8] sm:$0xff]
        %v859 = vld [vmem:[#allocation7 + $0xf0] sm:$0xff]
        %v860 = vld [vmem:[#allocation7 + $0xf8] sm:$0xff]
        %v861 = vld [vmem:[#allocation7 + $0x100] sm:$0xff]
        %v862 = vld [vmem:[#allocation7 + $0x108] sm:$0xff]
        %v863 = vld [vmem:[#allocation7 + $0x110] sm:$0xff]
        %v864 = vld [vmem:[#allocation7 + $0x118] sm:$0xff]
        %v865 = vld [vmem:[#allocation7 + $0x120] sm:$0xff]
        %v866 = vld [vmem:[#allocation7 + $0x128] sm:$0xff]
        %v867 = vld [vmem:[#allocation7 + $0x130] sm:$0xff]
        %v868 = vld [vmem:[#allocation7 + $0x138] sm:$0xff]
        %v869 = vld [vmem:[#allocation7 + $0x140] sm:$0xff]
        %v870 = vld [vmem:[#allocation7 + $0x148] sm:$0xff]
        %v871 = vld [vmem:[#allocation7 + $0x150] sm:$0xff]
        %v872 = vld [vmem:[#allocation7 + $0x158] sm:$0xff]
        %v873 = vld [vmem:[#allocation7 + $0x160] sm:$0xff]
        %v874 = vld [vmem:[#allocation7 + $0x168] sm:$0xff]
        %v875 = vld [vmem:[#allocation7 + $0x170] sm:$0xff]
        %v876 = vld [vmem:[#allocation7 + $0x178] sm:$0xff]
        %v877 = vld [vmem:[#allocation7 + $0x180] sm:$0xff]
        %v878 = vld [vmem:[#allocation7 + $0x188] sm:$0xff]
        %v879 = vld [vmem:[#allocation7 + $0x190] sm:$0xff]
        %v880 = vld [vmem:[#allocation7 + $0x198] sm:$0xff]
        %v881 = vld [vmem:[#allocation7 + $0x1a0] sm:$0xff]
        %v882 = vld [vmem:[#allocation7 + $0x1a8] sm:$0xff]
        %v883 = vld [vmem:[#allocation7 + $0x1b0] sm:$0xff]
        %v884 = vld [vmem:[#allocation7 + $0x1b8] sm:$0xff]
        %v885 = vld [vmem:[#allocation7 + $0x1c0] sm:$0xff]
        %v886 = vld [vmem:[#allocation7 + $0x1c8] sm:$0xff]
        %v887 = vld [vmem:[#allocation7 + $0x1d0] sm:$0xff]
        %v888 = vld [vmem:[#allocation7 + $0x1d8] sm:$0xff]
        %v889 = vld [vmem:[#allocation7 + $0x1e0] sm:$0xff]
        %v890 = vld [vmem:[#allocation7 + $0x1e8] sm:$0xff]
        %v891 = vld [vmem:[#allocation7 + $0x1f0] sm:$0xff]
        %v892 = vld [vmem:[#allocation7 + $0x1f8] sm:$0xff]
        %v893 = vld [vmem:[#allocation7 + $0x200] sm:$0xff]
        %v894 = vld [vmem:[#allocation7 + $0x208] sm:$0xff]
        %v895 = vld [vmem:[#allocation7 + $0x210] sm:$0xff]
        %v896 = vld [vmem:[#allocation7 + $0x218] sm:$0xff]
        %v897 = vld [vmem:[#allocation7 + $0x220] sm:$0xff]
        %v898 = vld [vmem:[#allocation7 + $0x228] sm:$0xff]
        %v899 = vld [vmem:[#allocation7 + $0x230] sm:$0xff]
        %v900 = vld [vmem:[#allocation7 + $0x238] sm:$0xff]
        %v901 = vld [vmem:[#allocation7 + $0x240] sm:$0xff]
        %v902 = vld [vmem:[#allocation7 + $0x248] sm:$0xff]
        %v903 = vld [vmem:[#allocation7 + $0x250] sm:$0xff]
        %v904 = vld [vmem:[#allocation7 + $0x258] sm:$0xff]
        %v905 = vld [vmem:[#allocation7 + $0x260] sm:$0xff]
        %v906 = vld [vmem:[#allocation7 + $0x268] sm:$0xff]
        %v907 = vld [vmem:[#allocation7 + $0x270] sm:$0xff]
        %v908 = vld [vmem:[#allocation7 + $0x278] sm:$0xff]
        %v909 = vld [vmem:[#allocation7 + $0x280] sm:$0xff]
        %v910 = vld [vmem:[#allocation7 + $0x288] sm:$0xff]
        %v911 = vld [vmem:[#allocation7 + $0x290] sm:$0xff]
        %v912 = vld [vmem:[#allocation7 + $0x298] sm:$0xff]
        %v913 = vld [vmem:[#allocation7 + $0x2a0] sm:$0xff]
        %v914 = vld [vmem:[#allocation7 + $0x2a8] sm:$0xff]
        %v915 = vld [vmem:[#allocation7 + $0x2b0] sm:$0xff]
        %v916 = vld [vmem:[#allocation7 + $0x2b8] sm:$0xff]
        %v917 = vld [vmem:[#allocation7 + $0x2c0] sm:$0xff]
        %v918 = vld [vmem:[#allocation7 + $0x2c8] sm:$0xff]
        %v919 = vld [vmem:[#allocation7 + $0x2d0] sm:$0xff]
        %v920 = vld [vmem:[#allocation7 + $0x2d8] sm:$0xff]
        %v921 = vld [vmem:[#allocation7 + $0x2e0] sm:$0xff]
        %v922 = vld [vmem:[#allocation7 + $0x2e8] sm:$0xff]
        %v923 = vld [vmem:[#allocation7 + $0x2f0] sm:$0xff]
        %v924 = vld [vmem:[#allocation7 + $0x2f8] sm:$0xff]
        %v925 = vld [vmem:[#allocation8] sm:$0xf]
        %v927 = vperm.slane %v925, 0
        %v928 = vperm.slane %v925, 1
        %v929 = vperm.slane %v925, 2
        %v930 = vperm.slane %v925, 3
        %v1031 = vunpack.c.l.b16 %v829
        %v1032 = vunpack.c.h.b16 %v829
        %v1033 = vunpack.c.l.b16 %v830
        %v1034 = vunpack.c.h.b16 %v830
        %v1035 = vunpack.c.l.b16 %v831
        %v1036 = vunpack.c.h.b16 %v831
        %v1037 = vunpack.c.l.b16 %v832
        %v1038 = vunpack.c.h.b16 %v832
        %v1039 = vunpack.c.l.b16 %v833
        %v1040 = vunpack.c.h.b16 %v833
        %v1041 = vunpack.c.l.b16 %v834
        %v1042 = vunpack.c.h.b16 %v834
        %v1043 = vunpack.c.l.b16 %v835
        %v1044 = vunpack.c.h.b16 %v835
        %v1045 = vunpack.c.l.b16 %v836
        %v1046 = vunpack.c.h.b16 %v836
        %v1047 = vunpack.c.l.b16 %v837
        %v1048 = vunpack.c.h.b16 %v837
        %v1049 = vunpack.c.l.b16 %v838
        %v1050 = vunpack.c.h.b16 %v838
        %v1051 = vunpack.c.l.b16 %v839
        %v1052 = vunpack.c.h.b16 %v839
        %v1053 = vunpack.c.l.b16 %v840
        %v1054 = vunpack.c.h.b16 %v840
        %v1055 = vunpack.c.l.b16 %v841
        %v1056 = vunpack.c.h.b16 %v841
        %v1057 = vunpack.c.l.b16 %v842
        %v1058 = vunpack.c.h.b16 %v842
        %v1059 = vunpack.c.l.b16 %v843
        %v1060 = vunpack.c.h.b16 %v843
        %v1061 = vunpack.c.l.b16 %v844
        %v1062 = vunpack.c.h.b16 %v844
        %v1063 = vunpack.c.l.b16 %v845
        %v1064 = vunpack.c.h.b16 %v845
        %v1065 = vunpack.c.l.b16 %v846
        %v1066 = vunpack.c.h.b16 %v846
        %v1067 = vunpack.c.l.b16 %v847
        %v1068 = vunpack.c.h.b16 %v847
        %v1069 = vunpack.c.l.b16 %v848
        %v1070 = vunpack.c.h.b16 %v848
        %v1071 = vunpack.c.l.b16 %v849
        %v1072 = vunpack.c.h.b16 %v849
        %v1073 = vunpack.c.l.b16 %v850
        %v1074 = vunpack.c.h.b16 %v850
        %v1075 = vunpack.c.l.b16 %v851
        %v1076 = vunpack.c.h.b16 %v851
        %v1077 = vunpack.c.l.b16 %v852
        %v1078 = vunpack.c.h.b16 %v852
        %v1079 = vunpack.c.l.b16 %v853
        %v1080 = vunpack.c.h.b16 %v853
        %v1081 = vunpack.c.l.b16 %v854
        %v1082 = vunpack.c.h.b16 %v854
        %v1083 = vunpack.c.l.b16 %v855
        %v1084 = vunpack.c.h.b16 %v855
        %v1085 = vunpack.c.l.b16 %v856
        %v1086 = vunpack.c.h.b16 %v856
        %v1087 = vunpack.c.l.b16 %v857
        %v1088 = vunpack.c.h.b16 %v857
        %v1089 = vunpack.c.l.b16 %v858
        %v1090 = vunpack.c.h.b16 %v858
        %v1091 = vunpack.c.l.b16 %v859
        %v1092 = vunpack.c.h.b16 %v859
        %v1093 = vunpack.c.l.b16 %v860
        %v1094 = vunpack.c.h.b16 %v860
        %v1095 = vunpack.c.l.b16 %v861
        %v1096 = vunpack.c.h.b16 %v861
        %v1097 = vunpack.c.l.b16 %v862
        %v1098 = vunpack.c.h.b16 %v862
        %v1099 = vunpack.c.l.b16 %v863
        %v1100 = vunpack.c.h.b16 %v863
        %v1101 = vunpack.c.l.b16 %v864
        %v1102 = vunpack.c.h.b16 %v864
        %v1103 = vunpack.c.l.b16 %v865
        %v1104 = vunpack.c.h.b16 %v865
        %v1105 = vunpack.c.l.b16 %v866
        %v1106 = vunpack.c.h.b16 %v866
        %v1107 = vunpack.c.l.b16 %v867
        %v1108 = vunpack.c.h.b16 %v867
        %v1109 = vunpack.c.l.b16 %v868
        %v1110 = vunpack.c.h.b16 %v868
        %v1111 = vunpack.c.l.b16 %v869
        %v1112 = vunpack.c.h.b16 %v869
        %v1113 = vunpack.c.l.b16 %v870
        %v1114 = vunpack.c.h.b16 %v870
        %v1115 = vunpack.c.l.b16 %v871
        %v1116 = vunpack.c.h.b16 %v871
        %v1117 = vunpack.c.l.b16 %v872
        %v1118 = vunpack.c.h.b16 %v872
        %v1119 = vunpack.c.l.b16 %v873
        %v1120 = vunpack.c.h.b16 %v873
        %v1121 = vunpack.c.l.b16 %v874
        %v1122 = vunpack.c.h.b16 %v874
        %v1123 = vunpack.c.l.b16 %v875
        %v1124 = vunpack.c.h.b16 %v875
        %v1125 = vunpack.c.l.b16 %v876
        %v1126 = vunpack.c.h.b16 %v876
        %v1127 = vunpack.c.l.b16 %v877
        %v1128 = vunpack.c.h.b16 %v877
        %v1129 = vunpack.c.l.b16 %v878
        %v1130 = vunpack.c.h.b16 %v878
        %v1131 = vunpack.c.l.b16 %v879
        %v1132 = vunpack.c.h.b16 %v879
        %v1133 = vunpack.c.l.b16 %v880
        %v1134 = vunpack.c.h.b16 %v880
        %v1135 = vunpack.c.l.b16 %v881
        %v1136 = vunpack.c.h.b16 %v881
        %v1137 = vunpack.c.l.b16 %v882
        %v1138 = vunpack.c.h.b16 %v882
        %v1139 = vunpack.c.l.b16 %v883
        %v1140 = vunpack.c.h.b16 %v883
        %v1141 = vunpack.c.l.b16 %v884
        %v1142 = vunpack.c.h.b16 %v884
        %v1143 = vunpack.c.l.b16 %v885
        %v1144 = vunpack.c.h.b16 %v885
        %v1145 = vunpack.c.l.b16 %v886
        %v1146 = vunpack.c.h.b16 %v886
        %v1147 = vunpack.c.l.b16 %v887
        %v1148 = vunpack.c.h.b16 %v887
        %v1149 = vunpack.c.l.b16 %v888
        %v1150 = vunpack.c.h.b16 %v888
        %v1151 = vunpack.c.l.b16 %v889
        %v1152 = vunpack.c.h.b16 %v889
        %v1153 = vunpack.c.l.b16 %v890
        %v1154 = vunpack.c.h.b16 %v890
        %v1155 = vunpack.c.l.b16 %v891
        %v1156 = vunpack.c.h.b16 %v891
        %v1157 = vunpack.c.l.b16 %v892
        %v1158 = vunpack.c.h.b16 %v892
        %v1159 = vunpack.c.l.b16 %v893
        %v1160 = vunpack.c.h.b16 %v893
        %v1161 = vunpack.c.l.b16 %v894
        %v1162 = vunpack.c.h.b16 %v894
        %v1163 = vunpack.c.l.b16 %v895
        %v1164 = vunpack.c.h.b16 %v895
        %v1165 = vunpack.c.l.b16 %v896
        %v1166 = vunpack.c.h.b16 %v896
        %v1167 = vunpack.c.l.b16 %v897
        %v1168 = vunpack.c.h.b16 %v897
        %v1169 = vunpack.c.l.b16 %v898
        %v1170 = vunpack.c.h.b16 %v898
        %v1171 = vunpack.c.l.b16 %v899
        %v1172 = vunpack.c.h.b16 %v899
        %v1173 = vunpack.c.l.b16 %v900
        %v1174 = vunpack.c.h.b16 %v900
        %v1175 = vunpack.c.l.b16 %v901
        %v1176 = vunpack.c.h.b16 %v901
        %v1177 = vunpack.c.l.b16 %v902
        %v1178 = vunpack.c.h.b16 %v902
        %v1179 = vunpack.c.l.b16 %v903
        %v1180 = vunpack.c.h.b16 %v903
        %v1181 = vunpack.c.l.b16 %v904
        %v1182 = vunpack.c.h.b16 %v904
        %v1183 = vunpack.c.l.b16 %v905
        %v1184 = vunpack.c.h.b16 %v905
        %v1185 = vunpack.c.l.b16 %v906
        %v1186 = vunpack.c.h.b16 %v906
        %v1187 = vunpack.c.l.b16 %v907
        %v1188 = vunpack.c.h.b16 %v907
        %v1189 = vunpack.c.l.b16 %v908
        %v1190 = vunpack.c.h.b16 %v908
        %v1191 = vunpack.c.l.b16 %v909
        %v1192 = vunpack.c.h.b16 %v909
        %v1193 = vunpack.c.l.b16 %v910
        %v1194 = vunpack.c.h.b16 %v910
        %v1195 = vunpack.c.l.b16 %v911
        %v1196 = vunpack.c.h.b16 %v911
        %v1197 = vunpack.c.l.b16 %v912
        %v1198 = vunpack.c.h.b16 %v912
        %v1199 = vunpack.c.l.b16 %v913
        %v1200 = vunpack.c.h.b16 %v913
        %v1201 = vunpack.c.l.b16 %v914
        %v1202 = vunpack.c.h.b16 %v914
        %v1203 = vunpack.c.l.b16 %v915
        %v1204 = vunpack.c.h.b16 %v915
        %v1205 = vunpack.c.l.b16 %v916
        %v1206 = vunpack.c.h.b16 %v916
        %v1207 = vunpack.c.l.b16 %v917
        %v1208 = vunpack.c.h.b16 %v917
        %v1209 = vunpack.c.l.b16 %v918
        %v1210 = vunpack.c.h.b16 %v918
        %v1211 = vunpack.c.l.b16 %v919
        %v1212 = vunpack.c.h.b16 %v919
        %v1213 = vunpack.c.l.b16 %v920
        %v1214 = vunpack.c.h.b16 %v920
        %v1215 = vunpack.c.l.b16 %v921
        %v1216 = vunpack.c.h.b16 %v921
        %v1217 = vunpack.c.l.b16 %v922
        %v1218 = vunpack.c.h.b16 %v922
        %v1219 = vunpack.c.l.b16 %v923
        %v1220 = vunpack.c.h.b16 %v923
        %v1221 = vunpack.c.l.b16 %v924
        %v1222 = vunpack.c.h.b16 %v924
        %v1223 = vpack.c.b16 %v1035, %v1031
        %v1224 = vpack.c.b16 %v1036, %v1032
        %v1225 = vpack.c.b16 %v1037, %v1033
        %v1226 = vpack.c.b16 %v1038, %v1034
        %v1227 = vpack.c.b16 %v1043, %v1039
        %v1228 = vpack.c.b16 %v1044, %v1040
        %v1229 = vpack.c.b16 %v1045, %v1041
        %v1230 = vpack.c.b16 %v1046, %v1042
        %v1231 = vpack.c.b16 %v1051, %v1047
        %v1232 = vpack.c.b16 %v1052, %v1048
        %v1233 = vpack.c.b16 %v1053, %v1049
        %v1234 = vpack.c.b16 %v1054, %v1050
        %v1235 = vpack.c.b16 %v1059, %v1055
        %v1236 = vpack.c.b16 %v1060, %v1056
        %v1237 = vpack.c.b16 %v1061, %v1057
        %v1238 = vpack.c.b16 %v1062, %v1058
        %v1239 = vpack.c.b16 %v1067, %v1063
        %v1240 = vpack.c.b16 %v1068, %v1064
        %v1241 = vpack.c.b16 %v1069, %v1065
        %v1242 = vpack.c.b16 %v1070, %v1066
        %v1243 = vpack.c.b16 %v1075, %v1071
        %v1244 = vpack.c.b16 %v1076, %v1072
        %v1245 = vpack.c.b16 %v1077, %v1073
        %v1246 = vpack.c.b16 %v1078, %v1074
        %v1247 = vpack.c.b16 %v1083, %v1079
        %v1248 = vpack.c.b16 %v1084, %v1080
        %v1249 = vpack.c.b16 %v1085, %v1081
        %v1250 = vpack.c.b16 %v1086, %v1082
        %v1251 = vpack.c.b16 %v1091, %v1087
        %v1252 = vpack.c.b16 %v1092, %v1088
        %v1253 = vpack.c.b16 %v1093, %v1089
        %v1254 = vpack.c.b16 %v1094, %v1090
        %v1255 = vpack.c.b16 %v1099, %v1095
        %v1256 = vpack.c.b16 %v1100, %v1096
        %v1257 = vpack.c.b16 %v1101, %v1097
        %v1258 = vpack.c.b16 %v1102, %v1098
        %v1259 = vpack.c.b16 %v1107, %v1103
        %v1260 = vpack.c.b16 %v1108, %v1104
        %v1261 = vpack.c.b16 %v1109, %v1105
        %v1262 = vpack.c.b16 %v1110, %v1106
        %v1263 = vpack.c.b16 %v1115, %v1111
        %v1264 = vpack.c.b16 %v1116, %v1112
        %v1265 = vpack.c.b16 %v1117, %v1113
        %v1266 = vpack.c.b16 %v1118, %v1114
        %v1267 = vpack.c.b16 %v1123, %v1119
        %v1268 = vpack.c.b16 %v1124, %v1120
        %v1269 = vpack.c.b16 %v1125, %v1121
        %v1270 = vpack.c.b16 %v1126, %v1122
        %v1271 = vpack.c.b16 %v1131, %v1127
        %v1272 = vpack.c.b16 %v1132, %v1128
        %v1273 = vpack.c.b16 %v1133, %v1129
        %v1274 = vpack.c.b16 %v1134, %v1130
        %v1275 = vpack.c.b16 %v1139, %v1135
        %v1276 = vpack.c.b16 %v1140, %v1136
        %v1277 = vpack.c.b16 %v1141, %v1137
        %v1278 = vpack.c.b16 %v1142, %v1138
        %v1279 = vpack.c.b16 %v1147, %v1143
        %v1280 = vpack.c.b16 %v1148, %v1144
        %v1281 = vpack.c.b16 %v1149, %v1145
        %v1282 = vpack.c.b16 %v1150, %v1146
        %v1283 = vpack.c.b16 %v1155, %v1151
        %v1284 = vpack.c.b16 %v1156, %v1152
        %v1285 = vpack.c.b16 %v1157, %v1153
        %v1286 = vpack.c.b16 %v1158, %v1154
        %v1287 = vpack.c.b16 %v1163, %v1159
        %v1288 = vpack.c.b16 %v1164, %v1160
        %v1289 = vpack.c.b16 %v1165, %v1161
        %v1290 = vpack.c.b16 %v1166, %v1162
        %v1291 = vpack.c.b16 %v1171, %v1167
        %v1292 = vpack.c.b16 %v1172, %v1168
        %v1293 = vpack.c.b16 %v1173, %v1169
        %v1294 = vpack.c.b16 %v1174, %v1170
        %v1295 = vpack.c.b16 %v1179, %v1175
        %v1296 = vpack.c.b16 %v1180, %v1176
        %v1297 = vpack.c.b16 %v1181, %v1177
        %v1298 = vpack.c.b16 %v1182, %v1178
        %v1299 = vpack.c.b16 %v1187, %v1183
        %v1300 = vpack.c.b16 %v1188, %v1184
        %v1301 = vpack.c.b16 %v1189, %v1185
        %v1302 = vpack.c.b16 %v1190, %v1186
        %v1303 = vpack.c.b16 %v1195, %v1191
        %v1304 = vpack.c.b16 %v1196, %v1192
        %v1305 = vpack.c.b16 %v1197, %v1193
        %v1306 = vpack.c.b16 %v1198, %v1194
        %v1307 = vpack.c.b16 %v1203, %v1199
        %v1308 = vpack.c.b16 %v1204, %v1200
        %v1309 = vpack.c.b16 %v1205, %v1201
        %v1310 = vpack.c.b16 %v1206, %v1202
        %v1311 = vpack.c.b16 %v1211, %v1207
        %v1312 = vpack.c.b16 %v1212, %v1208
        %v1313 = vpack.c.b16 %v1213, %v1209
        %v1314 = vpack.c.b16 %v1214, %v1210
        %v1315 = vpack.c.b16 %v1219, %v1215
        %v1316 = vpack.c.b16 %v1220, %v1216
        %v1317 = vpack.c.b16 %v1221, %v1217
        %v1318 = vpack.c.b16 %v1222, %v1218
        %1415 = vmatpush.bf16.msra.mxu0 %v1251
        %1416 = vmatpush.bf16.msra.mxu0 %v1247
        %1417 = vmatpush.bf16.msra.mxu0 %v1243
        %1418 = vmatpush.bf16.msra.mxu0 %v1239
        %1419 = vmatpush.bf16.msra.mxu0 %v1235
        %1420 = vmatpush.bf16.msra.mxu0 %v1231
        %1421 = vmatpush.bf16.msra.mxu0 %v1227
        %1422 = vmatpush.bf16.msra.mxu0 %v1223
        %1423 = vmatmul.bf16.gmra.mxu0 %v781
        %v1424 = vpop.f32.mrf.mxu0
        %v1425 = vadd.f32 %v927, %v1424
        %v1426 = vpop.f32.mrf.mxu0
        %v1427 = vadd.f32 %v927, %v1426
        %1428 = vmatmul.bf16.gmra.mxu0 %v784
        %v1429 = vpop.f32.mrf.mxu0
        %v1430 = vadd.f32 %v927, %v1429
        %v1431 = vpop.f32.mrf.mxu0
        %v1432 = vadd.f32 %v927, %v1431
        %1433 = vmatmul.bf16.gmra.mxu0 %v787
        %v1434 = vpop.f32.mrf.mxu0
        %v1435 = vadd.f32 %v927, %v1434
        %v1436 = vpop.f32.mrf.mxu0
        %v1437 = vadd.f32 %v927, %v1436
        %1438 = vmatmul.bf16.gmra.mxu0 %v790
        %v1439 = vpop.f32.mrf.mxu0
        %v1440 = vadd.f32 %v927, %v1439
        %v1441 = vpop.f32.mrf.mxu0
        %v1442 = vadd.f32 %v927, %v1441
        %1443 = vmatmul.bf16.gmra.mxu0 %v793
        %v1444 = vpop.f32.mrf.mxu0
        %v1445 = vadd.f32 %v927, %v1444
        %v1446 = vpop.f32.mrf.mxu0
        %v1447 = vadd.f32 %v927, %v1446
        %1448 = vmatmul.bf16.gmra.mxu0 %v796
        %v1449 = vpop.f32.mrf.mxu0
        %v1450 = vadd.f32 %v927, %v1449
        %v1451 = vpop.f32.mrf.mxu0
        %v1452 = vadd.f32 %v927, %v1451
        %1453 = vmatmul.bf16.gmra.mxu0 %v799
        %v1454 = vpop.f32.mrf.mxu0
        %v1455 = vadd.f32 %v927, %v1454
        %v1456 = vpop.f32.mrf.mxu0
        %v1457 = vadd.f32 %v927, %v1456
        %1458 = vmatmul.bf16.gmra.mxu0 %v802
        %v1459 = vpop.f32.mrf.mxu0
        %v1460 = vadd.f32 %v927, %v1459
        %v1461 = vpop.f32.mrf.mxu0
        %v1462 = vadd.f32 %v927, %v1461
        %1463 = vmatmul.bf16.gmra.mxu0 %v805
        %v1464 = vpop.f32.mrf.mxu0
        %v1465 = vadd.f32 %v927, %v1464
        %v1466 = vpop.f32.mrf.mxu0
        %v1467 = vadd.f32 %v927, %v1466
        %1468 = vmatmul.bf16.gmra.mxu0 %v808
        %v1469 = vpop.f32.mrf.mxu0
        %v1470 = vadd.f32 %v927, %v1469
        %v1471 = vpop.f32.mrf.mxu0
        %v1472 = vadd.f32 %v927, %v1471
        %1473 = vmatmul.bf16.gmra.mxu0 %v811
        %v1474 = vpop.f32.mrf.mxu0
        %v1475 = vadd.f32 %v927, %v1474
        %v1476 = vpop.f32.mrf.mxu0
        %v1477 = vadd.f32 %v927, %v1476
        %1478 = vmatmul.bf16.gmra.mxu0 %v814
        %v1479 = vpop.f32.mrf.mxu0
        %v1480 = vadd.f32 %v927, %v1479
        %v1481 = vpop.f32.mrf.mxu0
        %v1482 = vadd.f32 %v927, %v1481
        %1483 = vmatmul.bf16.gmra.mxu0 %v817
        %v1484 = vpop.f32.mrf.mxu0
        %v1485 = vadd.f32 %v927, %v1484
        %v1486 = vpop.f32.mrf.mxu0
        %v1487 = vadd.f32 %v927, %v1486
        %1488 = vmatmul.bf16.gmra.mxu0 %v820
        %v1489 = vpop.f32.mrf.mxu0
        %v1490 = vadd.f32 %v927, %v1489
        %v1491 = vpop.f32.mrf.mxu0
        %v1492 = vadd.f32 %v927, %v1491
        %1493 = vmatmul.bf16.gmra.mxu0 %v823
        %v1494 = vpop.f32.mrf.mxu0
        %v1495 = vadd.f32 %v927, %v1494
        %v1496 = vpop.f32.mrf.mxu0
        %v1497 = vadd.f32 %v927, %v1496
        %1498 = vmatmul.bf16.gmra.mxu0 %v826
        %v1499 = vpop.f32.mrf.mxu0
        %v1500 = vadd.f32 %v927, %v1499
        %v1501 = vpop.f32.mrf.mxu0
        %v1502 = vadd.f32 %v927, %v1501
        %1503 = vdwg.mxu0
        %1504 = vmatpush.bf16.msra.mxu0 %v1283
        %1505 = vmatpush.bf16.msra.mxu0 %v1279
        %1506 = vmatpush.bf16.msra.mxu0 %v1275
        %1507 = vmatpush.bf16.msra.mxu0 %v1271
        %1508 = vmatpush.bf16.msra.mxu0 %v1267
        %1509 = vmatpush.bf16.msra.mxu0 %v1263
        %1510 = vmatpush.bf16.msra.mxu0 %v1259
        %1511 = vmatpush.bf16.msra.mxu0 %v1255
        %1512 = vmatmul.bf16.gmra.mxu0 %v782
        %v1513 = vpop.f32.mrf.mxu0
        %v1514 = vadd.f32 %v1425, %v1513
        %v1515 = vpop.f32.mrf.mxu0
        %v1516 = vadd.f32 %v1427, %v1515
        %1517 = vmatmul.bf16.gmra.mxu0 %v785
        %v1518 = vpop.f32.mrf.mxu0
        %v1519 = vadd.f32 %v1430, %v1518
        %v1520 = vpop.f32.mrf.mxu0
        %v1521 = vadd.f32 %v1432, %v1520
        %1522 = vmatmul.bf16.gmra.mxu0 %v788
        %v1523 = vpop.f32.mrf.mxu0
        %v1524 = vadd.f32 %v1435, %v1523
        %v1525 = vpop.f32.mrf.mxu0
        %v1526 = vadd.f32 %v1437, %v1525
        %1527 = vmatmul.bf16.gmra.mxu0 %v791
        %v1528 = vpop.f32.mrf.mxu0
        %v1529 = vadd.f32 %v1440, %v1528
        %v1530 = vpop.f32.mrf.mxu0
        %v1531 = vadd.f32 %v1442, %v1530
        %1532 = vmatmul.bf16.gmra.mxu0 %v794
        %v1533 = vpop.f32.mrf.mxu0
        %v1534 = vadd.f32 %v1445, %v1533
        %v1535 = vpop.f32.mrf.mxu0
        %v1536 = vadd.f32 %v1447, %v1535
        %1537 = vmatmul.bf16.gmra.mxu0 %v797
        %v1538 = vpop.f32.mrf.mxu0
        %v1539 = vadd.f32 %v1450, %v1538
        %v1540 = vpop.f32.mrf.mxu0
        %v1541 = vadd.f32 %v1452, %v1540
        %1542 = vmatmul.bf16.gmra.mxu0 %v800
        %v1543 = vpop.f32.mrf.mxu0
        %v1544 = vadd.f32 %v1455, %v1543
        %v1545 = vpop.f32.mrf.mxu0
        %v1546 = vadd.f32 %v1457, %v1545
        %1547 = vmatmul.bf16.gmra.mxu0 %v803
        %v1548 = vpop.f32.mrf.mxu0
        %v1549 = vadd.f32 %v1460, %v1548
        %v1550 = vpop.f32.mrf.mxu0
        %v1551 = vadd.f32 %v1462, %v1550
        %1552 = vmatmul.bf16.gmra.mxu0 %v806
        %v1553 = vpop.f32.mrf.mxu0
        %v1554 = vadd.f32 %v1465, %v1553
        %v1555 = vpop.f32.mrf.mxu0
        %v1556 = vadd.f32 %v1467, %v1555
        %1557 = vmatmul.bf16.gmra.mxu0 %v809
        %v1558 = vpop.f32.mrf.mxu0
        %v1559 = vadd.f32 %v1470, %v1558
        %v1560 = vpop.f32.mrf.mxu0
        %v1561 = vadd.f32 %v1472, %v1560
        %1562 = vmatmul.bf16.gmra.mxu0 %v812
        %v1563 = vpop.f32.mrf.mxu0
        %v1564 = vadd.f32 %v1475, %v1563
        %v1565 = vpop.f32.mrf.mxu0
        %v1566 = vadd.f32 %v1477, %v1565
        %1567 = vmatmul.bf16.gmra.mxu0 %v815
        %v1568 = vpop.f32.mrf.mxu0
        %v1569 = vadd.f32 %v1480, %v1568
        %v1570 = vpop.f32.mrf.mxu0
        %v1571 = vadd.f32 %v1482, %v1570
        %1572 = vmatmul.bf16.gmra.mxu0 %v818
        %v1573 = vpop.f32.mrf.mxu0
        %v1574 = vadd.f32 %v1485, %v1573
        %v1575 = vpop.f32.mrf.mxu0
        %v1576 = vadd.f32 %v1487, %v1575
        %1577 = vmatmul.bf16.gmra.mxu0 %v821
        %v1578 = vpop.f32.mrf.mxu0
        %v1579 = vadd.f32 %v1490, %v1578
        %v1580 = vpop.f32.mrf.mxu0
        %v1581 = vadd.f32 %v1492, %v1580
        %1582 = vmatmul.bf16.gmra.mxu0 %v824
        %v1583 = vpop.f32.mrf.mxu0
        %v1584 = vadd.f32 %v1495, %v1583
        %v1585 = vpop.f32.mrf.mxu0
        %v1586 = vadd.f32 %v1497, %v1585
        %1587 = vmatmul.bf16.gmra.mxu0 %v827
        %v1588 = vpop.f32.mrf.mxu0
        %v1589 = vadd.f32 %v1500, %v1588
        %v1590 = vpop.f32.mrf.mxu0
        %v1591 = vadd.f32 %v1502, %v1590
        %1592 = vdwg.mxu0
        %1593 = vmatpush.bf16.msra.mxu0 %v1315
        %1594 = vmatpush.bf16.msra.mxu0 %v1311
        %1595 = vmatpush.bf16.msra.mxu0 %v1307
        %1596 = vmatpush.bf16.msra.mxu0 %v1303
        %1597 = vmatpush.bf16.msra.mxu0 %v1299
        %1598 = vmatpush.bf16.msra.mxu0 %v1295
        %1599 = vmatpush.bf16.msra.mxu0 %v1291
        %1600 = vmatpush.bf16.msra.mxu0 %v1287
        %1601 = vmatmul.bf16.gmra.mxu0 %v783
        %v1602 = vpop.f32.mrf.mxu0
        %v1603 = vadd.f32 %v1514, %v1602
        %v1604 = vpop.f32.mrf.mxu0
        %v1605 = vadd.f32 %v1516, %v1604
        %1606 = vmatmul.bf16.gmra.mxu0 %v786
        %v1607 = vpop.f32.mrf.mxu0
        %v1608 = vadd.f32 %v1519, %v1607
        %v1609 = vpop.f32.mrf.mxu0
        %v1610 = vadd.f32 %v1521, %v1609
        %1611 = vmatmul.bf16.gmra.mxu0 %v789
        %v1612 = vpop.f32.mrf.mxu0
        %v1613 = vadd.f32 %v1524, %v1612
        %v1614 = vpop.f32.mrf.mxu0
        %v1615 = vadd.f32 %v1526, %v1614
        %1616 = vmatmul.bf16.gmra.mxu0 %v792
        %v1617 = vpop.f32.mrf.mxu0
        %v1618 = vadd.f32 %v1529, %v1617
        %v1619 = vpop.f32.mrf.mxu0
        %v1620 = vadd.f32 %v1531, %v1619
        %1621 = vmatmul.bf16.gmra.mxu0 %v795
        %v1622 = vpop.f32.mrf.mxu0
        %v1623 = vadd.f32 %v1534, %v1622
        %v1624 = vpop.f32.mrf.mxu0
        %v1625 = vadd.f32 %v1536, %v1624
        %1626 = vmatmul.bf16.gmra.mxu0 %v798
        %v1627 = vpop.f32.mrf.mxu0
        %v1628 = vadd.f32 %v1539, %v1627
        %v1629 = vpop.f32.mrf.mxu0
        %v1630 = vadd.f32 %v1541, %v1629
        %1631 = vmatmul.bf16.gmra.mxu0 %v801
        %v1632 = vpop.f32.mrf.mxu0
        %v1633 = vadd.f32 %v1544, %v1632
        %v1634 = vpop.f32.mrf.mxu0
        %v1635 = vadd.f32 %v1546, %v1634
        %1636 = vmatmul.bf16.gmra.mxu0 %v804
        %v1637 = vpop.f32.mrf.mxu0
        %v1638 = vadd.f32 %v1549, %v1637
        %v1639 = vpop.f32.mrf.mxu0
        %v1640 = vadd.f32 %v1551, %v1639
        %1641 = vmatmul.bf16.gmra.mxu0 %v807
        %v1642 = vpop.f32.mrf.mxu0
        %v1643 = vadd.f32 %v1554, %v1642
        %v1644 = vpop.f32.mrf.mxu0
        %v1645 = vadd.f32 %v1556, %v1644
        %1646 = vmatmul.bf16.gmra.mxu0 %v810
        %v1647 = vpop.f32.mrf.mxu0
        %v1648 = vadd.f32 %v1559, %v1647
        %v1649 = vpop.f32.mrf.mxu0
        %v1650 = vadd.f32 %v1561, %v1649
        %1651 = vmatmul.bf16.gmra.mxu0 %v813
        %v1652 = vpop.f32.mrf.mxu0
        %v1653 = vadd.f32 %v1564, %v1652
        %v1654 = vpop.f32.mrf.mxu0
        %v1655 = vadd.f32 %v1566, %v1654
        %1656 = vmatmul.bf16.gmra.mxu0 %v816
        %v1657 = vpop.f32.mrf.mxu0
        %v1658 = vadd.f32 %v1569, %v1657
        %v1659 = vpop.f32.mrf.mxu0
        %v1660 = vadd.f32 %v1571, %v1659
        %1661 = vmatmul.bf16.gmra.mxu0 %v819
        %v1662 = vpop.f32.mrf.mxu0
        %v1663 = vadd.f32 %v1574, %v1662
        %v1664 = vpop.f32.mrf.mxu0
        %v1665 = vadd.f32 %v1576, %v1664
        %1666 = vmatmul.bf16.gmra.mxu0 %v822
        %v1667 = vpop.f32.mrf.mxu0
        %v1668 = vadd.f32 %v1579, %v1667
        %v1669 = vpop.f32.mrf.mxu0
        %v1670 = vadd.f32 %v1581, %v1669
        %1671 = vmatmul.bf16.gmra.mxu0 %v825
        %v1672 = vpop.f32.mrf.mxu0
        %v1673 = vadd.f32 %v1584, %v1672
        %v1674 = vpop.f32.mrf.mxu0
        %v1675 = vadd.f32 %v1586, %v1674
        %1676 = vmatmul.bf16.gmra.mxu0 %v828
        %v1677 = vpop.f32.mrf.mxu0
        %v1678 = vadd.f32 %v1589, %v1677
        %v1679 = vpop.f32.mrf.mxu0
        %v1680 = vadd.f32 %v1591, %v1679
        %1681 = vdwg.mxu0
        %1682 = vmatpush.bf16.msra.mxu0 %v1252
        %1683 = vmatpush.bf16.msra.mxu0 %v1248
        %1684 = vmatpush.bf16.msra.mxu0 %v1244
        %1685 = vmatpush.bf16.msra.mxu0 %v1240
        %1686 = vmatpush.bf16.msra.mxu0 %v1236
        %1687 = vmatpush.bf16.msra.mxu0 %v1232
        %1688 = vmatpush.bf16.msra.mxu0 %v1228
        %1689 = vmatpush.bf16.msra.mxu0 %v1224
        %1690 = vmatmul.bf16.gmra.mxu0 %v781
        %v1691 = vpop.f32.mrf.mxu0
        %v1692 = vadd.f32 %v928, %v1691
        %v1693 = vpop.f32.mrf.mxu0
        %v1694 = vadd.f32 %v928, %v1693
        %1695 = vmatmul.bf16.gmra.mxu0 %v784
        %v1696 = vpop.f32.mrf.mxu0
        %v1697 = vadd.f32 %v928, %v1696
        %v1698 = vpop.f32.mrf.mxu0
        %v1699 = vadd.f32 %v928, %v1698
        %1700 = vmatmul.bf16.gmra.mxu0 %v787
        %v1701 = vpop.f32.mrf.mxu0
        %v1702 = vadd.f32 %v928, %v1701
        %v1703 = vpop.f32.mrf.mxu0
        %v1704 = vadd.f32 %v928, %v1703
        %1705 = vmatmul.bf16.gmra.mxu0 %v790
        %v1706 = vpop.f32.mrf.mxu0
        %v1707 = vadd.f32 %v928, %v1706
        %v1708 = vpop.f32.mrf.mxu0
        %v1709 = vadd.f32 %v928, %v1708
        %1710 = vmatmul.bf16.gmra.mxu0 %v793
        %v1711 = vpop.f32.mrf.mxu0
        %v1712 = vadd.f32 %v928, %v1711
        %v1713 = vpop.f32.mrf.mxu0
        %v1714 = vadd.f32 %v928, %v1713
        %1715 = vmatmul.bf16.gmra.mxu0 %v796
        %v1716 = vpop.f32.mrf.mxu0
        %v1717 = vadd.f32 %v928, %v1716
        %v1718 = vpop.f32.mrf.mxu0
        %v1719 = vadd.f32 %v928, %v1718
        %1720 = vmatmul.bf16.gmra.mxu0 %v799
        %v1721 = vpop.f32.mrf.mxu0
        %v1722 = vadd.f32 %v928, %v1721
        %v1723 = vpop.f32.mrf.mxu0
        %v1724 = vadd.f32 %v928, %v1723
        %1725 = vmatmul.bf16.gmra.mxu0 %v802
        %v1726 = vpop.f32.mrf.mxu0
        %v1727 = vadd.f32 %v928, %v1726
        %v1728 = vpop.f32.mrf.mxu0
        %v1729 = vadd.f32 %v928, %v1728
        %1730 = vmatmul.bf16.gmra.mxu0 %v805
        %v1731 = vpop.f32.mrf.mxu0
        %v1732 = vadd.f32 %v928, %v1731
        %v1733 = vpop.f32.mrf.mxu0
        %v1734 = vadd.f32 %v928, %v1733
        %1735 = vmatmul.bf16.gmra.mxu0 %v808
        %v1736 = vpop.f32.mrf.mxu0
        %v1737 = vadd.f32 %v928, %v1736
        %v1738 = vpop.f32.mrf.mxu0
        %v1739 = vadd.f32 %v928, %v1738
        %1740 = vmatmul.bf16.gmra.mxu0 %v811
        %v1741 = vpop.f32.mrf.mxu0
        %v1742 = vadd.f32 %v928, %v1741
        %v1743 = vpop.f32.mrf.mxu0
        %v1744 = vadd.f32 %v928, %v1743
        %1745 = vmatmul.bf16.gmra.mxu0 %v814
        %v1746 = vpop.f32.mrf.mxu0
        %v1747 = vadd.f32 %v928, %v1746
        %v1748 = vpop.f32.mrf.mxu0
        %v1749 = vadd.f32 %v928, %v1748
        %1750 = vmatmul.bf16.gmra.mxu0 %v817
        %v1751 = vpop.f32.mrf.mxu0
        %v1752 = vadd.f32 %v928, %v1751
        %v1753 = vpop.f32.mrf.mxu0
        %v1754 = vadd.f32 %v928, %v1753
        %1755 = vmatmul.bf16.gmra.mxu0 %v820
        %v1756 = vpop.f32.mrf.mxu0
        %v1757 = vadd.f32 %v928, %v1756
        %v1758 = vpop.f32.mrf.mxu0
        %v1759 = vadd.f32 %v928, %v1758
        %1760 = vmatmul.bf16.gmra.mxu0 %v823
        %v1761 = vpop.f32.mrf.mxu0
        %v1762 = vadd.f32 %v928, %v1761
        %v1763 = vpop.f32.mrf.mxu0
        %v1764 = vadd.f32 %v928, %v1763
        %1765 = vmatmul.bf16.gmra.mxu0 %v826
        %v1766 = vpop.f32.mrf.mxu0
        %v1767 = vadd.f32 %v928, %v1766
        %v1768 = vpop.f32.mrf.mxu0
        %v1769 = vadd.f32 %v928, %v1768
        %1770 = vdwg.mxu0
        %1771 = vmatpush.bf16.msra.mxu0 %v1284
        %1772 = vmatpush.bf16.msra.mxu0 %v1280
        %1773 = vmatpush.bf16.msra.mxu0 %v1276
        %1774 = vmatpush.bf16.msra.mxu0 %v1272
        %1775 = vmatpush.bf16.msra.mxu0 %v1268
        %1776 = vmatpush.bf16.msra.mxu0 %v1264
        %1777 = vmatpush.bf16.msra.mxu0 %v1260
        %1778 = vmatpush.bf16.msra.mxu0 %v1256
        %1779 = vmatmul.bf16.gmra.mxu0 %v782
        %v1780 = vpop.f32.mrf.mxu0
        %v1781 = vadd.f32 %v1692, %v1780
        %v1782 = vpop.f32.mrf.mxu0
        %v1783 = vadd.f32 %v1694, %v1782
        %1784 = vmatmul.bf16.gmra.mxu0 %v785
        %v1785 = vpop.f32.mrf.mxu0
        %v1786 = vadd.f32 %v1697, %v1785
        %v1787 = vpop.f32.mrf.mxu0
        %v1788 = vadd.f32 %v1699, %v1787
        %1789 = vmatmul.bf16.gmra.mxu0 %v788
        %v1790 = vpop.f32.mrf.mxu0
        %v1791 = vadd.f32 %v1702, %v1790
        %v1792 = vpop.f32.mrf.mxu0
        %v1793 = vadd.f32 %v1704, %v1792
        %1794 = vmatmul.bf16.gmra.mxu0 %v791
        %v1795 = vpop.f32.mrf.mxu0
        %v1796 = vadd.f32 %v1707, %v1795
        %v1797 = vpop.f32.mrf.mxu0
        %v1798 = vadd.f32 %v1709, %v1797
        %1799 = vmatmul.bf16.gmra.mxu0 %v794
        %v1800 = vpop.f32.mrf.mxu0
        %v1801 = vadd.f32 %v1712, %v1800
        %v1802 = vpop.f32.mrf.mxu0
        %v1803 = vadd.f32 %v1714, %v1802
        %1804 = vmatmul.bf16.gmra.mxu0 %v797
        %v1805 = vpop.f32.mrf.mxu0
        %v1806 = vadd.f32 %v1717, %v1805
        %v1807 = vpop.f32.mrf.mxu0
        %v1808 = vadd.f32 %v1719, %v1807
        %1809 = vmatmul.bf16.gmra.mxu0 %v800
        %v1810 = vpop.f32.mrf.mxu0
        %v1811 = vadd.f32 %v1722, %v1810
        %v1812 = vpop.f32.mrf.mxu0
        %v1813 = vadd.f32 %v1724, %v1812
        %1814 = vmatmul.bf16.gmra.mxu0 %v803
        %v1815 = vpop.f32.mrf.mxu0
        %v1816 = vadd.f32 %v1727, %v1815
        %v1817 = vpop.f32.mrf.mxu0
        %v1818 = vadd.f32 %v1729, %v1817
        %1819 = vmatmul.bf16.gmra.mxu0 %v806
        %v1820 = vpop.f32.mrf.mxu0
        %v1821 = vadd.f32 %v1732, %v1820
        %v1822 = vpop.f32.mrf.mxu0
        %v1823 = vadd.f32 %v1734, %v1822
        %1824 = vmatmul.bf16.gmra.mxu0 %v809
        %v1825 = vpop.f32.mrf.mxu0
        %v1826 = vadd.f32 %v1737, %v1825
        %v1827 = vpop.f32.mrf.mxu0
        %v1828 = vadd.f32 %v1739, %v1827
        %1829 = vmatmul.bf16.gmra.mxu0 %v812
        %v1830 = vpop.f32.mrf.mxu0
        %v1831 = vadd.f32 %v1742, %v1830
        %v1832 = vpop.f32.mrf.mxu0
        %v1833 = vadd.f32 %v1744, %v1832
        %1834 = vmatmul.bf16.gmra.mxu0 %v815
        %v1835 = vpop.f32.mrf.mxu0
        %v1836 = vadd.f32 %v1747, %v1835
        %v1837 = vpop.f32.mrf.mxu0
        %v1838 = vadd.f32 %v1749, %v1837
        %1839 = vmatmul.bf16.gmra.mxu0 %v818
        %v1840 = vpop.f32.mrf.mxu0
        %v1841 = vadd.f32 %v1752, %v1840
        %v1842 = vpop.f32.mrf.mxu0
        %v1843 = vadd.f32 %v1754, %v1842
        %1844 = vmatmul.bf16.gmra.mxu0 %v821
        %v1845 = vpop.f32.mrf.mxu0
        %v1846 = vadd.f32 %v1757, %v1845
        %v1847 = vpop.f32.mrf.mxu0
        %v1848 = vadd.f32 %v1759, %v1847
        %1849 = vmatmul.bf16.gmra.mxu0 %v824
        %v1850 = vpop.f32.mrf.mxu0
        %v1851 = vadd.f32 %v1762, %v1850
        %v1852 = vpop.f32.mrf.mxu0
        %v1853 = vadd.f32 %v1764, %v1852
        %1854 = vmatmul.bf16.gmra.mxu0 %v827
        %v1855 = vpop.f32.mrf.mxu0
        %v1856 = vadd.f32 %v1767, %v1855
        %v1857 = vpop.f32.mrf.mxu0
        %v1858 = vadd.f32 %v1769, %v1857
        %1859 = vdwg.mxu0
        %1860 = vmatpush.bf16.msra.mxu0 %v1316
        %1861 = vmatpush.bf16.msra.mxu0 %v1312
        %1862 = vmatpush.bf16.msra.mxu0 %v1308
        %1863 = vmatpush.bf16.msra.mxu0 %v1304
        %1864 = vmatpush.bf16.msra.mxu0 %v1300
        %1865 = vmatpush.bf16.msra.mxu0 %v1296
        %1866 = vmatpush.bf16.msra.mxu0 %v1292
        %1867 = vmatpush.bf16.msra.mxu0 %v1288
        %1868 = vmatmul.bf16.gmra.mxu0 %v783
        %v1869 = vpop.f32.mrf.mxu0
        %v1870 = vadd.f32 %v1781, %v1869
        %v1871 = vpop.f32.mrf.mxu0
        %v1872 = vadd.f32 %v1783, %v1871
        %1873 = vmatmul.bf16.gmra.mxu0 %v786
        %v1874 = vpop.f32.mrf.mxu0
        %v1875 = vadd.f32 %v1786, %v1874
        %v1876 = vpop.f32.mrf.mxu0
        %v1877 = vadd.f32 %v1788, %v1876
        %1878 = vmatmul.bf16.gmra.mxu0 %v789
        %v1879 = vpop.f32.mrf.mxu0
        %v1880 = vadd.f32 %v1791, %v1879
        %v1881 = vpop.f32.mrf.mxu0
        %v1882 = vadd.f32 %v1793, %v1881
        %1883 = vmatmul.bf16.gmra.mxu0 %v792
        %v1884 = vpop.f32.mrf.mxu0
        %v1885 = vadd.f32 %v1796, %v1884
        %v1886 = vpop.f32.mrf.mxu0
        %v1887 = vadd.f32 %v1798, %v1886
        %1888 = vmatmul.bf16.gmra.mxu0 %v795
        %v1889 = vpop.f32.mrf.mxu0
        %v1890 = vadd.f32 %v1801, %v1889
        %v1891 = vpop.f32.mrf.mxu0
        %v1892 = vadd.f32 %v1803, %v1891
        %1893 = vmatmul.bf16.gmra.mxu0 %v798
        %v1894 = vpop.f32.mrf.mxu0
        %v1895 = vadd.f32 %v1806, %v1894
        %v1896 = vpop.f32.mrf.mxu0
        %v1897 = vadd.f32 %v1808, %v1896
        %1898 = vmatmul.bf16.gmra.mxu0 %v801
        %v1899 = vpop.f32.mrf.mxu0
        %v1900 = vadd.f32 %v1811, %v1899
        %v1901 = vpop.f32.mrf.mxu0
        %v1902 = vadd.f32 %v1813, %v1901
        %1903 = vmatmul.bf16.gmra.mxu0 %v804
        %v1904 = vpop.f32.mrf.mxu0
        %v1905 = vadd.f32 %v1816, %v1904
        %v1906 = vpop.f32.mrf.mxu0
        %v1907 = vadd.f32 %v1818, %v1906
        %1908 = vmatmul.bf16.gmra.mxu0 %v807
        %v1909 = vpop.f32.mrf.mxu0
        %v1910 = vadd.f32 %v1821, %v1909
        %v1911 = vpop.f32.mrf.mxu0
        %v1912 = vadd.f32 %v1823, %v1911
        %1913 = vmatmul.bf16.gmra.mxu0 %v810
        %v1914 = vpop.f32.mrf.mxu0
        %v1915 = vadd.f32 %v1826, %v1914
        %v1916 = vpop.f32.mrf.mxu0
        %v1917 = vadd.f32 %v1828, %v1916
        %1918 = vmatmul.bf16.gmra.mxu0 %v813
        %v1919 = vpop.f32.mrf.mxu0
        %v1920 = vadd.f32 %v1831, %v1919
        %v1921 = vpop.f32.mrf.mxu0
        %v1922 = vadd.f32 %v1833, %v1921
        %1923 = vmatmul.bf16.gmra.mxu0 %v816
        %v1924 = vpop.f32.mrf.mxu0
        %v1925 = vadd.f32 %v1836, %v1924
        %v1926 = vpop.f32.mrf.mxu0
        %v1927 = vadd.f32 %v1838, %v1926
        %1928 = vmatmul.bf16.gmra.mxu0 %v819
        %v1929 = vpop.f32.mrf.mxu0
        %v1930 = vadd.f32 %v1841, %v1929
        %v1931 = vpop.f32.mrf.mxu0
        %v1932 = vadd.f32 %v1843, %v1931
        %1933 = vmatmul.bf16.gmra.mxu0 %v822
        %v1934 = vpop.f32.mrf.mxu0
        %v1935 = vadd.f32 %v1846, %v1934
        %v1936 = vpop.f32.mrf.mxu0
        %v1937 = vadd.f32 %v1848, %v1936
        %1938 = vmatmul.bf16.gmra.mxu0 %v825
        %v1939 = vpop.f32.mrf.mxu0
        %v1940 = vadd.f32 %v1851, %v1939
        %v1941 = vpop.f32.mrf.mxu0
        %v1942 = vadd.f32 %v1853, %v1941
        %1943 = vmatmul.bf16.gmra.mxu0 %v828
        %v1944 = vpop.f32.mrf.mxu0
        %v1945 = vadd.f32 %v1856, %v1944
        %v1946 = vpop.f32.mrf.mxu0
        %v1947 = vadd.f32 %v1858, %v1946
        %1948 = vdwg.mxu0
        %1949 = vmatpush.bf16.msra.mxu0 %v1253
        %1950 = vmatpush.bf16.msra.mxu0 %v1249
        %1951 = vmatpush.bf16.msra.mxu0 %v1245
        %1952 = vmatpush.bf16.msra.mxu0 %v1241
        %1953 = vmatpush.bf16.msra.mxu0 %v1237
        %1954 = vmatpush.bf16.msra.mxu0 %v1233
        %1955 = vmatpush.bf16.msra.mxu0 %v1229
        %1956 = vmatpush.bf16.msra.mxu0 %v1225
        %1957 = vmatmul.bf16.gmra.mxu0 %v781
        %v1958 = vpop.f32.mrf.mxu0
        %v1959 = vadd.f32 %v929, %v1958
        %v1960 = vpop.f32.mrf.mxu0
        %v1961 = vadd.f32 %v929, %v1960
        %1962 = vmatmul.bf16.gmra.mxu0 %v784
        %v1963 = vpop.f32.mrf.mxu0
        %v1964 = vadd.f32 %v929, %v1963
        %v1965 = vpop.f32.mrf.mxu0
        %v1966 = vadd.f32 %v929, %v1965
        %1967 = vmatmul.bf16.gmra.mxu0 %v787
        %v1968 = vpop.f32.mrf.mxu0
        %v1969 = vadd.f32 %v929, %v1968
        %v1970 = vpop.f32.mrf.mxu0
        %v1971 = vadd.f32 %v929, %v1970
        %1972 = vmatmul.bf16.gmra.mxu0 %v790
        %v1973 = vpop.f32.mrf.mxu0
        %v1974 = vadd.f32 %v929, %v1973
        %v1975 = vpop.f32.mrf.mxu0
        %v1976 = vadd.f32 %v929, %v1975
        %1977 = vmatmul.bf16.gmra.mxu0 %v793
        %v1978 = vpop.f32.mrf.mxu0
        %v1979 = vadd.f32 %v929, %v1978
        %v1980 = vpop.f32.mrf.mxu0
        %v1981 = vadd.f32 %v929, %v1980
        %1982 = vmatmul.bf16.gmra.mxu0 %v796
        %v1983 = vpop.f32.mrf.mxu0
        %v1984 = vadd.f32 %v929, %v1983
        %v1985 = vpop.f32.mrf.mxu0
        %v1986 = vadd.f32 %v929, %v1985
        %1987 = vmatmul.bf16.gmra.mxu0 %v799
        %v1988 = vpop.f32.mrf.mxu0
        %v1989 = vadd.f32 %v929, %v1988
        %v1990 = vpop.f32.mrf.mxu0
        %v1991 = vadd.f32 %v929, %v1990
        %1992 = vmatmul.bf16.gmra.mxu0 %v802
        %v1993 = vpop.f32.mrf.mxu0
        %v1994 = vadd.f32 %v929, %v1993
        %v1995 = vpop.f32.mrf.mxu0
        %v1996 = vadd.f32 %v929, %v1995
        %1997 = vmatmul.bf16.gmra.mxu0 %v805
        %v1998 = vpop.f32.mrf.mxu0
        %v1999 = vadd.f32 %v929, %v1998
        %v2000 = vpop.f32.mrf.mxu0
        %v2001 = vadd.f32 %v929, %v2000
        %2002 = vmatmul.bf16.gmra.mxu0 %v808
        %v2003 = vpop.f32.mrf.mxu0
        %v2004 = vadd.f32 %v929, %v2003
        %v2005 = vpop.f32.mrf.mxu0
        %v2006 = vadd.f32 %v929, %v2005
        %2007 = vmatmul.bf16.gmra.mxu0 %v811
        %v2008 = vpop.f32.mrf.mxu0
        %v2009 = vadd.f32 %v929, %v2008
        %v2010 = vpop.f32.mrf.mxu0
        %v2011 = vadd.f32 %v929, %v2010
        %2012 = vmatmul.bf16.gmra.mxu0 %v814
        %v2013 = vpop.f32.mrf.mxu0
        %v2014 = vadd.f32 %v929, %v2013
        %v2015 = vpop.f32.mrf.mxu0
        %v2016 = vadd.f32 %v929, %v2015
        %2017 = vmatmul.bf16.gmra.mxu0 %v817
        %v2018 = vpop.f32.mrf.mxu0
        %v2019 = vadd.f32 %v929, %v2018
        %v2020 = vpop.f32.mrf.mxu0
        %v2021 = vadd.f32 %v929, %v2020
        %2022 = vmatmul.bf16.gmra.mxu0 %v820
        %v2023 = vpop.f32.mrf.mxu0
        %v2024 = vadd.f32 %v929, %v2023
        %v2025 = vpop.f32.mrf.mxu0
        %v2026 = vadd.f32 %v929, %v2025
        %2027 = vmatmul.bf16.gmra.mxu0 %v823
        %v2028 = vpop.f32.mrf.mxu0
        %v2029 = vadd.f32 %v929, %v2028
        %v2030 = vpop.f32.mrf.mxu0
        %v2031 = vadd.f32 %v929, %v2030
        %2032 = vmatmul.bf16.gmra.mxu0 %v826
        %v2033 = vpop.f32.mrf.mxu0
        %v2034 = vadd.f32 %v929, %v2033
        %v2035 = vpop.f32.mrf.mxu0
        %v2036 = vadd.f32 %v929, %v2035
        %2037 = vdwg.mxu0
        %2038 = vmatpush.bf16.msra.mxu0 %v1285
        %2039 = vmatpush.bf16.msra.mxu0 %v1281
        %2040 = vmatpush.bf16.msra.mxu0 %v1277
        %2041 = vmatpush.bf16.msra.mxu0 %v1273
        %2042 = vmatpush.bf16.msra.mxu0 %v1269
        %2043 = vmatpush.bf16.msra.mxu0 %v1265
        %2044 = vmatpush.bf16.msra.mxu0 %v1261
        %2045 = vmatpush.bf16.msra.mxu0 %v1257
        %2046 = vmatmul.bf16.gmra.mxu0 %v782
        %v2047 = vpop.f32.mrf.mxu0
        %v2048 = vadd.f32 %v1959, %v2047
        %v2049 = vpop.f32.mrf.mxu0
        %v2050 = vadd.f32 %v1961, %v2049
        %2051 = vmatmul.bf16.gmra.mxu0 %v785
        %v2052 = vpop.f32.mrf.mxu0
        %v2053 = vadd.f32 %v1964, %v2052
        %v2054 = vpop.f32.mrf.mxu0
        %v2055 = vadd.f32 %v1966, %v2054
        %2056 = vmatmul.bf16.gmra.mxu0 %v788
        %v2057 = vpop.f32.mrf.mxu0
        %v2058 = vadd.f32 %v1969, %v2057
        %v2059 = vpop.f32.mrf.mxu0
        %v2060 = vadd.f32 %v1971, %v2059
        %2061 = vmatmul.bf16.gmra.mxu0 %v791
        %v2062 = vpop.f32.mrf.mxu0
        %v2063 = vadd.f32 %v1974, %v2062
        %v2064 = vpop.f32.mrf.mxu0
        %v2065 = vadd.f32 %v1976, %v2064
        %2066 = vmatmul.bf16.gmra.mxu0 %v794
        %v2067 = vpop.f32.mrf.mxu0
        %v2068 = vadd.f32 %v1979, %v2067
        %v2069 = vpop.f32.mrf.mxu0
        %v2070 = vadd.f32 %v1981, %v2069
        %2071 = vmatmul.bf16.gmra.mxu0 %v797
        %v2072 = vpop.f32.mrf.mxu0
        %v2073 = vadd.f32 %v1984, %v2072
        %v2074 = vpop.f32.mrf.mxu0
        %v2075 = vadd.f32 %v1986, %v2074
        %2076 = vmatmul.bf16.gmra.mxu0 %v800
        %v2077 = vpop.f32.mrf.mxu0
        %v2078 = vadd.f32 %v1989, %v2077
        %v2079 = vpop.f32.mrf.mxu0
        %v2080 = vadd.f32 %v1991, %v2079
        %2081 = vmatmul.bf16.gmra.mxu0 %v803
        %v2082 = vpop.f32.mrf.mxu0
        %v2083 = vadd.f32 %v1994, %v2082
        %v2084 = vpop.f32.mrf.mxu0
        %v2085 = vadd.f32 %v1996, %v2084
        %2086 = vmatmul.bf16.gmra.mxu0 %v806
        %v2087 = vpop.f32.mrf.mxu0
        %v2088 = vadd.f32 %v1999, %v2087
        %v2089 = vpop.f32.mrf.mxu0
        %v2090 = vadd.f32 %v2001, %v2089
        %2091 = vmatmul.bf16.gmra.mxu0 %v809
        %v2092 = vpop.f32.mrf.mxu0
        %v2093 = vadd.f32 %v2004, %v2092
        %v2094 = vpop.f32.mrf.mxu0
        %v2095 = vadd.f32 %v2006, %v2094
        %2096 = vmatmul.bf16.gmra.mxu0 %v812
        %v2097 = vpop.f32.mrf.mxu0
        %v2098 = vadd.f32 %v2009, %v2097
        %v2099 = vpop.f32.mrf.mxu0
        %v2100 = vadd.f32 %v2011, %v2099
        %2101 = vmatmul.bf16.gmra.mxu0 %v815
        %v2102 = vpop.f32.mrf.mxu0
        %v2103 = vadd.f32 %v2014, %v2102
        %v2104 = vpop.f32.mrf.mxu0
        %v2105 = vadd.f32 %v2016, %v2104
        %2106 = vmatmul.bf16.gmra.mxu0 %v818
        %v2107 = vpop.f32.mrf.mxu0
        %v2108 = vadd.f32 %v2019, %v2107
        %v2109 = vpop.f32.mrf.mxu0
        %v2110 = vadd.f32 %v2021, %v2109
        %2111 = vmatmul.bf16.gmra.mxu0 %v821
        %v2112 = vpop.f32.mrf.mxu0
        %v2113 = vadd.f32 %v2024, %v2112
        %v2114 = vpop.f32.mrf.mxu0
        %v2115 = vadd.f32 %v2026, %v2114
        %2116 = vmatmul.bf16.gmra.mxu0 %v824
        %v2117 = vpop.f32.mrf.mxu0
        %v2118 = vadd.f32 %v2029, %v2117
        %v2119 = vpop.f32.mrf.mxu0
        %v2120 = vadd.f32 %v2031, %v2119
        %2121 = vmatmul.bf16.gmra.mxu0 %v827
        %v2122 = vpop.f32.mrf.mxu0
        %v2123 = vadd.f32 %v2034, %v2122
        %v2124 = vpop.f32.mrf.mxu0
        %v2125 = vadd.f32 %v2036, %v2124
        %2126 = vdwg.mxu0
        %2127 = vmatpush.bf16.msra.mxu0 %v1317
        %2128 = vmatpush.bf16.msra.mxu0 %v1313
        %2129 = vmatpush.bf16.msra.mxu0 %v1309
        %2130 = vmatpush.bf16.msra.mxu0 %v1305
        %2131 = vmatpush.bf16.msra.mxu0 %v1301
        %2132 = vmatpush.bf16.msra.mxu0 %v1297
        %2133 = vmatpush.bf16.msra.mxu0 %v1293
        %2134 = vmatpush.bf16.msra.mxu0 %v1289
        %2135 = vmatmul.bf16.gmra.mxu0 %v783
        %v2136 = vpop.f32.mrf.mxu0
        %v2137 = vadd.f32 %v2048, %v2136
        %v2138 = vpop.f32.mrf.mxu0
        %v2139 = vadd.f32 %v2050, %v2138
        %2140 = vmatmul.bf16.gmra.mxu0 %v786
        %v2141 = vpop.f32.mrf.mxu0
        %v2142 = vadd.f32 %v2053, %v2141
        %v2143 = vpop.f32.mrf.mxu0
        %v2144 = vadd.f32 %v2055, %v2143
        %2145 = vmatmul.bf16.gmra.mxu0 %v789
        %v2146 = vpop.f32.mrf.mxu0
        %v2147 = vadd.f32 %v2058, %v2146
        %v2148 = vpop.f32.mrf.mxu0
        %v2149 = vadd.f32 %v2060, %v2148
        %2150 = vmatmul.bf16.gmra.mxu0 %v792
        %v2151 = vpop.f32.mrf.mxu0
        %v2152 = vadd.f32 %v2063, %v2151
        %v2153 = vpop.f32.mrf.mxu0
        %v2154 = vadd.f32 %v2065, %v2153
        %2155 = vmatmul.bf16.gmra.mxu0 %v795
        %v2156 = vpop.f32.mrf.mxu0
        %v2157 = vadd.f32 %v2068, %v2156
        %v2158 = vpop.f32.mrf.mxu0
        %v2159 = vadd.f32 %v2070, %v2158
        %2160 = vmatmul.bf16.gmra.mxu0 %v798
        %v2161 = vpop.f32.mrf.mxu0
        %v2162 = vadd.f32 %v2073, %v2161
        %v2163 = vpop.f32.mrf.mxu0
        %v2164 = vadd.f32 %v2075, %v2163
        %2165 = vmatmul.bf16.gmra.mxu0 %v801
        %v2166 = vpop.f32.mrf.mxu0
        %v2167 = vadd.f32 %v2078, %v2166
        %v2168 = vpop.f32.mrf.mxu0
        %v2169 = vadd.f32 %v2080, %v2168
        %2170 = vmatmul.bf16.gmra.mxu0 %v804
        %v2171 = vpop.f32.mrf.mxu0
        %v2172 = vadd.f32 %v2083, %v2171
        %v2173 = vpop.f32.mrf.mxu0
        %v2174 = vadd.f32 %v2085, %v2173
        %2175 = vmatmul.bf16.gmra.mxu0 %v807
        %v2176 = vpop.f32.mrf.mxu0
        %v2177 = vadd.f32 %v2088, %v2176
        %v2178 = vpop.f32.mrf.mxu0
        %v2179 = vadd.f32 %v2090, %v2178
        %2180 = vmatmul.bf16.gmra.mxu0 %v810
        %v2181 = vpop.f32.mrf.mxu0
        %v2182 = vadd.f32 %v2093, %v2181
        %v2183 = vpop.f32.mrf.mxu0
        %v2184 = vadd.f32 %v2095, %v2183
        %2185 = vmatmul.bf16.gmra.mxu0 %v813
        %v2186 = vpop.f32.mrf.mxu0
        %v2187 = vadd.f32 %v2098, %v2186
        %v2188 = vpop.f32.mrf.mxu0
        %v2189 = vadd.f32 %v2100, %v2188
        %2190 = vmatmul.bf16.gmra.mxu0 %v816
        %v2191 = vpop.f32.mrf.mxu0
        %v2192 = vadd.f32 %v2103, %v2191
        %v2193 = vpop.f32.mrf.mxu0
        %v2194 = vadd.f32 %v2105, %v2193
        %2195 = vmatmul.bf16.gmra.mxu0 %v819
        %v2196 = vpop.f32.mrf.mxu0
        %v2197 = vadd.f32 %v2108, %v2196
        %v2198 = vpop.f32.mrf.mxu0
        %v2199 = vadd.f32 %v2110, %v2198
        %2200 = vmatmul.bf16.gmra.mxu0 %v822
        %v2201 = vpop.f32.mrf.mxu0
        %v2202 = vadd.f32 %v2113, %v2201
        %v2203 = vpop.f32.mrf.mxu0
        %v2204 = vadd.f32 %v2115, %v2203
        %2205 = vmatmul.bf16.gmra.mxu0 %v825
        %v2206 = vpop.f32.mrf.mxu0
        %v2207 = vadd.f32 %v2118, %v2206
        %v2208 = vpop.f32.mrf.mxu0
        %v2209 = vadd.f32 %v2120, %v2208
        %2210 = vmatmul.bf16.gmra.mxu0 %v828
        %v2211 = vpop.f32.mrf.mxu0
        %v2212 = vadd.f32 %v2123, %v2211
        %v2213 = vpop.f32.mrf.mxu0
        %v2214 = vadd.f32 %v2125, %v2213
        %2215 = vdwg.mxu0
        %2216 = vmatpush.bf16.msra.mxu0 %v1254
        %2217 = vmatpush.bf16.msra.mxu0 %v1250
        %2218 = vmatpush.bf16.msra.mxu0 %v1246
        %2219 = vmatpush.bf16.msra.mxu0 %v1242
        %2220 = vmatpush.bf16.msra.mxu0 %v1238
        %2221 = vmatpush.bf16.msra.mxu0 %v1234
        %2222 = vmatpush.bf16.msra.mxu0 %v1230
        %2223 = vmatpush.bf16.msra.mxu0 %v1226
        %2224 = vmatmul.bf16.gmra.mxu0 %v781
        %v2225 = vpop.f32.mrf.mxu0
        %v2226 = vadd.f32 %v930, %v2225
        %v2227 = vpop.f32.mrf.mxu0
        %v2228 = vadd.f32 %v930, %v2227
        %2229 = vmatmul.bf16.gmra.mxu0 %v784
        %v2230 = vpop.f32.mrf.mxu0
        %v2231 = vadd.f32 %v930, %v2230
        %v2232 = vpop.f32.mrf.mxu0
        %v2233 = vadd.f32 %v930, %v2232
        %2234 = vmatmul.bf16.gmra.mxu0 %v787
        %v2235 = vpop.f32.mrf.mxu0
        %v2236 = vadd.f32 %v930, %v2235
        %v2237 = vpop.f32.mrf.mxu0
        %v2238 = vadd.f32 %v930, %v2237
        %2239 = vmatmul.bf16.gmra.mxu0 %v790
        %v2240 = vpop.f32.mrf.mxu0
        %v2241 = vadd.f32 %v930, %v2240
        %v2242 = vpop.f32.mrf.mxu0
        %v2243 = vadd.f32 %v930, %v2242
        %2244 = vmatmul.bf16.gmra.mxu0 %v793
        %v2245 = vpop.f32.mrf.mxu0
        %v2246 = vadd.f32 %v930, %v2245
        %v2247 = vpop.f32.mrf.mxu0
        %v2248 = vadd.f32 %v930, %v2247
        %2249 = vmatmul.bf16.gmra.mxu0 %v796
        %v2250 = vpop.f32.mrf.mxu0
        %v2251 = vadd.f32 %v930, %v2250
        %v2252 = vpop.f32.mrf.mxu0
        %v2253 = vadd.f32 %v930, %v2252
        %2254 = vmatmul.bf16.gmra.mxu0 %v799
        %v2255 = vpop.f32.mrf.mxu0
        %v2256 = vadd.f32 %v930, %v2255
        %v2257 = vpop.f32.mrf.mxu0
        %v2258 = vadd.f32 %v930, %v2257
        %2259 = vmatmul.bf16.gmra.mxu0 %v802
        %v2260 = vpop.f32.mrf.mxu0
        %v2261 = vadd.f32 %v930, %v2260
        %v2262 = vpop.f32.mrf.mxu0
        %v2263 = vadd.f32 %v930, %v2262
        %2264 = vmatmul.bf16.gmra.mxu0 %v805
        %v2265 = vpop.f32.mrf.mxu0
        %v2266 = vadd.f32 %v930, %v2265
        %v2267 = vpop.f32.mrf.mxu0
        %v2268 = vadd.f32 %v930, %v2267
        %2269 = vmatmul.bf16.gmra.mxu0 %v808
        %v2270 = vpop.f32.mrf.mxu0
        %v2271 = vadd.f32 %v930, %v2270
        %v2272 = vpop.f32.mrf.mxu0
        %v2273 = vadd.f32 %v930, %v2272
        %2274 = vmatmul.bf16.gmra.mxu0 %v811
        %v2275 = vpop.f32.mrf.mxu0
        %v2276 = vadd.f32 %v930, %v2275
        %v2277 = vpop.f32.mrf.mxu0
        %v2278 = vadd.f32 %v930, %v2277
        %2279 = vmatmul.bf16.gmra.mxu0 %v814
        %v2280 = vpop.f32.mrf.mxu0
        %v2281 = vadd.f32 %v930, %v2280
        %v2282 = vpop.f32.mrf.mxu0
        %v2283 = vadd.f32 %v930, %v2282
        %2284 = vmatmul.bf16.gmra.mxu0 %v817
        %v2285 = vpop.f32.mrf.mxu0
        %v2286 = vadd.f32 %v930, %v2285
        %v2287 = vpop.f32.mrf.mxu0
        %v2288 = vadd.f32 %v930, %v2287
        %2289 = vmatmul.bf16.gmra.mxu0 %v820
        %v2290 = vpop.f32.mrf.mxu0
        %v2291 = vadd.f32 %v930, %v2290
        %v2292 = vpop.f32.mrf.mxu0
        %v2293 = vadd.f32 %v930, %v2292
        %2294 = vmatmul.bf16.gmra.mxu0 %v823
        %v2295 = vpop.f32.mrf.mxu0
        %v2296 = vadd.f32 %v930, %v2295
        %v2297 = vpop.f32.mrf.mxu0
        %v2298 = vadd.f32 %v930, %v2297
        %2299 = vmatmul.bf16.gmra.mxu0 %v826
        %v2300 = vpop.f32.mrf.mxu0
        %v2301 = vadd.f32 %v930, %v2300
        %v2302 = vpop.f32.mrf.mxu0
        %v2303 = vadd.f32 %v930, %v2302
        %2304 = vdwg.mxu0
        %2305 = vmatpush.bf16.msra.mxu0 %v1286
        %2306 = vmatpush.bf16.msra.mxu0 %v1282
        %2307 = vmatpush.bf16.msra.mxu0 %v1278
        %2308 = vmatpush.bf16.msra.mxu0 %v1274
        %2309 = vmatpush.bf16.msra.mxu0 %v1270
        %2310 = vmatpush.bf16.msra.mxu0 %v1266
        %2311 = vmatpush.bf16.msra.mxu0 %v1262
        %2312 = vmatpush.bf16.msra.mxu0 %v1258
        %2313 = vmatmul.bf16.gmra.mxu0 %v782
        %v2314 = vpop.f32.mrf.mxu0
        %v2315 = vadd.f32 %v2226, %v2314
        %v2316 = vpop.f32.mrf.mxu0
        %v2317 = vadd.f32 %v2228, %v2316
        %2318 = vmatmul.bf16.gmra.mxu0 %v785
        %v2319 = vpop.f32.mrf.mxu0
        %v2320 = vadd.f32 %v2231, %v2319
        %v2321 = vpop.f32.mrf.mxu0
        %v2322 = vadd.f32 %v2233, %v2321
        %2323 = vmatmul.bf16.gmra.mxu0 %v788
        %v2324 = vpop.f32.mrf.mxu0
        %v2325 = vadd.f32 %v2236, %v2324
        %v2326 = vpop.f32.mrf.mxu0
        %v2327 = vadd.f32 %v2238, %v2326
        %2328 = vmatmul.bf16.gmra.mxu0 %v791
        %v2329 = vpop.f32.mrf.mxu0
        %v2330 = vadd.f32 %v2241, %v2329
        %v2331 = vpop.f32.mrf.mxu0
        %v2332 = vadd.f32 %v2243, %v2331
        %2333 = vmatmul.bf16.gmra.mxu0 %v794
        %v2334 = vpop.f32.mrf.mxu0
        %v2335 = vadd.f32 %v2246, %v2334
        %v2336 = vpop.f32.mrf.mxu0
        %v2337 = vadd.f32 %v2248, %v2336
        %2338 = vmatmul.bf16.gmra.mxu0 %v797
        %v2339 = vpop.f32.mrf.mxu0
        %v2340 = vadd.f32 %v2251, %v2339
        %v2341 = vpop.f32.mrf.mxu0
        %v2342 = vadd.f32 %v2253, %v2341
        %2343 = vmatmul.bf16.gmra.mxu0 %v800
        %v2344 = vpop.f32.mrf.mxu0
        %v2345 = vadd.f32 %v2256, %v2344
        %v2346 = vpop.f32.mrf.mxu0
        %v2347 = vadd.f32 %v2258, %v2346
        %2348 = vmatmul.bf16.gmra.mxu0 %v803
        %v2349 = vpop.f32.mrf.mxu0
        %v2350 = vadd.f32 %v2261, %v2349
        %v2351 = vpop.f32.mrf.mxu0
        %v2352 = vadd.f32 %v2263, %v2351
        %2353 = vmatmul.bf16.gmra.mxu0 %v806
        %v2354 = vpop.f32.mrf.mxu0
        %v2355 = vadd.f32 %v2266, %v2354
        %v2356 = vpop.f32.mrf.mxu0
        %v2357 = vadd.f32 %v2268, %v2356
        %2358 = vmatmul.bf16.gmra.mxu0 %v809
        %v2359 = vpop.f32.mrf.mxu0
        %v2360 = vadd.f32 %v2271, %v2359
        %v2361 = vpop.f32.mrf.mxu0
        %v2362 = vadd.f32 %v2273, %v2361
        %2363 = vmatmul.bf16.gmra.mxu0 %v812
        %v2364 = vpop.f32.mrf.mxu0
        %v2365 = vadd.f32 %v2276, %v2364
        %v2366 = vpop.f32.mrf.mxu0
        %v2367 = vadd.f32 %v2278, %v2366
        %2368 = vmatmul.bf16.gmra.mxu0 %v815
        %v2369 = vpop.f32.mrf.mxu0
        %v2370 = vadd.f32 %v2281, %v2369
        %v2371 = vpop.f32.mrf.mxu0
        %v2372 = vadd.f32 %v2283, %v2371
        %2373 = vmatmul.bf16.gmra.mxu0 %v818
        %v2374 = vpop.f32.mrf.mxu0
        %v2375 = vadd.f32 %v2286, %v2374
        %v2376 = vpop.f32.mrf.mxu0
        %v2377 = vadd.f32 %v2288, %v2376
        %2378 = vmatmul.bf16.gmra.mxu0 %v821
        %v2379 = vpop.f32.mrf.mxu0
        %v2380 = vadd.f32 %v2291, %v2379
        %v2381 = vpop.f32.mrf.mxu0
        %v2382 = vadd.f32 %v2293, %v2381
        %2383 = vmatmul.bf16.gmra.mxu0 %v824
        %v2384 = vpop.f32.mrf.mxu0
        %v2385 = vadd.f32 %v2296, %v2384
        %v2386 = vpop.f32.mrf.mxu0
        %v2387 = vadd.f32 %v2298, %v2386
        %2388 = vmatmul.bf16.gmra.mxu0 %v827
        %v2389 = vpop.f32.mrf.mxu0
        %v2390 = vadd.f32 %v2301, %v2389
        %v2391 = vpop.f32.mrf.mxu0
        %v2392 = vadd.f32 %v2303, %v2391
        %2393 = vdwg.mxu0
        %2394 = vmatpush.bf16.msra.mxu0 %v1318
        %2395 = vmatpush.bf16.msra.mxu0 %v1314
        %2396 = vmatpush.bf16.msra.mxu0 %v1310
        %2397 = vmatpush.bf16.msra.mxu0 %v1306
        %2398 = vmatpush.bf16.msra.mxu0 %v1302
        %2399 = vmatpush.bf16.msra.mxu0 %v1298
        %2400 = vmatpush.bf16.msra.mxu0 %v1294
        %2401 = vmatpush.bf16.msra.mxu0 %v1290
        %2402 = vmatmul.bf16.gmra.mxu0 %v783
        %v2403 = vpop.f32.mrf.mxu0
        %v2404 = vadd.f32 %v2315, %v2403
        %v2405 = vpop.f32.mrf.mxu0
        %v2406 = vadd.f32 %v2317, %v2405
        %2407 = vmatmul.bf16.gmra.mxu0 %v786
        %v2408 = vpop.f32.mrf.mxu0
        %v2409 = vadd.f32 %v2320, %v2408
        %v2410 = vpop.f32.mrf.mxu0
        %v2411 = vadd.f32 %v2322, %v2410
        %2412 = vmatmul.bf16.gmra.mxu0 %v789
        %v2413 = vpop.f32.mrf.mxu0
        %v2414 = vadd.f32 %v2325, %v2413
        %v2415 = vpop.f32.mrf.mxu0
        %v2416 = vadd.f32 %v2327, %v2415
        %2417 = vmatmul.bf16.gmra.mxu0 %v792
        %v2418 = vpop.f32.mrf.mxu0
        %v2419 = vadd.f32 %v2330, %v2418
        %v2420 = vpop.f32.mrf.mxu0
        %v2421 = vadd.f32 %v2332, %v2420
        %2422 = vmatmul.bf16.gmra.mxu0 %v795
        %v2423 = vpop.f32.mrf.mxu0
        %v2424 = vadd.f32 %v2335, %v2423
        %v2425 = vpop.f32.mrf.mxu0
        %v2426 = vadd.f32 %v2337, %v2425
        %2427 = vmatmul.bf16.gmra.mxu0 %v798
        %v2428 = vpop.f32.mrf.mxu0
        %v2429 = vadd.f32 %v2340, %v2428
        %v2430 = vpop.f32.mrf.mxu0
        %v2431 = vadd.f32 %v2342, %v2430
        %2432 = vmatmul.bf16.gmra.mxu0 %v801
        %v2433 = vpop.f32.mrf.mxu0
        %v2434 = vadd.f32 %v2345, %v2433
        %v2435 = vpop.f32.mrf.mxu0
        %v2436 = vadd.f32 %v2347, %v2435
        %2437 = vmatmul.bf16.gmra.mxu0 %v804
        %v2438 = vpop.f32.mrf.mxu0
        %v2439 = vadd.f32 %v2350, %v2438
        %v2440 = vpop.f32.mrf.mxu0
        %v2441 = vadd.f32 %v2352, %v2440
        %2442 = vmatmul.bf16.gmra.mxu0 %v807
        %v2443 = vpop.f32.mrf.mxu0
        %v2444 = vadd.f32 %v2355, %v2443
        %v2445 = vpop.f32.mrf.mxu0
        %v2446 = vadd.f32 %v2357, %v2445
        %2447 = vmatmul.bf16.gmra.mxu0 %v810
        %v2448 = vpop.f32.mrf.mxu0
        %v2449 = vadd.f32 %v2360, %v2448
        %v2450 = vpop.f32.mrf.mxu0
        %v2451 = vadd.f32 %v2362, %v2450
        %2452 = vmatmul.bf16.gmra.mxu0 %v813
        %v2453 = vpop.f32.mrf.mxu0
        %v2454 = vadd.f32 %v2365, %v2453
        %v2455 = vpop.f32.mrf.mxu0
        %v2456 = vadd.f32 %v2367, %v2455
        %2457 = vmatmul.bf16.gmra.mxu0 %v816
        %v2458 = vpop.f32.mrf.mxu0
        %v2459 = vadd.f32 %v2370, %v2458
        %v2460 = vpop.f32.mrf.mxu0
        %v2461 = vadd.f32 %v2372, %v2460
        %2462 = vmatmul.bf16.gmra.mxu0 %v819
        %v2463 = vpop.f32.mrf.mxu0
        %v2464 = vadd.f32 %v2375, %v2463
        %v2465 = vpop.f32.mrf.mxu0
        %v2466 = vadd.f32 %v2377, %v2465
        %2467 = vmatmul.bf16.gmra.mxu0 %v822
        %v2468 = vpop.f32.mrf.mxu0
        %v2469 = vadd.f32 %v2380, %v2468
        %v2470 = vpop.f32.mrf.mxu0
        %v2471 = vadd.f32 %v2382, %v2470
        %2472 = vmatmul.bf16.gmra.mxu0 %v825
        %v2473 = vpop.f32.mrf.mxu0
        %v2474 = vadd.f32 %v2385, %v2473
        %v2475 = vpop.f32.mrf.mxu0
        %v2476 = vadd.f32 %v2387, %v2475
        %2477 = vmatmul.bf16.gmra.mxu0 %v828
        %v2478 = vpop.f32.mrf.mxu0
        %v2479 = vadd.f32 %v2390, %v2478
        %v2480 = vpop.f32.mrf.mxu0
        %v2481 = vadd.f32 %v2392, %v2480
        %2482 = vdwg.mxu0
        %v2483 = vpack.c.bf16 %v1870, %v1603
        %v2484 = vpack.c.bf16 %v2404, %v2137
        %v2485 = vpack.c.bf16 %v1872, %v1605
        %v2486 = vpack.c.bf16 %v2406, %v2139
        %v2487 = vpack.c.bf16 %v1875, %v1608
        %v2488 = vpack.c.bf16 %v2409, %v2142
        %v2489 = vpack.c.bf16 %v1877, %v1610
        %v2490 = vpack.c.bf16 %v2411, %v2144
        %v2491 = vpack.c.bf16 %v1880, %v1613
        %v2492 = vpack.c.bf16 %v2414, %v2147
        %v2493 = vpack.c.bf16 %v1882, %v1615
        %v2494 = vpack.c.bf16 %v2416, %v2149
        %v2495 = vpack.c.bf16 %v1885, %v1618
        %v2496 = vpack.c.bf16 %v2419, %v2152
        %v2497 = vpack.c.bf16 %v1887, %v1620
        %v2498 = vpack.c.bf16 %v2421, %v2154
        %v2499 = vpack.c.bf16 %v1890, %v1623
        %v2500 = vpack.c.bf16 %v2424, %v2157
        %v2501 = vpack.c.bf16 %v1892, %v1625
        %v2502 = vpack.c.bf16 %v2426, %v2159
        %v2503 = vpack.c.bf16 %v1895, %v1628
        %v2504 = vpack.c.bf16 %v2429, %v2162
        %v2505 = vpack.c.bf16 %v1897, %v1630
        %v2506 = vpack.c.bf16 %v2431, %v2164
        %v2507 = vpack.c.bf16 %v1900, %v1633
        %v2508 = vpack.c.bf16 %v2434, %v2167
        %v2509 = vpack.c.bf16 %v1902, %v1635
        %v2510 = vpack.c.bf16 %v2436, %v2169
        %v2511 = vpack.c.bf16 %v1905, %v1638
        %v2512 = vpack.c.bf16 %v2439, %v2172
        %v2513 = vpack.c.bf16 %v1907, %v1640
        %v2514 = vpack.c.bf16 %v2441, %v2174
        %v2515 = vpack.c.bf16 %v1910, %v1643
        %v2516 = vpack.c.bf16 %v2444, %v2177
        %v2517 = vpack.c.bf16 %v1912, %v1645
        %v2518 = vpack.c.bf16 %v2446, %v2179
        %v2519 = vpack.c.bf16 %v1915, %v1648
        %v2520 = vpack.c.bf16 %v2449, %v2182
        %v2521 = vpack.c.bf16 %v1917, %v1650
        %v2522 = vpack.c.bf16 %v2451, %v2184
        %v2523 = vpack.c.bf16 %v1920, %v1653
        %v2524 = vpack.c.bf16 %v2454, %v2187
        %v2525 = vpack.c.bf16 %v1922, %v1655
        %v2526 = vpack.c.bf16 %v2456, %v2189
        %v2527 = vpack.c.bf16 %v1925, %v1658
        %v2528 = vpack.c.bf16 %v2459, %v2192
        %v2529 = vpack.c.bf16 %v1927, %v1660
        %v2530 = vpack.c.bf16 %v2461, %v2194
        %v2531 = vpack.c.bf16 %v1930, %v1663
        %v2532 = vpack.c.bf16 %v2464, %v2197
        %v2533 = vpack.c.bf16 %v1932, %v1665
        %v2534 = vpack.c.bf16 %v2466, %v2199
        %v2535 = vpack.c.bf16 %v1935, %v1668
        %v2536 = vpack.c.bf16 %v2469, %v2202
        %v2537 = vpack.c.bf16 %v1937, %v1670
        %v2538 = vpack.c.bf16 %v2471, %v2204
        %v2539 = vpack.c.bf16 %v1940, %v1673
        %v2540 = vpack.c.bf16 %v2474, %v2207
        %v2541 = vpack.c.bf16 %v1942, %v1675
        %v2542 = vpack.c.bf16 %v2476, %v2209
        %v2543 = vpack.c.bf16 %v1945, %v1678
        %v2544 = vpack.c.bf16 %v2479, %v2212
        %v2545 = vpack.c.bf16 %v1947, %v1680
        %v2546 = vpack.c.bf16 %v2481, %v2214
        %2547 = vst [vmem:[%s343] sm:$0xff] %v2483
        %2548 = vst [vmem:[%s343 + $0x8] sm:$0xff] %v2484
        %2549 = vst [vmem:[%s343 + $0x10] sm:$0xff] %v2485
        %2550 = vst [vmem:[%s343 + $0x18] sm:$0xff] %v2486
        %2551 = vst [vmem:[%s343 + $0x20] sm:$0xff] %v2487
        %2552 = vst [vmem:[%s343 + $0x28] sm:$0xff] %v2488
        %2553 = vst [vmem:[%s343 + $0x30] sm:$0xff] %v2489
        %2554 = vst [vmem:[%s343 + $0x38] sm:$0xff] %v2490
        %2555 = vst [vmem:[%s343 + $0x40] sm:$0xff] %v2491
        %2556 = vst [vmem:[%s343 + $0x48] sm:$0xff] %v2492
        %2557 = vst [vmem:[%s343 + $0x50] sm:$0xff] %v2493
        %2558 = vst [vmem:[%s343 + $0x58] sm:$0xff] %v2494
        %2559 = vst [vmem:[%s343 + $0x60] sm:$0xff] %v2495
        %2560 = vst [vmem:[%s343 + $0x68] sm:$0xff] %v2496
        %2561 = vst [vmem:[%s343 + $0x70] sm:$0xff] %v2497
        %2562 = vst [vmem:[%s343 + $0x78] sm:$0xff] %v2498
        %2563 = vst [vmem:[%s343 + $0x80] sm:$0xff] %v2499
        %2564 = vst [vmem:[%s343 + $0x88] sm:$0xff] %v2500
        %2565 = vst [vmem:[%s343 + $0x90] sm:$0xff] %v2501
        %2566 = vst [vmem:[%s343 + $0x98] sm:$0xff] %v2502
        %2567 = vst [vmem:[%s343 + $0xa0] sm:$0xff] %v2503
        %2568 = vst [vmem:[%s343 + $0xa8] sm:$0xff] %v2504
        %2569 = vst [vmem:[%s343 + $0xb0] sm:$0xff] %v2505
        %2570 = vst [vmem:[%s343 + $0xb8] sm:$0xff] %v2506
        %2571 = vst [vmem:[%s343 + $0xc0] sm:$0xff] %v2507
        %2572 = vst [vmem:[%s343 + $0xc8] sm:$0xff] %v2508
        %2573 = vst [vmem:[%s343 + $0xd0] sm:$0xff] %v2509
        %2574 = vst [vmem:[%s343 + $0xd8] sm:$0xff] %v2510
        %2575 = vst [vmem:[%s343 + $0xe0] sm:$0xff] %v2511
        %2576 = vst [vmem:[%s343 + $0xe8] sm:$0xff] %v2512
        %2577 = vst [vmem:[%s343 + $0xf0] sm:$0xff] %v2513
        %2578 = vst [vmem:[%s343 + $0xf8] sm:$0xff] %v2514
        %2579 = vst [vmem:[%s343 + $0x100] sm:$0xff] %v2515
        %2580 = vst [vmem:[%s343 + $0x108] sm:$0xff] %v2516
        %2581 = vst [vmem:[%s343 + $0x110] sm:$0xff] %v2517
        %2582 = vst [vmem:[%s343 + $0x118] sm:$0xff] %v2518
        %2583 = vst [vmem:[%s343 + $0x120] sm:$0xff] %v2519
        %2584 = vst [vmem:[%s343 + $0x128] sm:$0xff] %v2520
        %2585 = vst [vmem:[%s343 + $0x130] sm:$0xff] %v2521
        %2586 = vst [vmem:[%s343 + $0x138] sm:$0xff] %v2522
        %2587 = vst [vmem:[%s343 + $0x140] sm:$0xff] %v2523
        %2588 = vst [vmem:[%s343 + $0x148] sm:$0xff] %v2524
        %2589 = vst [vmem:[%s343 + $0x150] sm:$0xff] %v2525
        %2590 = vst [vmem:[%s343 + $0x158] sm:$0xff] %v2526
        %2591 = vst [vmem:[%s343 + $0x160] sm:$0xff] %v2527
        %2592 = vst [vmem:[%s343 + $0x168] sm:$0xff] %v2528
        %2593 = vst [vmem:[%s343 + $0x170] sm:$0xff] %v2529
        %2594 = vst [vmem:[%s343 + $0x178] sm:$0xff] %v2530
        %2595 = vst [vmem:[%s343 + $0x180] sm:$0xff] %v2531
        %2596 = vst [vmem:[%s343 + $0x188] sm:$0xff] %v2532
        %2597 = vst [vmem:[%s343 + $0x190] sm:$0xff] %v2533
        %2598 = vst [vmem:[%s343 + $0x198] sm:$0xff] %v2534
        %2599 = vst [vmem:[%s343 + $0x1a0] sm:$0xff] %v2535
        %2600 = vst [vmem:[%s343 + $0x1a8] sm:$0xff] %v2536
        %2601 = vst [vmem:[%s343 + $0x1b0] sm:$0xff] %v2537
        %2602 = vst [vmem:[%s343 + $0x1b8] sm:$0xff] %v2538
        %2603 = vst [vmem:[%s343 + $0x1c0] sm:$0xff] %v2539
        %2604 = vst [vmem:[%s343 + $0x1c8] sm:$0xff] %v2540
        %2605 = vst [vmem:[%s343 + $0x1d0] sm:$0xff] %v2541
        %2606 = vst [vmem:[%s343 + $0x1d8] sm:$0xff] %v2542
        %2607 = vst [vmem:[%s343 + $0x1e0] sm:$0xff] %v2543
        %2608 = vst [vmem:[%s343 + $0x1e8] sm:$0xff] %v2544
        %2609 = vst [vmem:[%s343 + $0x1f0] sm:$0xff] %v2545
        %2610 = vst [vmem:[%s343 + $0x1f8] sm:$0xff] %v2546
        %s2611 = sadd.s32 %s34, %s35
        %s2612 = smul.u32 %s2611, 256
        %v2613 = vlaneseq
        %v2614 = vshrl.u32 %v2613, 7
        %v2615 = vadd.s32 %v2614, 8
        %v2616 = vadd.s32 %v2614, 16
        %v2617 = vadd.s32 %v2614, 24
        %v2618 = vadd.s32 %v2614, 32
        %v2619 = vadd.s32 %v2614, 40
        %v2620 = vadd.s32 %v2614, 48
        %v2621 = vadd.s32 %v2614, 56
        %v2622 = vadd.s32 %v2614, 64
        %v2623 = vadd.s32 %v2614, 72
        %v2624 = vadd.s32 %v2614, 80
        %v2625 = vadd.s32 %v2614, 88
        %v2626 = vadd.s32 %v2614, 96
        %v2627 = vadd.s32 %v2614, 104
        %v2628 = vadd.s32 %v2614, 112
        %v2629 = vadd.s32 %v2614, 120
        %v2630 = vadd.s32 %v2614, 128
        %v2631 = vadd.s32 %v2614, 136
        %v2632 = vadd.s32 %v2614, 144
        %v2633 = vadd.s32 %v2614, 152
        %v2634 = vadd.s32 %v2614, 160
        %v2635 = vadd.s32 %v2614, 168
        %v2636 = vadd.s32 %v2614, 176
        %v2637 = vadd.s32 %v2614, 184
        %v2638 = vadd.s32 %v2614, 192
        %v2639 = vadd.s32 %v2614, 200
        %v2640 = vadd.s32 %v2614, 208
        %v2641 = vadd.s32 %v2614, 216
        %v2642 = vadd.s32 %v2614, 224
        %v2643 = vadd.s32 %v2614, 232
        %v2644 = vadd.s32 %v2614, 240
        %v2645 = vadd.s32 %v2614, 248
        %v2646 = vstv %s2612
        %v2647 = vadd.s32 %v2646, %v2614
        %v2648 = vadd.s32 %v2646, %v2615
        %v2649 = vadd.s32 %v2646, %v2616
        %v2650 = vadd.s32 %v2646, %v2617
        %v2651 = vadd.s32 %v2646, %v2618
        %v2652 = vadd.s32 %v2646, %v2619
        %v2653 = vadd.s32 %v2646, %v2620
        %v2654 = vadd.s32 %v2646, %v2621
        %v2655 = vadd.s32 %v2646, %v2622
        %v2656 = vadd.s32 %v2646, %v2623
        %v2657 = vadd.s32 %v2646, %v2624
        %v2658 = vadd.s32 %v2646, %v2625
        %v2659 = vadd.s32 %v2646, %v2626
        %v2660 = vadd.s32 %v2646, %v2627
        %v2661 = vadd.s32 %v2646, %v2628
        %v2662 = vadd.s32 %v2646, %v2629
        %v2663 = vadd.s32 %v2646, %v2630
        %v2664 = vadd.s32 %v2646, %v2631
        %v2665 = vadd.s32 %v2646, %v2632
        %v2666 = vadd.s32 %v2646, %v2633
        %v2667 = vadd.s32 %v2646, %v2634
        %v2668 = vadd.s32 %v2646, %v2635
        %v2669 = vadd.s32 %v2646, %v2636
        %v2670 = vadd.s32 %v2646, %v2637
        %v2671 = vadd.s32 %v2646, %v2638
        %v2672 = vadd.s32 %v2646, %v2639
        %v2673 = vadd.s32 %v2646, %v2640
        %v2674 = vadd.s32 %v2646, %v2641
        %v2675 = vadd.s32 %v2646, %v2642
        %v2676 = vadd.s32 %v2646, %v2643
        %v2677 = vadd.s32 %v2646, %v2644
        %v2678 = vadd.s32 %v2646, %v2645
        %vm2679 = vcmp.lt.s32.totalorder %v2647, 16
        %vm2680 = vcmp.lt.s32.totalorder %v2648, 16
        %vm2681 = vcmp.lt.s32.totalorder %v2649, 16
        %vm2682 = vcmp.lt.s32.totalorder %v2650, 16
        %vm2683 = vcmp.lt.s32.totalorder %v2651, 16
        %vm2684 = vcmp.lt.s32.totalorder %v2652, 16
        %vm2685 = vcmp.lt.s32.totalorder %v2653, 16
        %vm2686 = vcmp.lt.s32.totalorder %v2654, 16
        %vm2687 = vcmp.lt.s32.totalorder %v2655, 16
        %vm2688 = vcmp.lt.s32.totalorder %v2656, 16
        %vm2689 = vcmp.lt.s32.totalorder %v2657, 16
        %vm2690 = vcmp.lt.s32.totalorder %v2658, 16
        %vm2691 = vcmp.lt.s32.totalorder %v2659, 16
        %vm2692 = vcmp.lt.s32.totalorder %v2660, 16
        %vm2693 = vcmp.lt.s32.totalorder %v2661, 16
        %vm2694 = vcmp.lt.s32.totalorder %v2662, 16
        %vm2695 = vcmp.lt.s32.totalorder %v2663, 16
        %vm2696 = vcmp.lt.s32.totalorder %v2664, 16
        %vm2697 = vcmp.lt.s32.totalorder %v2665, 16
        %vm2698 = vcmp.lt.s32.totalorder %v2666, 16
        %vm2699 = vcmp.lt.s32.totalorder %v2667, 16
        %vm2700 = vcmp.lt.s32.totalorder %v2668, 16
        %vm2701 = vcmp.lt.s32.totalorder %v2669, 16
        %vm2702 = vcmp.lt.s32.totalorder %v2670, 16
        %vm2703 = vcmp.lt.s32.totalorder %v2671, 16
        %vm2704 = vcmp.lt.s32.totalorder %v2672, 16
        %vm2705 = vcmp.lt.s32.totalorder %v2673, 16
        %vm2706 = vcmp.lt.s32.totalorder %v2674, 16
        %vm2707 = vcmp.lt.s32.totalorder %v2675, 16
        %vm2708 = vcmp.lt.s32.totalorder %v2676, 16
        %vm2709 = vcmp.lt.s32.totalorder %v2677, 16
        %vm2710 = vcmp.lt.s32.totalorder %v2678, 16
        %v2711 = vsel %vm2679, 1.0, 0.0
        %v2712 = vsel %vm2680, 1.0, 0.0
        %v2713 = vsel %vm2681, 1.0, 0.0
        %v2714 = vsel %vm2682, 1.0, 0.0
        %v2715 = vsel %vm2683, 1.0, 0.0
        %v2716 = vsel %vm2684, 1.0, 0.0
        %v2717 = vsel %vm2685, 1.0, 0.0
        %v2718 = vsel %vm2686, 1.0, 0.0
        %v2719 = vsel %vm2687, 1.0, 0.0
        %v2720 = vsel %vm2688, 1.0, 0.0
        %v2721 = vsel %vm2689, 1.0, 0.0
        %v2722 = vsel %vm2690, 1.0, 0.0
        %v2723 = vsel %vm2691, 1.0, 0.0
        %v2724 = vsel %vm2692, 1.0, 0.0
        %v2725 = vsel %vm2693, 1.0, 0.0
        %v2726 = vsel %vm2694, 1.0, 0.0
        %v2727 = vsel %vm2695, 1.0, 0.0
        %v2728 = vsel %vm2696, 1.0, 0.0
        %v2729 = vsel %vm2697, 1.0, 0.0
        %v2730 = vsel %vm2698, 1.0, 0.0
        %v2731 = vsel %vm2699, 1.0, 0.0
        %v2732 = vsel %vm2700, 1.0, 0.0
        %v2733 = vsel %vm2701, 1.0, 0.0
        %v2734 = vsel %vm2702, 1.0, 0.0
        %v2735 = vsel %vm2703, 1.0, 0.0
        %v2736 = vsel %vm2704, 1.0, 0.0
        %v2737 = vsel %vm2705, 1.0, 0.0
        %v2738 = vsel %vm2706, 1.0, 0.0
        %v2739 = vsel %vm2707, 1.0, 0.0
        %v2740 = vsel %vm2708, 1.0, 0.0
        %v2741 = vsel %vm2709, 1.0, 0.0
        %v2742 = vsel %vm2710, 1.0, 0.0
        %v2743 = vmul.f32 %v1603, %v2711
        %v2744 = vmul.f32 %v1870, %v2711
        %v2745 = vmul.f32 %v2137, %v2711
        %v2746 = vmul.f32 %v2404, %v2711
        %v2747 = vmul.f32 %v1605, %v2712
        %v2748 = vmul.f32 %v1872, %v2712
        %v2749 = vmul.f32 %v2139, %v2712
        %v2750 = vmul.f32 %v2406, %v2712
        %v2751 = vmul.f32 %v1608, %v2713
        %v2752 = vmul.f32 %v1875, %v2713
        %v2753 = vmul.f32 %v2142, %v2713
        %v2754 = vmul.f32 %v2409, %v2713
        %v2755 = vmul.f32 %v1610, %v2714
        %v2756 = vmul.f32 %v1877, %v2714
        %v2757 = vmul.f32 %v2144, %v2714
        %v2758 = vmul.f32 %v2411, %v2714
        %v2759 = vmul.f32 %v1613, %v2715
        %v2760 = vmul.f32 %v1880, %v2715
        %v2761 = vmul.f32 %v2147, %v2715
        %v2762 = vmul.f32 %v2414, %v2715
        %v2763 = vmul.f32 %v1615, %v2716
        %v2764 = vmul.f32 %v1882, %v2716
        %v2765 = vmul.f32 %v2149, %v2716
        %v2766 = vmul.f32 %v2416, %v2716
        %v2767 = vmul.f32 %v1618, %v2717
        %v2768 = vmul.f32 %v1885, %v2717
        %v2769 = vmul.f32 %v2152, %v2717
        %v2770 = vmul.f32 %v2419, %v2717
        %v2771 = vmul.f32 %v1620, %v2718
        %v2772 = vmul.f32 %v1887, %v2718
        %v2773 = vmul.f32 %v2154, %v2718
        %v2774 = vmul.f32 %v2421, %v2718
        %v2775 = vmul.f32 %v1623, %v2719
        %v2776 = vmul.f32 %v1890, %v2719
        %v2777 = vmul.f32 %v2157, %v2719
        %v2778 = vmul.f32 %v2424, %v2719
        %v2779 = vmul.f32 %v1625, %v2720
        %v2780 = vmul.f32 %v1892, %v2720
        %v2781 = vmul.f32 %v2159, %v2720
        %v2782 = vmul.f32 %v2426, %v2720
        %v2783 = vmul.f32 %v1628, %v2721
        %v2784 = vmul.f32 %v1895, %v2721
        %v2785 = vmul.f32 %v2162, %v2721
        %v2786 = vmul.f32 %v2429, %v2721
        %v2787 = vmul.f32 %v1630, %v2722
        %v2788 = vmul.f32 %v1897, %v2722
        %v2789 = vmul.f32 %v2164, %v2722
        %v2790 = vmul.f32 %v2431, %v2722
        %v2791 = vmul.f32 %v1633, %v2723
        %v2792 = vmul.f32 %v1900, %v2723
        %v2793 = vmul.f32 %v2167, %v2723
        %v2794 = vmul.f32 %v2434, %v2723
        %v2795 = vmul.f32 %v1635, %v2724
        %v2796 = vmul.f32 %v1902, %v2724
        %v2797 = vmul.f32 %v2169, %v2724
        %v2798 = vmul.f32 %v2436, %v2724
        %v2799 = vmul.f32 %v1638, %v2725
        %v2800 = vmul.f32 %v1905, %v2725
        %v2801 = vmul.f32 %v2172, %v2725
        %v2802 = vmul.f32 %v2439, %v2725
        %v2803 = vmul.f32 %v1640, %v2726
        %v2804 = vmul.f32 %v1907, %v2726
        %v2805 = vmul.f32 %v2174, %v2726
        %v2806 = vmul.f32 %v2441, %v2726
        %v2807 = vmul.f32 %v1643, %v2727
        %v2808 = vmul.f32 %v1910, %v2727
        %v2809 = vmul.f32 %v2177, %v2727
        %v2810 = vmul.f32 %v2444, %v2727
        %v2811 = vmul.f32 %v1645, %v2728
        %v2812 = vmul.f32 %v1912, %v2728
        %v2813 = vmul.f32 %v2179, %v2728
        %v2814 = vmul.f32 %v2446, %v2728
        %v2815 = vmul.f32 %v1648, %v2729
        %v2816 = vmul.f32 %v1915, %v2729
        %v2817 = vmul.f32 %v2182, %v2729
        %v2818 = vmul.f32 %v2449, %v2729
        %v2819 = vmul.f32 %v1650, %v2730
        %v2820 = vmul.f32 %v1917, %v2730
        %v2821 = vmul.f32 %v2184, %v2730
        %v2822 = vmul.f32 %v2451, %v2730
        %v2823 = vmul.f32 %v1653, %v2731
        %v2824 = vmul.f32 %v1920, %v2731
        %v2825 = vmul.f32 %v2187, %v2731
        %v2826 = vmul.f32 %v2454, %v2731
        %v2827 = vmul.f32 %v1655, %v2732
        %v2828 = vmul.f32 %v1922, %v2732
        %v2829 = vmul.f32 %v2189, %v2732
        %v2830 = vmul.f32 %v2456, %v2732
        %v2831 = vmul.f32 %v1658, %v2733
        %v2832 = vmul.f32 %v1925, %v2733
        %v2833 = vmul.f32 %v2192, %v2733
        %v2834 = vmul.f32 %v2459, %v2733
        %v2835 = vmul.f32 %v1660, %v2734
        %v2836 = vmul.f32 %v1927, %v2734
        %v2837 = vmul.f32 %v2194, %v2734
        %v2838 = vmul.f32 %v2461, %v2734
        %v2839 = vmul.f32 %v1663, %v2735
        %v2840 = vmul.f32 %v1930, %v2735
        %v2841 = vmul.f32 %v2197, %v2735
        %v2842 = vmul.f32 %v2464, %v2735
        %v2843 = vmul.f32 %v1665, %v2736
        %v2844 = vmul.f32 %v1932, %v2736
        %v2845 = vmul.f32 %v2199, %v2736
        %v2846 = vmul.f32 %v2466, %v2736
        %v2847 = vmul.f32 %v1668, %v2737
        %v2848 = vmul.f32 %v1935, %v2737
        %v2849 = vmul.f32 %v2202, %v2737
        %v2850 = vmul.f32 %v2469, %v2737
        %v2851 = vmul.f32 %v1670, %v2738
        %v2852 = vmul.f32 %v1937, %v2738
        %v2853 = vmul.f32 %v2204, %v2738
        %v2854 = vmul.f32 %v2471, %v2738
        %v2855 = vmul.f32 %v1673, %v2739
        %v2856 = vmul.f32 %v1940, %v2739
        %v2857 = vmul.f32 %v2207, %v2739
        %v2858 = vmul.f32 %v2474, %v2739
        %v2859 = vmul.f32 %v1675, %v2740
        %v2860 = vmul.f32 %v1942, %v2740
        %v2861 = vmul.f32 %v2209, %v2740
        %v2862 = vmul.f32 %v2476, %v2740
        %v2863 = vmul.f32 %v1678, %v2741
        %v2864 = vmul.f32 %v1945, %v2741
        %v2865 = vmul.f32 %v2212, %v2741
        %v2866 = vmul.f32 %v2479, %v2741
        %v2867 = vmul.f32 %v1680, %v2742
        %v2868 = vmul.f32 %v1947, %v2742
        %v2869 = vmul.f32 %v2214, %v2742
        %v2870 = vmul.f32 %v2481, %v2742
        %v2871 = vadd.f32 %v2743, %v2747
        %v2872 = vadd.f32 %v2871, %v2751
        %v2873 = vadd.f32 %v2872, %v2755
        %v2874 = vadd.f32 %v2873, %v2759
        %v2875 = vadd.f32 %v2874, %v2763
        %v2876 = vadd.f32 %v2875, %v2767
        %v2877 = vadd.f32 %v2876, %v2771
        %v2878 = vadd.f32 %v2877, %v2775
        %v2879 = vadd.f32 %v2878, %v2779
        %v2880 = vadd.f32 %v2879, %v2783
        %v2881 = vadd.f32 %v2880, %v2787
        %v2882 = vadd.f32 %v2881, %v2791
        %v2883 = vadd.f32 %v2882, %v2795
        %v2884 = vadd.f32 %v2883, %v2799
        %v2885 = vadd.f32 %v2884, %v2803
        %v2886 = vadd.f32 %v2885, %v2807
        %v2887 = vadd.f32 %v2886, %v2811
        %v2888 = vadd.f32 %v2887, %v2815
        %v2889 = vadd.f32 %v2888, %v2819
        %v2890 = vadd.f32 %v2889, %v2823
        %v2891 = vadd.f32 %v2890, %v2827
        %v2892 = vadd.f32 %v2891, %v2831
        %v2893 = vadd.f32 %v2892, %v2835
        %v2894 = vadd.f32 %v2893, %v2839
        %v2895 = vadd.f32 %v2894, %v2843
        %v2896 = vadd.f32 %v2895, %v2847
        %v2897 = vadd.f32 %v2896, %v2851
        %v2898 = vadd.f32 %v2897, %v2855
        %v2899 = vadd.f32 %v2898, %v2859
        %v2900 = vadd.f32 %v2899, %v2863
        %v2901 = vadd.f32 %v2900, %v2867
        %v2902 = vrot.slane %v2901, 4
        %v2903 = vadd.f32 %v2901, %v2902
        %v2904 = vrot.slane %v2903, 2
        %v2905 = vadd.f32 %v2903, %v2904
        %v2906 = vrot.slane %v2905, 1
        %v2907 = vadd.f32 %v2905, %v2906
        %v2908 = vadd.f32 %v2744, %v2748
        %v2909 = vadd.f32 %v2908, %v2752
        %v2910 = vadd.f32 %v2909, %v2756
        %v2911 = vadd.f32 %v2910, %v2760
        %v2912 = vadd.f32 %v2911, %v2764
        %v2913 = vadd.f32 %v2912, %v2768
        %v2914 = vadd.f32 %v2913, %v2772
        %v2915 = vadd.f32 %v2914, %v2776
        %v2916 = vadd.f32 %v2915, %v2780
        %v2917 = vadd.f32 %v2916, %v2784
        %v2918 = vadd.f32 %v2917, %v2788
        %v2919 = vadd.f32 %v2918, %v2792
        %v2920 = vadd.f32 %v2919, %v2796
        %v2921 = vadd.f32 %v2920, %v2800
        %v2922 = vadd.f32 %v2921, %v2804
        %v2923 = vadd.f32 %v2922, %v2808
        %v2924 = vadd.f32 %v2923, %v2812
        %v2925 = vadd.f32 %v2924, %v2816
        %v2926 = vadd.f32 %v2925, %v2820
        %v2927 = vadd.f32 %v2926, %v2824
        %v2928 = vadd.f32 %v2927, %v2828
        %v2929 = vadd.f32 %v2928, %v2832
        %v2930 = vadd.f32 %v2929, %v2836
        %v2931 = vadd.f32 %v2930, %v2840
        %v2932 = vadd.f32 %v2931, %v2844
        %v2933 = vadd.f32 %v2932, %v2848
        %v2934 = vadd.f32 %v2933, %v2852
        %v2935 = vadd.f32 %v2934, %v2856
        %v2936 = vadd.f32 %v2935, %v2860
        %v2937 = vadd.f32 %v2936, %v2864
        %v2938 = vadd.f32 %v2937, %v2868
        %v2939 = vrot.slane %v2938, 4
        %v2940 = vadd.f32 %v2938, %v2939
        %v2941 = vrot.slane %v2940, 2
        %v2942 = vadd.f32 %v2940, %v2941
        %v2943 = vrot.slane %v2942, 1
        %v2944 = vadd.f32 %v2942, %v2943
        %v2945 = vadd.f32 %v2745, %v2749
        %v2946 = vadd.f32 %v2945, %v2753
        %v2947 = vadd.f32 %v2946, %v2757
        %v2948 = vadd.f32 %v2947, %v2761
        %v2949 = vadd.f32 %v2948, %v2765
        %v2950 = vadd.f32 %v2949, %v2769
        %v2951 = vadd.f32 %v2950, %v2773
        %v2952 = vadd.f32 %v2951, %v2777
        %v2953 = vadd.f32 %v2952, %v2781
        %v2954 = vadd.f32 %v2953, %v2785
        %v2955 = vadd.f32 %v2954, %v2789
        %v2956 = vadd.f32 %v2955, %v2793
        %v2957 = vadd.f32 %v2956, %v2797
        %v2958 = vadd.f32 %v2957, %v2801
        %v2959 = vadd.f32 %v2958, %v2805
        %v2960 = vadd.f32 %v2959, %v2809
        %v2961 = vadd.f32 %v2960, %v2813
        %v2962 = vadd.f32 %v2961, %v2817
        %v2963 = vadd.f32 %v2962, %v2821
        %v2964 = vadd.f32 %v2963, %v2825
        %v2965 = vadd.f32 %v2964, %v2829
        %v2966 = vadd.f32 %v2965, %v2833
        %v2967 = vadd.f32 %v2966, %v2837
        %v2968 = vadd.f32 %v2967, %v2841
        %v2969 = vadd.f32 %v2968, %v2845
        %v2970 = vadd.f32 %v2969, %v2849
        %v2971 = vadd.f32 %v2970, %v2853
        %v2972 = vadd.f32 %v2971, %v2857
        %v2973 = vadd.f32 %v2972, %v2861
        %v2974 = vadd.f32 %v2973, %v2865
        %v2975 = vadd.f32 %v2974, %v2869
        %v2976 = vrot.slane %v2975, 4
        %v2977 = vadd.f32 %v2975, %v2976
        %v2978 = vrot.slane %v2977, 2
        %v2979 = vadd.f32 %v2977, %v2978
        %v2980 = vrot.slane %v2979, 1
        %v2981 = vadd.f32 %v2979, %v2980
        %v2982 = vadd.f32 %v2746, %v2750
        %v2983 = vadd.f32 %v2982, %v2754
        %v2984 = vadd.f32 %v2983, %v2758
        %v2985 = vadd.f32 %v2984, %v2762
        %v2986 = vadd.f32 %v2985, %v2766
        %v2987 = vadd.f32 %v2986, %v2770
        %v2988 = vadd.f32 %v2987, %v2774
        %v2989 = vadd.f32 %v2988, %v2778
        %v2990 = vadd.f32 %v2989, %v2782
        %v2991 = vadd.f32 %v2990, %v2786
        %v2992 = vadd.f32 %v2991, %v2790
        %v2993 = vadd.f32 %v2992, %v2794
        %v2994 = vadd.f32 %v2993, %v2798
        %v2995 = vadd.f32 %v2994, %v2802
        %v2996 = vadd.f32 %v2995, %v2806
        %v2997 = vadd.f32 %v2996, %v2810
        %v2998 = vadd.f32 %v2997, %v2814
        %v2999 = vadd.f32 %v2998, %v2818
        %v3000 = vadd.f32 %v2999, %v2822
        %v3001 = vadd.f32 %v3000, %v2826
        %v3002 = vadd.f32 %v3001, %v2830
        %v3003 = vadd.f32 %v3002, %v2834
        %v3004 = vadd.f32 %v3003, %v2838
        %v3005 = vadd.f32 %v3004, %v2842
        %v3006 = vadd.f32 %v3005, %v2846
        %v3007 = vadd.f32 %v3006, %v2850
        %v3008 = vadd.f32 %v3007, %v2854
        %v3009 = vadd.f32 %v3008, %v2858
        %v3010 = vadd.f32 %v3009, %v2862
        %v3011 = vadd.f32 %v3010, %v2866
        %v3012 = vadd.f32 %v3011, %v2870
        %v3013 = vrot.slane %v3012, 4
        %v3014 = vadd.f32 %v3012, %v3013
        %v3015 = vrot.slane %v3014, 2
        %v3016 = vadd.f32 %v3014, %v3015
        %v3017 = vrot.slane %v3016, 1
        %v3018 = vadd.f32 %v3016, %v3017
        %v3019 = vmul.f32 %v2743, %v1603
        %v3020 = vmul.f32 %v2744, %v1870
        %v3021 = vmul.f32 %v2745, %v2137
        %v3022 = vmul.f32 %v2746, %v2404
        %v3023 = vmul.f32 %v2747, %v1605
        %v3024 = vmul.f32 %v2748, %v1872
        %v3025 = vmul.f32 %v2749, %v2139
        %v3026 = vmul.f32 %v2750, %v2406
        %v3027 = vmul.f32 %v2751, %v1608
        %v3028 = vmul.f32 %v2752, %v1875
        %v3029 = vmul.f32 %v2753, %v2142
        %v3030 = vmul.f32 %v2754, %v2409
        %v3031 = vmul.f32 %v2755, %v1610
        %v3032 = vmul.f32 %v2756, %v1877
        %v3033 = vmul.f32 %v2757, %v2144
        %v3034 = vmul.f32 %v2758, %v2411
        %v3035 = vmul.f32 %v2759, %v1613
        %v3036 = vmul.f32 %v2760, %v1880
        %v3037 = vmul.f32 %v2761, %v2147
        %v3038 = vmul.f32 %v2762, %v2414
        %v3039 = vmul.f32 %v2763, %v1615
        %v3040 = vmul.f32 %v2764, %v1882
        %v3041 = vmul.f32 %v2765, %v2149
        %v3042 = vmul.f32 %v2766, %v2416
        %v3043 = vmul.f32 %v2767, %v1618
        %v3044 = vmul.f32 %v2768, %v1885
        %v3045 = vmul.f32 %v2769, %v2152
        %v3046 = vmul.f32 %v2770, %v2419
        %v3047 = vmul.f32 %v2771, %v1620
        %v3048 = vmul.f32 %v2772, %v1887
        %v3049 = vmul.f32 %v2773, %v2154
        %v3050 = vmul.f32 %v2774, %v2421
        %v3051 = vmul.f32 %v2775, %v1623
        %v3052 = vmul.f32 %v2776, %v1890
        %v3053 = vmul.f32 %v2777, %v2157
        %v3054 = vmul.f32 %v2778, %v2424
        %v3055 = vmul.f32 %v2779, %v1625
        %v3056 = vmul.f32 %v2780, %v1892
        %v3057 = vmul.f32 %v2781, %v2159
        %v3058 = vmul.f32 %v2782, %v2426
        %v3059 = vmul.f32 %v2783, %v1628
        %v3060 = vmul.f32 %v2784, %v1895
        %v3061 = vmul.f32 %v2785, %v2162
        %v3062 = vmul.f32 %v2786, %v2429
        %v3063 = vmul.f32 %v2787, %v1630
        %v3064 = vmul.f32 %v2788, %v1897
        %v3065 = vmul.f32 %v2789, %v2164
        %v3066 = vmul.f32 %v2790, %v2431
        %v3067 = vmul.f32 %v2791, %v1633
        %v3068 = vmul.f32 %v2792, %v1900
        %v3069 = vmul.f32 %v2793, %v2167
        %v3070 = vmul.f32 %v2794, %v2434
        %v3071 = vmul.f32 %v2795, %v1635
        %v3072 = vmul.f32 %v2796, %v1902
        %v3073 = vmul.f32 %v2797, %v2169
        %v3074 = vmul.f32 %v2798, %v2436
        %v3075 = vmul.f32 %v2799, %v1638
        %v3076 = vmul.f32 %v2800, %v1905
        %v3077 = vmul.f32 %v2801, %v2172
        %v3078 = vmul.f32 %v2802, %v2439
        %v3079 = vmul.f32 %v2803, %v1640
        %v3080 = vmul.f32 %v2804, %v1907
        %v3081 = vmul.f32 %v2805, %v2174
        %v3082 = vmul.f32 %v2806, %v2441
        %v3083 = vmul.f32 %v2807, %v1643
        %v3084 = vmul.f32 %v2808, %v1910
        %v3085 = vmul.f32 %v2809, %v2177
        %v3086 = vmul.f32 %v2810, %v2444
        %v3087 = vmul.f32 %v2811, %v1645
        %v3088 = vmul.f32 %v2812, %v1912
        %v3089 = vmul.f32 %v2813, %v2179
        %v3090 = vmul.f32 %v2814, %v2446
        %v3091 = vmul.f32 %v2815, %v1648
        %v3092 = vmul.f32 %v2816, %v1915
        %v3093 = vmul.f32 %v2817, %v2182
        %v3094 = vmul.f32 %v2818, %v2449
        %v3095 = vmul.f32 %v2819, %v1650
        %v3096 = vmul.f32 %v2820, %v1917
        %v3097 = vmul.f32 %v2821, %v2184
        %v3098 = vmul.f32 %v2822, %v2451
        %v3099 = vmul.f32 %v2823, %v1653
        %v3100 = vmul.f32 %v2824, %v1920
        %v3101 = vmul.f32 %v2825, %v2187
        %v3102 = vmul.f32 %v2826, %v2454
        %v3103 = vmul.f32 %v2827, %v1655
        %v3104 = vmul.f32 %v2828, %v1922
        %v3105 = vmul.f32 %v2829, %v2189
        %v3106 = vmul.f32 %v2830, %v2456
        %v3107 = vmul.f32 %v2831, %v1658
        %v3108 = vmul.f32 %v2832, %v1925
        %v3109 = vmul.f32 %v2833, %v2192
        %v3110 = vmul.f32 %v2834, %v2459
        %v3111 = vmul.f32 %v2835, %v1660
        %v3112 = vmul.f32 %v2836, %v1927
        %v3113 = vmul.f32 %v2837, %v2194
        %v3114 = vmul.f32 %v2838, %v2461
        %v3115 = vmul.f32 %v2839, %v1663
        %v3116 = vmul.f32 %v2840, %v1930
        %v3117 = vmul.f32 %v2841, %v2197
        %v3118 = vmul.f32 %v2842, %v2464
        %v3119 = vmul.f32 %v2843, %v1665
        %v3120 = vmul.f32 %v2844, %v1932
        %v3121 = vmul.f32 %v2845, %v2199
        %v3122 = vmul.f32 %v2846, %v2466
        %v3123 = vmul.f32 %v2847, %v1668
        %v3124 = vmul.f32 %v2848, %v1935
        %v3125 = vmul.f32 %v2849, %v2202
        %v3126 = vmul.f32 %v2850, %v2469
        %v3127 = vmul.f32 %v2851, %v1670
        %v3128 = vmul.f32 %v2852, %v1937
        %v3129 = vmul.f32 %v2853, %v2204
        %v3130 = vmul.f32 %v2854, %v2471
        %v3131 = vmul.f32 %v2855, %v1673
        %v3132 = vmul.f32 %v2856, %v1940
        %v3133 = vmul.f32 %v2857, %v2207
        %v3134 = vmul.f32 %v2858, %v2474
        %v3135 = vmul.f32 %v2859, %v1675
        %v3136 = vmul.f32 %v2860, %v1942
        %v3137 = vmul.f32 %v2861, %v2209
        %v3138 = vmul.f32 %v2862, %v2476
        %v3139 = vmul.f32 %v2863, %v1678
        %v3140 = vmul.f32 %v2864, %v1945
        %v3141 = vmul.f32 %v2865, %v2212
        %v3142 = vmul.f32 %v2866, %v2479
        %v3143 = vmul.f32 %v2867, %v1680
        %v3144 = vmul.f32 %v2868, %v1947
        %v3145 = vmul.f32 %v2869, %v2214
        %v3146 = vmul.f32 %v2870, %v2481
        %v3147 = vadd.f32 %v3019, %v3023
        %v3148 = vadd.f32 %v3147, %v3027
        %v3149 = vadd.f32 %v3148, %v3031
        %v3150 = vadd.f32 %v3149, %v3035
        %v3151 = vadd.f32 %v3150, %v3039
        %v3152 = vadd.f32 %v3151, %v3043
        %v3153 = vadd.f32 %v3152, %v3047
        %v3154 = vadd.f32 %v3153, %v3051
        %v3155 = vadd.f32 %v3154, %v3055
        %v3156 = vadd.f32 %v3155, %v3059
        %v3157 = vadd.f32 %v3156, %v3063
        %v3158 = vadd.f32 %v3157, %v3067
        %v3159 = vadd.f32 %v3158, %v3071
        %v3160 = vadd.f32 %v3159, %v3075
        %v3161 = vadd.f32 %v3160, %v3079
        %v3162 = vadd.f32 %v3161, %v3083
        %v3163 = vadd.f32 %v3162, %v3087
        %v3164 = vadd.f32 %v3163, %v3091
        %v3165 = vadd.f32 %v3164, %v3095
        %v3166 = vadd.f32 %v3165, %v3099
        %v3167 = vadd.f32 %v3166, %v3103
        %v3168 = vadd.f32 %v3167, %v3107
        %v3169 = vadd.f32 %v3168, %v3111
        %v3170 = vadd.f32 %v3169, %v3115
        %v3171 = vadd.f32 %v3170, %v3119
        %v3172 = vadd.f32 %v3171, %v3123
        %v3173 = vadd.f32 %v3172, %v3127
        %v3174 = vadd.f32 %v3173, %v3131
        %v3175 = vadd.f32 %v3174, %v3135
        %v3176 = vadd.f32 %v3175, %v3139
        %v3177 = vadd.f32 %v3176, %v3143
        %v3178 = vrot.slane %v3177, 4
        %v3179 = vadd.f32 %v3177, %v3178
        %v3180 = vrot.slane %v3179, 2
        %v3181 = vadd.f32 %v3179, %v3180
        %v3182 = vrot.slane %v3181, 1
        %v3183 = vadd.f32 %v3181, %v3182
        %v3184 = vadd.f32 %v3020, %v3024
        %v3185 = vadd.f32 %v3184, %v3028
        %v3186 = vadd.f32 %v3185, %v3032
        %v3187 = vadd.f32 %v3186, %v3036
        %v3188 = vadd.f32 %v3187, %v3040
        %v3189 = vadd.f32 %v3188, %v3044
        %v3190 = vadd.f32 %v3189, %v3048
        %v3191 = vadd.f32 %v3190, %v3052
        %v3192 = vadd.f32 %v3191, %v3056
        %v3193 = vadd.f32 %v3192, %v3060
        %v3194 = vadd.f32 %v3193, %v3064
        %v3195 = vadd.f32 %v3194, %v3068
        %v3196 = vadd.f32 %v3195, %v3072
        %v3197 = vadd.f32 %v3196, %v3076
        %v3198 = vadd.f32 %v3197, %v3080
        %v3199 = vadd.f32 %v3198, %v3084
        %v3200 = vadd.f32 %v3199, %v3088
        %v3201 = vadd.f32 %v3200, %v3092
        %v3202 = vadd.f32 %v3201, %v3096
        %v3203 = vadd.f32 %v3202, %v3100
        %v3204 = vadd.f32 %v3203, %v3104
        %v3205 = vadd.f32 %v3204, %v3108
        %v3206 = vadd.f32 %v3205, %v3112
        %v3207 = vadd.f32 %v3206, %v3116
        %v3208 = vadd.f32 %v3207, %v3120
        %v3209 = vadd.f32 %v3208, %v3124
        %v3210 = vadd.f32 %v3209, %v3128
        %v3211 = vadd.f32 %v3210, %v3132
        %v3212 = vadd.f32 %v3211, %v3136
        %v3213 = vadd.f32 %v3212, %v3140
        %v3214 = vadd.f32 %v3213, %v3144
        %v3215 = vrot.slane %v3214, 4
        %v3216 = vadd.f32 %v3214, %v3215
        %v3217 = vrot.slane %v3216, 2
        %v3218 = vadd.f32 %v3216, %v3217
        %v3219 = vrot.slane %v3218, 1
        %v3220 = vadd.f32 %v3218, %v3219
        %v3221 = vadd.f32 %v3021, %v3025
        %v3222 = vadd.f32 %v3221, %v3029
        %v3223 = vadd.f32 %v3222, %v3033
        %v3224 = vadd.f32 %v3223, %v3037
        %v3225 = vadd.f32 %v3224, %v3041
        %v3226 = vadd.f32 %v3225, %v3045
        %v3227 = vadd.f32 %v3226, %v3049
        %v3228 = vadd.f32 %v3227, %v3053
        %v3229 = vadd.f32 %v3228, %v3057
        %v3230 = vadd.f32 %v3229, %v3061
        %v3231 = vadd.f32 %v3230, %v3065
        %v3232 = vadd.f32 %v3231, %v3069
        %v3233 = vadd.f32 %v3232, %v3073
        %v3234 = vadd.f32 %v3233, %v3077
        %v3235 = vadd.f32 %v3234, %v3081
        %v3236 = vadd.f32 %v3235, %v3085
        %v3237 = vadd.f32 %v3236, %v3089
        %v3238 = vadd.f32 %v3237, %v3093
        %v3239 = vadd.f32 %v3238, %v3097
        %v3240 = vadd.f32 %v3239, %v3101
        %v3241 = vadd.f32 %v3240, %v3105
        %v3242 = vadd.f32 %v3241, %v3109
        %v3243 = vadd.f32 %v3242, %v3113
        %v3244 = vadd.f32 %v3243, %v3117
        %v3245 = vadd.f32 %v3244, %v3121
        %v3246 = vadd.f32 %v3245, %v3125
        %v3247 = vadd.f32 %v3246, %v3129
        %v3248 = vadd.f32 %v3247, %v3133
        %v3249 = vadd.f32 %v3248, %v3137
        %v3250 = vadd.f32 %v3249, %v3141
        %v3251 = vadd.f32 %v3250, %v3145
        %v3252 = vrot.slane %v3251, 4
        %v3253 = vadd.f32 %v3251, %v3252
        %v3254 = vrot.slane %v3253, 2
        %v3255 = vadd.f32 %v3253, %v3254
        %v3256 = vrot.slane %v3255, 1
        %v3257 = vadd.f32 %v3255, %v3256
        %v3258 = vadd.f32 %v3022, %v3026
        %v3259 = vadd.f32 %v3258, %v3030
        %v3260 = vadd.f32 %v3259, %v3034
        %v3261 = vadd.f32 %v3260, %v3038
        %v3262 = vadd.f32 %v3261, %v3042
        %v3263 = vadd.f32 %v3262, %v3046
        %v3264 = vadd.f32 %v3263, %v3050
        %v3265 = vadd.f32 %v3264, %v3054
        %v3266 = vadd.f32 %v3265, %v3058
        %v3267 = vadd.f32 %v3266, %v3062
        %v3268 = vadd.f32 %v3267, %v3066
        %v3269 = vadd.f32 %v3268, %v3070
        %v3270 = vadd.f32 %v3269, %v3074
        %v3271 = vadd.f32 %v3270, %v3078
        %v3272 = vadd.f32 %v3271, %v3082
        %v3273 = vadd.f32 %v3272, %v3086
        %v3274 = vadd.f32 %v3273, %v3090
        %v3275 = vadd.f32 %v3274, %v3094
        %v3276 = vadd.f32 %v3275, %v3098
        %v3277 = vadd.f32 %v3276, %v3102
        %v3278 = vadd.f32 %v3277, %v3106
        %v3279 = vadd.f32 %v3278, %v3110
        %v3280 = vadd.f32 %v3279, %v3114
        %v3281 = vadd.f32 %v3280, %v3118
        %v3282 = vadd.f32 %v3281, %v3122
        %v3283 = vadd.f32 %v3282, %v3126
        %v3284 = vadd.f32 %v3283, %v3130
        %v3285 = vadd.f32 %v3284, %v3134
        %v3286 = vadd.f32 %v3285, %v3138
        %v3287 = vadd.f32 %v3286, %v3142
        %v3288 = vadd.f32 %v3287, %v3146
        %v3289 = vrot.slane %v3288, 4
        %v3290 = vadd.f32 %v3288, %v3289
        %v3291 = vrot.slane %v3290, 2
        %v3292 = vadd.f32 %v3290, %v3291
        %v3293 = vrot.slane %v3292, 1
        %v3294 = vadd.f32 %v3292, %v3293
        %v3295 = vld [vmem:[%s350] sm:$0xff]
        %v3296 = vld [vmem:[%s350 + $0x8] sm:$0xff]
        %v3297 = vld [vmem:[%s350 + $0x10] sm:$0xff]
        %v3298 = vld [vmem:[%s350 + $0x18] sm:$0xff]
        %vm3299 = vcmask 1040384
        %v3300 = vsel %vm3299, %v2907, %v3183
        %v3301 = vsel %vm3299, %v2944, %v3220
        %v3302 = vsel %vm3299, %v2981, %v3257
        %v3303 = vsel %vm3299, %v3018, %v3294
        %vm3304 = vcmask 1041408
        %v3305 = vsel %vm3304, %v3300, 0.0
        %v3306 = vsel %vm3304, %v3301, 0.0
        %v3307 = vsel %vm3304, %v3302, 0.0
        %v3308 = vsel %vm3304, %v3303, 0.0
        %v3309 = vadd.f32 %v3295, %v3305
        %v3310 = vadd.f32 %v3296, %v3306
        %v3311 = vadd.f32 %v3297, %v3307
        %v3312 = vadd.f32 %v3298, %v3308
        %3313 = vst [vmem:[%s350] sm:$0xff] %v3309
        %3314 = vst [vmem:[%s350 + $0x8] sm:$0xff] %v3310
        %3315 = vst [vmem:[%s350 + $0x10] sm:$0xff] %v3311
        %3316 = vst [vmem:[%s350 + $0x18] sm:$0xff] %v3312
        %s3317 = sand.u32 %s150, 1
        %s3318 = scalar_lea.sflag [#allocation4], %s3317
        %s3319 = sand.u32 %s150, 1
        %s3320 = smul.addr %s3319, 512
        %s3321 = scalar_lea.vmem [#allocation10], %s3320
        %s3322 = sand.u32 %s176, 1
        %s3323 = scalar_lea.sflag [#allocation12], %s3322
        %s3324 = sand.u32 %s176, 1
        %s3325 = smul.addr %s3324, 32
        %s3326 = scalar_lea.vmem [#allocation11], %s3325
        // Predicated region
        $region57: #{tpu_custom_call.1} parent=35 // pred_check
          %p3327 = pneg %p160
        $region58: #{tpu_custom_call.1} parent=35 // pred_check_branch
          %3329 = sbr.rel (%p3327) target = $region60
        $region59: #{tpu_custom_call.1} parent=35 // pred_region
          %s3330 = sadd.s32 %s34, %s35
          %s3331 = smul.u32 32, %s3330
          %3333 = vsyncadd %s3318, 0
          %s3334 = smul.addr %s3331, 4
          %s3335 = smul.addr %s3334, 4
          %s3336 = scalar_lea.hbm %s4, %s3335
          %s3337 = sshll.u32 %s3321, 4
          %s3338 = int_to_ptr.vmem [resolvable:$true] %s3337
          %s3339 = sshll.u32 %s3336, 4
          %s3340 = int_to_ptr.hbm [resolvable:$true] %s3339
          %3345 = dma.vmem_to_hbm [thread:$0]  %s3338, 8192, %s3340, %s3318, 256, 256, 16
        $region60: #{tpu_custom_call.1} parent=35 // pred_fallthru
          _
        // Predicated region
        $region61: #{tpu_custom_call.1} parent=35 // pred_check
          %p3346 = pneg %p186
        $region62: #{tpu_custom_call.1} parent=35 // pred_check_branch
          %3348 = sbr.rel (%p3346) target = $region64
        $region63: #{tpu_custom_call.1} parent=35 // pred_region
          %3350 = vsyncadd %s3323, 0
          %s3351 = smul.addr %s34, 4
          %s3352 = smul.addr %s3351, 8
          %s3353 = scalar_lea.hbm %s5, %s3352
          %s3355 = sshll.u32 %s3326, 4
          %s3356 = int_to_ptr.vmem [resolvable:$true] %s3355
          %s3357 = sshll.u32 %s3353, 4
          %s3358 = int_to_ptr.hbm [resolvable:$true] %s3357
          %3360 = dma.vmem_to_hbm [thread:$0]  %s3356, 512, %s3358, %s3323
        $region64: #{tpu_custom_call.1} parent=35 // pred_fallthru
          _
      $region36: #{tpu_custom_call.1} parent=5 // pred_fallthru
        _
      %p3361 = scmp.le.s32.totalorder 2, %s25
      // Predicated region
      $region65: #{tpu_custom_call.1} parent=5 // pred_check
        %p3362 = pneg %p3361
      $region66: #{tpu_custom_call.1} parent=5 // pred_check_branch
        %3364 = sbr.rel (%p3362) target = $region68
      $region67: #{tpu_custom_call.1} parent=5 // pred_region
        %s3365 = ssub.s32 %s25, 2
        // Predicated region
        $region69: #{tpu_custom_call.1} parent=67 // pred_check
          %p3366 = pneg %p166
        $region70: #{tpu_custom_call.1} parent=67 // pred_check_branch
          %3368 = sbr.rel (%p3366) target = $region72
        $region71: #{tpu_custom_call.1} parent=67 // pred_region
          %s3369 = sand.u32 %s151, 1
          %s3370 = scalar_lea.sflag [#allocation4], %s3369
          %s3371 = sand.u32 %s151, 1
          %s3372 = smul.addr %s3371, 512
          %s3373 = scalar_lea.vmem [#allocation10], %s3372
          %3375 = dma.done %s3370, 8192
        $region72: #{tpu_custom_call.1} parent=67 // pred_fallthru
          _
        // Predicated region
        $region73: #{tpu_custom_call.1} parent=67 // pred_check
          %p3376 = pneg %p192
        $region74: #{tpu_custom_call.1} parent=67 // pred_check_branch
          %3378 = sbr.rel (%p3376) target = $region76
        $region75: #{tpu_custom_call.1} parent=67 // pred_region
          %s3379 = sand.u32 %s177, 1
          %s3380 = scalar_lea.sflag [#allocation12], %s3379
          %s3381 = sand.u32 %s177, 1
          %s3382 = smul.addr %s3381, 32
          %s3383 = scalar_lea.vmem [#allocation11], %s3382
          %3385 = dma.done %s3380, 512
        $region76: #{tpu_custom_call.1} parent=67 // pred_fallthru
          _
      $region68: #{tpu_custom_call.1} parent=5 // pred_fallthru
        _
    $region6: #{tpu_custom_call.1} parent=1 // loop_footer
      %s29 = sadd.s32 1, %s25
    $region7: #{tpu_custom_call.1} parent=1 // loop_footer_branch
      %24 = sbr.rel target = $region3
    $region8: #{tpu_custom_call.1} parent=1 // loop_exit
      _
    %3386 = vsyncpa [#allocation3], 1
    %s3387 = scalar_lea.sflag [#allocation3], 1
    %3388 = vsyncpa %s3387, 1
    %3389 = vsyncpa [#allocation6], 1
    %s3390 = scalar_lea.sflag [#allocation6], 1
    %3391 = vsyncpa %s3390, 1
    %3392 = vsyncpa [#allocation9], 1
    %3393 = vsyncpa [#allocation4], 1
    %s3394 = scalar_lea.sflag [#allocation4], 1
    %3395 = vsyncpa %s3394, 1
    %3396 = vsyncpa [#allocation12], 1
    %s3397 = scalar_lea.sflag [#allocation12], 1
    %3398 = vsyncpa %s3397, 1

</llo_original>
